<compile_context>
chip_gen: v5e
topology: v5e:2x2
jax: 0.10.0
libtpu: 0.0.40
codegen_flags: <defaults>
</compile_context>

<pallas_src>
import functools

import jax
import jax.numpy as jnp
from jax import lax
from jax.experimental import pallas as pl
from jax.experimental.pallas import tpu as pltpu

FOLD_DIV = 8
BN_EPS = 1e-5


# ----------------------------------------------------------------------------
# In-kernel helpers
# ----------------------------------------------------------------------------
def _fill_fold(xin_ref, head_ref, center_ref, fold):
    """BiBufferConv channel fold: xin = cat(right[:f], left, center[2f:]).

    Full-block store of `center` first, then overwrite the first 2*fold rows
    with the head (avoids sub-tile bf16 reads at nonzero sublane offsets).
    The xin scratch is f32; the single bf16 cast happens later at im2col build.
    """
    xin_ref[:, :] = center_ref[0, :, :].astype(xin_ref.dtype)
    xin_ref[0:2 * fold, :] = head_ref[0, :, :].astype(xin_ref.dtype)


def _conv3x3_from_scratch(xin_ref, col_ref, wT, scale, shift, mask, wp,
                          apply_relu):
    """3x3 conv on a padded-flat (C, L) image as a single K=9*C MXU matmul.

    The im2col operand is written tap-by-tap into the bf16 `col_ref` scratch
    (tile-aligned 16-row stores); the input is cast to bf16 once and the lane
    rolls run in bf16.  Border (halo) output positions are garbage and are
    zeroed by `mask` (when given), which also re-establishes the zero halo for
    the next conv.  Returns f32 (Cout, L).
    """
    C, L = xin_ref.shape
    xb = xin_ref[:, :].astype(jnp.bfloat16)            # single cast per conv
    t = 0
    for ky in range(3):
        for kx in range(3):
            d = (ky - 1) * wp + (kx - 1)
            tap = xb if d == 0 else jnp.roll(xb, -d, axis=1)
            col_ref[t * C:(t + 1) * C, :] = tap        # 16-row aligned bf16 store
            t += 1
    acc = jnp.dot(wT, col_ref[:, :], preferred_element_type=jnp.float32)
    if scale is not None:
        y = acc * scale + shift          # BN affine; conv bias folded into shift
    else:
        y = acc + shift                  # plain conv bias (no BN)
    if apply_relu:
        y = jnp.maximum(y, 0.0)
    if mask is not None:
        y = y * mask                     # re-zero the halo ring
    return y


# ----------------------------------------------------------------------------
# Kernels
# ----------------------------------------------------------------------------
def _conv1_kernel(head_ref, center_ref, wT_ref, s_ref, sh_ref, mask_ref,
                  o_ref, xin_ref, col_ref, *, fold, wp):
    # Fused: channel-fold + 3x3 conv + (bias+BN) affine + ReLU + halo mask.
    _fill_fold(xin_ref, head_ref, center_ref, fold)
    y = _conv3x3_from_scratch(xin_ref, col_ref, wT_ref[:, :], s_ref[:, :],
                              sh_ref[:, :], mask_ref[:, :], wp, True)
    o_ref[0, :, :] = y.astype(o_ref.dtype)             # bf16 inter-kernel output


def _conv23_kernel(head_ref, center_ref, w2_ref, s2_ref, sh2_ref,
                   w3_ref, sh3_ref, mask_ref, o_ref, xin_ref, col_ref,
                   *, fold, wp):
    # Fused: fold + conv2+BN+ReLU, then conv3(+bias) — intermediate stays in VMEM.
    _fill_fold(xin_ref, head_ref, center_ref, fold)
    y2 = _conv3x3_from_scratch(xin_ref, col_ref, w2_ref[:, :], s2_ref[:, :],
                               sh2_ref[:, :], mask_ref[:, :], wp, True)
    xin_ref[:, :] = y2                   # reuse scratch as conv3 input (halo zeroed)
    # conv3's halo is cropped before PixelShuffle -> no output mask needed.
    y3 = _conv3x3_from_scratch(xin_ref, col_ref, w3_ref[:, :], None,
                               sh3_ref[:, :], None, wp, False)
    o_ref[0, :, :] = y3.astype(o_ref.dtype)


# ----------------------------------------------------------------------------
# pallas_call wrappers (traced inside the single jitted clip forward)
# ----------------------------------------------------------------------------
def _conv1_call(head, center, wT, s, sh, mask, *, wp):
    B, C, L = center.shape
    fold = head.shape[1] // 2
    Cout = wT.shape[0]
    kern = functools.partial(_conv1_kernel, fold=fold, wp=wp)
    return pl.pallas_call(
        kern,
        out_shape=jax.ShapeDtypeStruct((B, Cout, L), jnp.bfloat16),
        grid=(B,),
        in_specs=[
            pl.BlockSpec((1, 2 * fold, L), lambda b: (b, 0, 0)),
            pl.BlockSpec((1, C, L), lambda b: (b, 0, 0)),
            pl.BlockSpec((Cout, 9 * C), lambda b: (0, 0)),
            pl.BlockSpec((Cout, 1), lambda b: (0, 0)),
            pl.BlockSpec((Cout, 1), lambda b: (0, 0)),
            pl.BlockSpec((1, L), lambda b: (0, 0)),
        ],
        out_specs=pl.BlockSpec((1, Cout, L), lambda b: (b, 0, 0)),
        scratch_shapes=[pltpu.VMEM((C, L), jnp.float32),
                        pltpu.VMEM((9 * C, L), jnp.bfloat16)],
        compiler_params=pltpu.CompilerParams(dimension_semantics=("parallel",)),
    )(head, center, wT, s, sh, mask)


def _conv23_call(head, center, w2T, s2, sh2, w3T, sh3, mask, *, wp):
    B, C, L = center.shape
    fold = head.shape[1] // 2
    Cout2 = w2T.shape[0]
    Cout3 = w3T.shape[0]
    kern = functools.partial(_conv23_kernel, fold=fold, wp=wp)
    return pl.pallas_call(
        kern,
        out_shape=jax.ShapeDtypeStruct((B, Cout3, L), jnp.float32),
        grid=(B,),
        in_specs=[
            pl.BlockSpec((1, 2 * fold, L), lambda b: (b, 0, 0)),
            pl.BlockSpec((1, C, L), lambda b: (b, 0, 0)),
            pl.BlockSpec((Cout2, 9 * C), lambda b: (0, 0)),
            pl.BlockSpec((Cout2, 1), lambda b: (0, 0)),
            pl.BlockSpec((Cout2, 1), lambda b: (0, 0)),
            pl.BlockSpec((Cout3, 9 * C), lambda b: (0, 0)),
            pl.BlockSpec((Cout3, 1), lambda b: (0, 0)),
            pl.BlockSpec((1, L), lambda b: (0, 0)),
        ],
        out_specs=pl.BlockSpec((1, Cout3, L), lambda b: (b, 0, 0)),
        scratch_shapes=[pltpu.VMEM((C, L), jnp.float32),
                        pltpu.VMEM((9 * C, L), jnp.bfloat16)],
        compiler_params=pltpu.CompilerParams(dimension_semantics=("parallel",)),
    )(head, center, w2T, s2, sh2, w3T, sh3, mask)


# ----------------------------------------------------------------------------
# Whole-clip UpBlock forward (one jit, two pallas_calls)
# ----------------------------------------------------------------------------
@jax.jit
def upblock_forward_clip(p, x_clip):
    """Batched UpBlock forward over a clip.

    x_clip: (T, N, Cin, H, W).  Returns (T, N, out_ch, 2H, 2W): exactly the T
    outputs the streaming module emits when fed frames 0..T-1 followed by two
    flush (None) steps.
    """
    T, N, C, H, W = x_clip.shape
    wp = W + 2
    L = (H + 2) * wp
    fold = C // FOLD_DIV
    B = T * N

    # padded-flat layout with zero halo
    xp = jnp.pad(x_clip, ((0, 0), (0, 0), (0, 0), (1, 1), (1, 1)))
    x = xp.reshape(T, N, C, L)

    def make_head(a):
        zeros = jnp.zeros((1, N, fold, L), a.dtype)
        rightf = jnp.concatenate([a[1:, :, :fold], zeros], axis=0)          # a_{t+1}[:f]
        left = jnp.concatenate([zeros, a[:-1, :, fold:2 * fold]], axis=0)   # a_{t-1}[f:2f]
        return jnp.concatenate([rightf, left], axis=2)                       # (T,N,2f,L)

    head1 = make_head(x).reshape(B, 2 * fold, L)
    y1 = _conv1_call(head1, x.reshape(B, C, L), p["w1T"], p["s1"], p["sh1"],
                     p["mask"], wp=wp)                                        # bf16 (B,C,L)

    y1 = y1.reshape(T, N, C, L)
    head2 = make_head(y1).reshape(B, 2 * fold, L)
    y3 = _conv23_call(head2, y1.reshape(B, C, L), p["w2T"], p["s2"], p["sh2"],
                      p["w3T"], p["sh3"], p["mask"], wp=wp)                   # f32 (B,4oc,L)

    # Drop the halo and apply PixelShuffle(2) — layout plumbing fused in this jit.
    Cout3 = y3.shape[1]
    oc = Cout3 // 4
    y3 = y3.reshape(T, N, Cout3, H + 2, wp)[:, :, :, 1:H + 1, 1:W + 1]
    y3 = y3.reshape(T, N, oc, 2, 2, H, W)
    y3 = y3.transpose(0, 1, 2, 5, 3, 6, 4)
    return y3.reshape(T, N, oc, 2 * H, 2 * W)


# ----------------------------------------------------------------------------
# Parameters
# ----------------------------------------------------------------------------
def init_raw_params(key, in_ch, out_ch):
    ks = jax.random.split(key, 14)

    def cw(k, cin, cout):  # HWIO
        return 0.1 * jax.random.normal(k, (3, 3, cin, cout), jnp.float32)

    raw = {}
    raw["w1"] = cw(ks[0], in_ch, in_ch)
    raw["b1"] = 0.1 * jax.random.normal(ks[1], (in_ch,), jnp.float32)
    g1 = jax.random.uniform(ks[2], (in_ch,), jnp.float32, 0.5, 1.5)
    be1 = 0.1 * jax.random.normal(ks[3], (in_ch,), jnp.float32)
    m1 = 0.1 * jax.random.normal(ks[4], (in_ch,), jnp.float32)
    v1 = jax.random.uniform(ks[5], (in_ch,), jnp.float32, 0.5, 1.5)
    raw["s1"] = g1 / jnp.sqrt(v1 + BN_EPS)
    raw["sh1"] = be1 - m1 * raw["s1"]

    raw["w2"] = cw(ks[6], in_ch, in_ch)
    raw["b2"] = 0.1 * jax.random.normal(ks[7], (in_ch,), jnp.float32)
    g2 = jax.random.uniform(ks[8], (in_ch,), jnp.float32, 0.5, 1.5)
    be2 = 0.1 * jax.random.normal(ks[9], (in_ch,), jnp.float32)
    m2 = 0.1 * jax.random.normal(ks[10], (in_ch,), jnp.float32)
    v2 = jax.random.uniform(ks[11], (in_ch,), jnp.float32, 0.5, 1.5)
    raw["s2"] = g2 / jnp.sqrt(v2 + BN_EPS)
    raw["sh2"] = be2 - m2 * raw["s2"]

    raw["w3"] = cw(ks[12], in_ch, out_ch * 4)
    raw["b3"] = 0.1 * jax.random.normal(ks[13], (out_ch * 4,), jnp.float32)
    return raw


def prepare_params(raw, H, W):
    """Kernel-ready params: bf16 (Cout, 9*Cin) weights, conv bias folded into shift."""
    Hp, Wp = H + 2, W + 2

    def wT(w):
        kh, kw, cin, cout = w.shape
        return jnp.asarray(w.reshape(kh * kw * cin, cout).T, dtype=jnp.bfloat16)

    p = {}
    p["w1T"] = wT(raw["w1"])
    p["s1"] = raw["s1"].reshape(-1, 1)
    p["sh1"] = (raw["b1"] * raw["s1"] + raw["sh1"]).reshape(-1, 1)
    p["w2T"] = wT(raw["w2"])
    p["s2"] = raw["s2"].reshape(-1, 1)
    p["sh2"] = (raw["b2"] * raw["s2"] + raw["sh2"]).reshape(-1, 1)
    p["w3T"] = wT(raw["w3"])
    p["sh3"] = raw["b3"].reshape(-1, 1)

    a = jnp.arange(Hp).reshape(Hp, 1)
    b = jnp.arange(Wp).reshape(1, Wp)
    mask = ((a >= 1) & (a <= H) & (b >= 1) & (b <= W)).astype(jnp.float32)
    p["mask"] = mask.reshape(1, Hp * Wp)
    return p


# ----------------------------------------------------------------------------
# Pure-JAX f32 streaming reference (mirrors the PyTorch module) for validation
# ----------------------------------------------------------------------------
def pixel_shuffle_nchw(x, r):
    n, c, h, w = x.shape
    oc = c // (r * r)
    x = x.reshape(n, oc, r, r, h, w)
    x = x.transpose(0, 1, 4, 2, 5, 3)
    return x.reshape(n, oc, h * r, w * r)


def _ref_conv3x3(x, w, b):
    y = lax.conv_general_dilated(x, w, (1, 1), ((1, 1), (1, 1)),
                                 dimension_numbers=("NCHW", "HWIO", "NCHW"))
    return y + b.reshape(1, -1, 1, 1)


def _ref_shift_conv(left, center, rightf, w, b):
    fold = left.shape[1]
    x = jnp.concatenate([rightf, left, center[:, 2 * fold:]], axis=1)
    return _ref_conv3x3(x, w, b)


def bibuffer_step(conv_fn, state, input_right):
    """BiBufferConv.forward: state = (left_fold_2fold, center)."""
    left, center = state
    if center is None:
        if input_right is not None and left is None:
            fold = input_right.shape[1] // FOLD_DIV
            left = jnp.zeros_like(input_right[:, :fold])
        return None, (left, input_right)
    fold = center.shape[1] // FOLD_DIV
    if input_right is None:
        rightf = jnp.zeros_like(center[:, :fold])
    else:
        rightf = input_right[:, :fold]
    out = conv_fn(left, center, rightf)
    new_left = center[:, fold:2 * fold]
    return out, (new_left, input_right)


def ref_upblock_step(raw, state, x):
    st1, st2 = state

    def conv1_fn(left, center, rightf):
        y = _ref_shift_conv(left, center, rightf, raw["w1"], raw["b1"])
        y = y * raw["s1"].reshape(1, -1, 1, 1) + raw["sh1"].reshape(1, -1, 1, 1)
        return jnp.maximum(y, 0.0)

    def conv2_fn(left, center, rightf):
        y = _ref_shift_conv(left, center, rightf, raw["w2"], raw["b2"])
        y = y * raw["s2"].reshape(1, -1, 1, 1) + raw["sh2"].reshape(1, -1, 1, 1)
        return jnp.maximum(y, 0.0)

    y1, st1 = bibuffer_step(conv1_fn, st1, x)
    y2, st2 = bibuffer_step(conv2_fn, st2, y1)
    out = None
    if y2 is not None:
        out = pixel_shuffle_nchw(_ref_conv3x3(y2, raw["w3"], raw["b3"]), 2)
    return out, (st1, st2)


# ----------------------------------------------------------------------------
if __name__ == "__main__":
    key = jax.random.PRNGKey(0)
    kp, kx = jax.random.split(key)

    in_ch, out_ch = 16, 8          # fold = in_ch // 8 = 2
    N, H, W = 2, 16, 16
    T = 3                          # number of frames in the clip

    raw = init_raw_params(kp, in_ch, out_ch)
    params = prepare_params(raw, H, W)

    frames = [jax.random.normal(jax.random.fold_in(kx, t), (N, in_ch, H, W),
                                jnp.float32) for t in range(T)]
    x_clip = jnp.stack(frames, axis=0)          # (T, N, C, H, W)

    # --- Pallas: whole clip in one jit (2 pallas_calls, grid over T*N) --------
    out = upblock_forward_clip(params, x_clip)
    jax.block_until_ready(out)

    # --- f32 streaming reference (frames + 2 None flush steps) ----------------
    rstate = ((None, None), (None, None))
    routs = []
    for inp in frames + [None, None]:
        rout, rstate = ref_upblock_step(raw, rstate, inp)
        if rout is not None:
            routs.append(rout)
    assert len(routs) == T
    ref = jnp.stack(routs, axis=0)              # (T, N, out_ch, 2H, 2W)

    assert out.shape == (T, N, out_ch, 2 * H, 2 * W)
    assert out.dtype == jnp.float32
    assert bool(jnp.all(jnp.isfinite(out)))
    err = float(jnp.max(jnp.abs(out - ref)))
    # bf16 MXU inputs / bf16 inter-kernel activation vs pure-f32 reference.
    assert err < 0.25, f"max abs error vs f32 reference: {err}"

    print("KERNEL_OK")
</pallas_src>

<mosaic_0001>
module attributes {stable_mosaic.version = 11 : i64} {
  func.func @_conv1_kernel(%arg0: i32, %arg1: memref<1x4x324xf32, #tpu.memory_space<vmem>>, %arg2: memref<1x16x324xf32, #tpu.memory_space<vmem>>, %arg3: memref<16x144xbf16, #tpu.memory_space<vmem>>, %arg4: memref<16x1xf32, #tpu.memory_space<vmem>>, %arg5: memref<16x1xf32, #tpu.memory_space<vmem>>, %arg6: memref<1x324xf32, #tpu.memory_space<vmem>>, %arg7: memref<1x16x324xbf16, #tpu.memory_space<vmem>>, %arg8: memref<16x324xf32, #tpu.memory_space<vmem>>, %arg9: memref<144x324xbf16, #tpu.memory_space<vmem>>) attributes {dimension_semantics = [#tpu.dimension_semantics<parallel>], iteration_bounds = array<i64: 6>, scalar_prefetch = 0 : i64, scratch_operands = 2 : i64, tpu.core_type = #tpu.core_type<tc>, window_params = [{transform_indices = @transform_0, window_bounds = array<i64: 1, 4, 324>}, {transform_indices = @transform_1, window_bounds = array<i64: 1, 16, 324>}, {pipeline_mode = #tpu.pipeline_mode<synchronous>, transform_indices = @transform_2, window_bounds = array<i64: 16, 144>}, {pipeline_mode = #tpu.pipeline_mode<synchronous>, transform_indices = @transform_3, window_bounds = array<i64: 16, 1>}, {pipeline_mode = #tpu.pipeline_mode<synchronous>, transform_indices = @transform_4, window_bounds = array<i64: 16, 1>}, {pipeline_mode = #tpu.pipeline_mode<synchronous>, transform_indices = @transform_5, window_bounds = array<i64: 1, 324>}, {transform_indices = @transform_6, window_bounds = array<i64: 1, 16, 324>}]} {
    %c0 = arith.constant 0 : index
    %c0_0 = arith.constant 0 : index
    %c0_1 = arith.constant 0 : index
    %0 = vector.load %arg2[%c0, %c0_0, %c0_1] : memref<1x16x324xf32, #tpu.memory_space<vmem>>, vector<1x16x324xf32>
    %1 = vector.shape_cast %0 : vector<1x16x324xf32> to vector<16x324xf32>
    %c0_2 = arith.constant 0 : index
    %c0_3 = arith.constant 0 : index
    %2 = vector.load %arg8[%c0_2, %c0_3] : memref<16x324xf32, #tpu.memory_space<vmem>>, vector<16x324xf32>
    tpu.vector_store %arg8[%c0_2, %c0_3], %1 {strides = array<i32>} : memref<16x324xf32, #tpu.memory_space<vmem>>, vector<16x324xf32>,
    %c0_4 = arith.constant 0 : index
    %c0_5 = arith.constant 0 : index
    %c0_6 = arith.constant 0 : index
    %3 = vector.load %arg1[%c0_4, %c0_5, %c0_6] : memref<1x4x324xf32, #tpu.memory_space<vmem>>, vector<1x4x324xf32>
    %4 = vector.shape_cast %3 : vector<1x4x324xf32> to vector<4x324xf32>
    %c0_7 = arith.constant 0 : index
    %c0_8 = arith.constant 0 : index
    %5 = vector.load %arg8[%c0_7, %c0_8] : memref<16x324xf32, #tpu.memory_space<vmem>>, vector<4x324xf32>
    tpu.vector_store %arg8[%c0_7, %c0_8], %4 {strides = array<i32>} : memref<16x324xf32, #tpu.memory_space<vmem>>, vector<4x324xf32>,
    %c0_9 = arith.constant 0 : index
    %c0_10 = arith.constant 0 : index
    %6 = vector.load %arg3[%c0_9, %c0_10] : memref<16x144xbf16, #tpu.memory_space<vmem>>, vector<16x144xbf16>
    %c0_11 = arith.constant 0 : index
    %c0_12 = arith.constant 0 : index
    %7 = vector.load %arg4[%c0_11, %c0_12] : memref<16x1xf32, #tpu.memory_space<vmem>>, vector<16x1xf32>
    %c0_13 = arith.constant 0 : index
    %c0_14 = arith.constant 0 : index
    %8 = vector.load %arg5[%c0_13, %c0_14] : memref<16x1xf32, #tpu.memory_space<vmem>>, vector<16x1xf32>
    %c0_15 = arith.constant 0 : index
    %c0_16 = arith.constant 0 : index
    %9 = vector.load %arg6[%c0_15, %c0_16] : memref<1x324xf32, #tpu.memory_space<vmem>>, vector<1x324xf32>
    %c0_17 = arith.constant 0 : index
    %c0_18 = arith.constant 0 : index
    %10 = vector.load %arg8[%c0_17, %c0_18] : memref<16x324xf32, #tpu.memory_space<vmem>>, vector<16x324xf32>
    %11 = arith.truncf %10 : vector<16x324xf32> to vector<16x324xbf16>
    %12 = vector.extract_strided_slice %11 {offsets = [0, 305], sizes = [16, 19], strides = [1, 1]} : vector<16x324xbf16> to vector<16x19xbf16>
    %13 = vector.extract_strided_slice %11 {offsets = [0, 0], sizes = [16, 305], strides = [1, 1]} : vector<16x324xbf16> to vector<16x305xbf16>
    %14 = tpu.concatenate %12, %13 in 1 : vector<16x19xbf16>, vector<16x305xbf16> -> vector<16x324xbf16>
    %c0_19 = arith.constant 0 : index
    %c0_20 = arith.constant 0 : index
    %15 = vector.load %arg9[%c0_19, %c0_20] : memref<144x324xbf16, #tpu.memory_space<vmem>>, vector<16x324xbf16>
    tpu.vector_store %arg9[%c0_19, %c0_20], %14 {strides = array<i32>} : memref<144x324xbf16, #tpu.memory_space<vmem>>, vector<16x324xbf16>,
    %16 = vector.extract_strided_slice %11 {offsets = [0, 306], sizes = [16, 18], strides = [1, 1]} : vector<16x324xbf16> to vector<16x18xbf16>
    %17 = vector.extract_strided_slice %11 {offsets = [0, 0], sizes = [16, 306], strides = [1, 1]} : vector<16x324xbf16> to vector<16x306xbf16>
    %18 = tpu.concatenate %16, %17 in 1 : vector<16x18xbf16>, vector<16x306xbf16> -> vector<16x324xbf16>
    %c16 = arith.constant 16 : index
    %c0_21 = arith.constant 0 : index
    %19 = vector.load %arg9[%c16, %c0_21] : memref<144x324xbf16, #tpu.memory_space<vmem>>, vector<16x324xbf16>
    tpu.vector_store %arg9[%c16, %c0_21], %18 {strides = array<i32>} : memref<144x324xbf16, #tpu.memory_space<vmem>>, vector<16x324xbf16>,
    %20 = vector.extract_strided_slice %11 {offsets = [0, 307], sizes = [16, 17], strides = [1, 1]} : vector<16x324xbf16> to vector<16x17xbf16>
    %21 = vector.extract_strided_slice %11 {offsets = [0, 0], sizes = [16, 307], strides = [1, 1]} : vector<16x324xbf16> to vector<16x307xbf16>
    %22 = tpu.concatenate %20, %21 in 1 : vector<16x17xbf16>, vector<16x307xbf16> -> vector<16x324xbf16>
    %c32 = arith.constant 32 : index
    %c0_22 = arith.constant 0 : index
    %23 = vector.load %arg9[%c32, %c0_22] : memref<144x324xbf16, #tpu.memory_space<vmem>>, vector<16x324xbf16>
    tpu.vector_store %arg9[%c32, %c0_22], %22 {strides = array<i32>} : memref<144x324xbf16, #tpu.memory_space<vmem>>, vector<16x324xbf16>,
    %24 = vector.extract_strided_slice %11 {offsets = [0, 323], sizes = [16, 1], strides = [1, 1]} : vector<16x324xbf16> to vector<16x1xbf16>
    %25 = vector.extract_strided_slice %11 {offsets = [0, 0], sizes = [16, 323], strides = [1, 1]} : vector<16x324xbf16> to vector<16x323xbf16>
    %26 = tpu.concatenate %24, %25 in 1 : vector<16x1xbf16>, vector<16x323xbf16> -> vector<16x324xbf16>
    %c48 = arith.constant 48 : index
    %c0_23 = arith.constant 0 : index
    %27 = vector.load %arg9[%c48, %c0_23] : memref<144x324xbf16, #tpu.memory_space<vmem>>, vector<16x324xbf16>
    tpu.vector_store %arg9[%c48, %c0_23], %26 {strides = array<i32>} : memref<144x324xbf16, #tpu.memory_space<vmem>>, vector<16x324xbf16>,
    %c64 = arith.constant 64 : index
    %c0_24 = arith.constant 0 : index
    %28 = vector.load %arg9[%c64, %c0_24] : memref<144x324xbf16, #tpu.memory_space<vmem>>, vector<16x324xbf16>
    tpu.vector_store %arg9[%c64, %c0_24], %11 {strides = array<i32>} : memref<144x324xbf16, #tpu.memory_space<vmem>>, vector<16x324xbf16>,
    %29 = vector.extract_strided_slice %11 {offsets = [0, 1], sizes = [16, 323], strides = [1, 1]} : vector<16x324xbf16> to vector<16x323xbf16>
    %30 = vector.extract_strided_slice %11 {offsets = [0, 0], sizes = [16, 1], strides = [1, 1]} : vector<16x324xbf16> to vector<16x1xbf16>
    %31 = tpu.concatenate %29, %30 in 1 : vector<16x323xbf16>, vector<16x1xbf16> -> vector<16x324xbf16>
    %c80 = arith.constant 80 : index
    %c0_25 = arith.constant 0 : index
    %32 = vector.load %arg9[%c80, %c0_25] : memref<144x324xbf16, #tpu.memory_space<vmem>>, vector<16x324xbf16>
    tpu.vector_store %arg9[%c80, %c0_25], %31 {strides = array<i32>} : memref<144x324xbf16, #tpu.memory_space<vmem>>, vector<16x324xbf16>,
    %33 = vector.extract_strided_slice %11 {offsets = [0, 17], sizes = [16, 307], strides = [1, 1]} : vector<16x324xbf16> to vector<16x307xbf16>
    %34 = vector.extract_strided_slice %11 {offsets = [0, 0], sizes = [16, 17], strides = [1, 1]} : vector<16x324xbf16> to vector<16x17xbf16>
    %35 = tpu.concatenate %33, %34 in 1 : vector<16x307xbf16>, vector<16x17xbf16> -> vector<16x324xbf16>
    %c96 = arith.constant 96 : index
    %c0_26 = arith.constant 0 : index
    %36 = vector.load %arg9[%c96, %c0_26] : memref<144x324xbf16, #tpu.memory_space<vmem>>, vector<16x324xbf16>
    tpu.vector_store %arg9[%c96, %c0_26], %35 {strides = array<i32>} : memref<144x324xbf16, #tpu.memory_space<vmem>>, vector<16x324xbf16>,
    %37 = vector.extract_strided_slice %11 {offsets = [0, 18], sizes = [16, 306], strides = [1, 1]} : vector<16x324xbf16> to vector<16x306xbf16>
    %38 = vector.extract_strided_slice %11 {offsets = [0, 0], sizes = [16, 18], strides = [1, 1]} : vector<16x324xbf16> to vector<16x18xbf16>
    %39 = tpu.concatenate %37, %38 in 1 : vector<16x306xbf16>, vector<16x18xbf16> -> vector<16x324xbf16>
    %c112 = arith.constant 112 : index
    %c0_27 = arith.constant 0 : index
    %40 = vector.load %arg9[%c112, %c0_27] : memref<144x324xbf16, #tpu.memory_space<vmem>>, vector<16x324xbf16>
    tpu.vector_store %arg9[%c112, %c0_27], %39 {strides = array<i32>} : memref<144x324xbf16, #tpu.memory_space<vmem>>, vector<16x324xbf16>,
    %41 = vector.extract_strided_slice %11 {offsets = [0, 19], sizes = [16, 305], strides = [1, 1]} : vector<16x324xbf16> to vector<16x305xbf16>
    %42 = vector.extract_strided_slice %11 {offsets = [0, 0], sizes = [16, 19], strides = [1, 1]} : vector<16x324xbf16> to vector<16x19xbf16>
    %43 = tpu.concatenate %41, %42 in 1 : vector<16x305xbf16>, vector<16x19xbf16> -> vector<16x324xbf16>
    %c128 = arith.constant 128 : index
    %c0_28 = arith.constant 0 : index
    %44 = vector.load %arg9[%c128, %c0_28] : memref<144x324xbf16, #tpu.memory_space<vmem>>, vector<16x324xbf16>
    tpu.vector_store %arg9[%c128, %c0_28], %43 {strides = array<i32>} : memref<144x324xbf16, #tpu.memory_space<vmem>>, vector<16x324xbf16>,
    %c0_29 = arith.constant 0 : index
    %c0_30 = arith.constant 0 : index
    %45 = vector.load %arg9[%c0_29, %c0_30] : memref<144x324xbf16, #tpu.memory_space<vmem>>, vector<144x324xbf16>
    %cst = arith.constant dense<0.000000e+00> : vector<16x324xf32>
    %46 = tpu.matmul %6, %45, %cst {dimension_numbers = #tpu.dot_dimension_numbers<[1], [0], [0], [1], [0, 0, 1, 1], [], []>} : vector<16x144xbf16>, vector<144x324xbf16>, vector<16x324xf32> -> vector<16x324xf32>
    %47 = vector.broadcast %7 : vector<16x1xf32> to vector<16x324xf32>
    %48 = arith.mulf %46, %47 : vector<16x324xf32>
    %49 = vector.broadcast %8 : vector<16x1xf32> to vector<16x324xf32>
    %50 = arith.addf %48, %49 : vector<16x324xf32>
    %cst_31 = arith.constant 0.000000e+00 : f32
    %51 = vector.broadcast %cst_31 : f32 to vector<16x324xf32>
    %52 = arith.maximumf %50, %51 : vector<16x324xf32>
    %53 = vector.broadcast %9 : vector<1x324xf32> to vector<16x324xf32>
    %54 = arith.mulf %52, %53 : vector<16x324xf32>
    %55 = arith.truncf %54 : vector<16x324xf32> to vector<16x324xbf16>
    %c0_32 = arith.constant 0 : index
    %c0_33 = arith.constant 0 : index
    %c0_34 = arith.constant 0 : index
    %56 = vector.load %arg7[%c0_32, %c0_33, %c0_34] : memref<1x16x324xbf16, #tpu.memory_space<vmem>>, vector<1x16x324xbf16>
    %57 = vector.shape_cast %56 : vector<1x16x324xbf16> to vector<16x324xbf16>
    %58 = vector.shape_cast %55 : vector<16x324xbf16> to vector<1x16x324xbf16>
    tpu.vector_store %arg7[%c0_32, %c0_33, %c0_34], %58 {strides = array<i32>} : memref<1x16x324xbf16, #tpu.memory_space<vmem>>, vector<1x16x324xbf16>,
    return
  }
  func.func @transform_0(%arg0: i32) -> (i32, i32, i32) {
    %c0_i32 = arith.constant 0 : i32
    %c0_i32_0 = arith.constant 0 : i32
    %c0_i32_1 = arith.constant 0 : i32
    return %arg0, %c0_i32, %c0_i32_0 : i32, i32, i32
  }
  func.func @transform_1(%arg0: i32) -> (i32, i32, i32) {
    %c0_i32 = arith.constant 0 : i32
    %c0_i32_0 = arith.constant 0 : i32
    %c0_i32_1 = arith.constant 0 : i32
    return %arg0, %c0_i32, %c0_i32_0 : i32, i32, i32
  }
  func.func @transform_2(%arg0: i32) -> (i32, i32) {
    %c0_i32 = arith.constant 0 : i32
    %c0_i32_0 = arith.constant 0 : i32
    %c0_i32_1 = arith.constant 0 : i32
    return %c0_i32, %c0_i32_0 : i32, i32
  }
  func.func @transform_3(%arg0: i32) -> (i32, i32) {
    %c0_i32 = arith.constant 0 : i32
    %c0_i32_0 = arith.constant 0 : i32
    %c0_i32_1 = arith.constant 0 : i32
    return %c0_i32, %c0_i32_0 : i32, i32
  }
  func.func @transform_4(%arg0: i32) -> (i32, i32) {
    %c0_i32 = arith.constant 0 : i32
    %c0_i32_0 = arith.constant 0 : i32
    %c0_i32_1 = arith.constant 0 : i32
    return %c0_i32, %c0_i32_0 : i32, i32
  }
  func.func @transform_5(%arg0: i32) -> (i32, i32) {
    %c0_i32 = arith.constant 0 : i32
    %c0_i32_0 = arith.constant 0 : i32
    %c0_i32_1 = arith.constant 0 : i32
    return %c0_i32, %c0_i32_0 : i32, i32
  }
  func.func @transform_6(%arg0: i32) -> (i32, i32, i32) {
    %c0_i32 = arith.constant 0 : i32
    %c0_i32_0 = arith.constant 0 : i32
    %c0_i32_1 = arith.constant 0 : i32
    return %arg0, %c0_i32, %c0_i32_0 : i32, i32, i32
  }
}

module attributes {stable_mosaic.version = 11 : i64} {
  func.func @_conv23_kernel(%arg0: i32, %arg1: memref<1x4x324xbf16, #tpu.memory_space<vmem>>, %arg2: memref<1x16x324xbf16, #tpu.memory_space<vmem>>, %arg3: memref<16x144xbf16, #tpu.memory_space<vmem>>, %arg4: memref<16x1xf32, #tpu.memory_space<vmem>>, %arg5: memref<16x1xf32, #tpu.memory_space<vmem>>, %arg6: memref<32x144xbf16, #tpu.memory_space<vmem>>, %arg7: memref<32x1xf32, #tpu.memory_space<vmem>>, %arg8: memref<1x324xf32, #tpu.memory_space<vmem>>, %arg9: memref<1x32x324xf32, #tpu.memory_space<vmem>>, %arg10: memref<16x324xf32, #tpu.memory_space<vmem>>, %arg11: memref<144x324xbf16, #tpu.memory_space<vmem>>) attributes {dimension_semantics = [#tpu.dimension_semantics<parallel>], iteration_bounds = array<i64: 6>, scalar_prefetch = 0 : i64, scratch_operands = 2 : i64, tpu.core_type = #tpu.core_type<tc>, window_params = [{transform_indices = @transform_0, window_bounds = array<i64: 1, 4, 324>}, {transform_indices = @transform_1, window_bounds = array<i64: 1, 16, 324>}, {pipeline_mode = #tpu.pipeline_mode<synchronous>, transform_indices = @transform_2, window_bounds = array<i64: 16, 144>}, {pipeline_mode = #tpu.pipeline_mode<synchronous>, transform_indices = @transform_3, window_bounds = array<i64: 16, 1>}, {pipeline_mode = #tpu.pipeline_mode<synchronous>, transform_indices = @transform_4, window_bounds = array<i64: 16, 1>}, {pipeline_mode = #tpu.pipeline_mode<synchronous>, transform_indices = @transform_5, window_bounds = array<i64: 32, 144>}, {pipeline_mode = #tpu.pipeline_mode<synchronous>, transform_indices = @transform_6, window_bounds = array<i64: 32, 1>}, {pipeline_mode = #tpu.pipeline_mode<synchronous>, transform_indices = @transform_7, window_bounds = array<i64: 1, 324>}, {transform_indices = @transform_8, window_bounds = array<i64: 1, 32, 324>}]} {
    %c0 = arith.constant 0 : index
    %c0_0 = arith.constant 0 : index
    %c0_1 = arith.constant 0 : index
    %0 = vector.load %arg2[%c0, %c0_0, %c0_1] : memref<1x16x324xbf16, #tpu.memory_space<vmem>>, vector<1x16x324xbf16>
    %1 = vector.shape_cast %0 : vector<1x16x324xbf16> to vector<16x324xbf16>
    %2 = arith.extf %1 : vector<16x324xbf16> to vector<16x324xf32>
    %c0_2 = arith.constant 0 : index
    %c0_3 = arith.constant 0 : index
    %3 = vector.load %arg10[%c0_2, %c0_3] : memref<16x324xf32, #tpu.memory_space<vmem>>, vector<16x324xf32>
    tpu.vector_store %arg10[%c0_2, %c0_3], %2 {strides = array<i32>} : memref<16x324xf32, #tpu.memory_space<vmem>>, vector<16x324xf32>,
    %c0_4 = arith.constant 0 : index
    %c0_5 = arith.constant 0 : index
    %c0_6 = arith.constant 0 : index
    %4 = vector.load %arg1[%c0_4, %c0_5, %c0_6] : memref<1x4x324xbf16, #tpu.memory_space<vmem>>, vector<1x4x324xbf16>
    %5 = vector.shape_cast %4 : vector<1x4x324xbf16> to vector<4x324xbf16>
    %6 = arith.extf %5 : vector<4x324xbf16> to vector<4x324xf32>
    %c0_7 = arith.constant 0 : index
    %c0_8 = arith.constant 0 : index
    %7 = vector.load %arg10[%c0_7, %c0_8] : memref<16x324xf32, #tpu.memory_space<vmem>>, vector<4x324xf32>
    tpu.vector_store %arg10[%c0_7, %c0_8], %6 {strides = array<i32>} : memref<16x324xf32, #tpu.memory_space<vmem>>, vector<4x324xf32>,
    %c0_9 = arith.constant 0 : index
    %c0_10 = arith.constant 0 : index
    %8 = vector.load %arg3[%c0_9, %c0_10] : memref<16x144xbf16, #tpu.memory_space<vmem>>, vector<16x144xbf16>
    %c0_11 = arith.constant 0 : index
    %c0_12 = arith.constant 0 : index
    %9 = vector.load %arg4[%c0_11, %c0_12] : memref<16x1xf32, #tpu.memory_space<vmem>>, vector<16x1xf32>
    %c0_13 = arith.constant 0 : index
    %c0_14 = arith.constant 0 : index
    %10 = vector.load %arg5[%c0_13, %c0_14] : memref<16x1xf32, #tpu.memory_space<vmem>>, vector<16x1xf32>
    %c0_15 = arith.constant 0 : index
    %c0_16 = arith.constant 0 : index
    %11 = vector.load %arg8[%c0_15, %c0_16] : memref<1x324xf32, #tpu.memory_space<vmem>>, vector<1x324xf32>
    %c0_17 = arith.constant 0 : index
    %c0_18 = arith.constant 0 : index
    %12 = vector.load %arg10[%c0_17, %c0_18] : memref<16x324xf32, #tpu.memory_space<vmem>>, vector<16x324xf32>
    %13 = arith.truncf %12 : vector<16x324xf32> to vector<16x324xbf16>
    %14 = vector.extract_strided_slice %13 {offsets = [0, 305], sizes = [16, 19], strides = [1, 1]} : vector<16x324xbf16> to vector<16x19xbf16>
    %15 = vector.extract_strided_slice %13 {offsets = [0, 0], sizes = [16, 305], strides = [1, 1]} : vector<16x324xbf16> to vector<16x305xbf16>
    %16 = tpu.concatenate %14, %15 in 1 : vector<16x19xbf16>, vector<16x305xbf16> -> vector<16x324xbf16>
    %c0_19 = arith.constant 0 : index
    %c0_20 = arith.constant 0 : index
    %17 = vector.load %arg11[%c0_19, %c0_20] : memref<144x324xbf16, #tpu.memory_space<vmem>>, vector<16x324xbf16>
    tpu.vector_store %arg11[%c0_19, %c0_20], %16 {strides = array<i32>} : memref<144x324xbf16, #tpu.memory_space<vmem>>, vector<16x324xbf16>,
    %18 = vector.extract_strided_slice %13 {offsets = [0, 306], sizes = [16, 18], strides = [1, 1]} : vector<16x324xbf16> to vector<16x18xbf16>
    %19 = vector.extract_strided_slice %13 {offsets = [0, 0], sizes = [16, 306], strides = [1, 1]} : vector<16x324xbf16> to vector<16x306xbf16>
    %20 = tpu.concatenate %18, %19 in 1 : vector<16x18xbf16>, vector<16x306xbf16> -> vector<16x324xbf16>
    %c16 = arith.constant 16 : index
    %c0_21 = arith.constant 0 : index
    %21 = vector.load %arg11[%c16, %c0_21] : memref<144x324xbf16, #tpu.memory_space<vmem>>, vector<16x324xbf16>
    tpu.vector_store %arg11[%c16, %c0_21], %20 {strides = array<i32>} : memref<144x324xbf16, #tpu.memory_space<vmem>>, vector<16x324xbf16>,
    %22 = vector.extract_strided_slice %13 {offsets = [0, 307], sizes = [16, 17], strides = [1, 1]} : vector<16x324xbf16> to vector<16x17xbf16>
    %23 = vector.extract_strided_slice %13 {offsets = [0, 0], sizes = [16, 307], strides = [1, 1]} : vector<16x324xbf16> to vector<16x307xbf16>
    %24 = tpu.concatenate %22, %23 in 1 : vector<16x17xbf16>, vector<16x307xbf16> -> vector<16x324xbf16>
    %c32 = arith.constant 32 : index
    %c0_22 = arith.constant 0 : index
    %25 = vector.load %arg11[%c32, %c0_22] : memref<144x324xbf16, #tpu.memory_space<vmem>>, vector<16x324xbf16>
    tpu.vector_store %arg11[%c32, %c0_22], %24 {strides = array<i32>} : memref<144x324xbf16, #tpu.memory_space<vmem>>, vector<16x324xbf16>,
    %26 = vector.extract_strided_slice %13 {offsets = [0, 323], sizes = [16, 1], strides = [1, 1]} : vector<16x324xbf16> to vector<16x1xbf16>
    %27 = vector.extract_strided_slice %13 {offsets = [0, 0], sizes = [16, 323], strides = [1, 1]} : vector<16x324xbf16> to vector<16x323xbf16>
    %28 = tpu.concatenate %26, %27 in 1 : vector<16x1xbf16>, vector<16x323xbf16> -> vector<16x324xbf16>
    %c48 = arith.constant 48 : index
    %c0_23 = arith.constant 0 : index
    %29 = vector.load %arg11[%c48, %c0_23] : memref<144x324xbf16, #tpu.memory_space<vmem>>, vector<16x324xbf16>
    tpu.vector_store %arg11[%c48, %c0_23], %28 {strides = array<i32>} : memref<144x324xbf16, #tpu.memory_space<vmem>>, vector<16x324xbf16>,
    %c64 = arith.constant 64 : index
    %c0_24 = arith.constant 0 : index
    %30 = vector.load %arg11[%c64, %c0_24] : memref<144x324xbf16, #tpu.memory_space<vmem>>, vector<16x324xbf16>
    tpu.vector_store %arg11[%c64, %c0_24], %13 {strides = array<i32>} : memref<144x324xbf16, #tpu.memory_space<vmem>>, vector<16x324xbf16>,
    %31 = vector.extract_strided_slice %13 {offsets = [0, 1], sizes = [16, 323], strides = [1, 1]} : vector<16x324xbf16> to vector<16x323xbf16>
    %32 = vector.extract_strided_slice %13 {offsets = [0, 0], sizes = [16, 1], strides = [1, 1]} : vector<16x324xbf16> to vector<16x1xbf16>
    %33 = tpu.concatenate %31, %32 in 1 : vector<16x323xbf16>, vector<16x1xbf16> -> vector<16x324xbf16>
    %c80 = arith.constant 80 : index
    %c0_25 = arith.constant 0 : index
    %34 = vector.load %arg11[%c80, %c0_25] : memref<144x324xbf16, #tpu.memory_space<vmem>>, vector<16x324xbf16>
    tpu.vector_store %arg11[%c80, %c0_25], %33 {strides = array<i32>} : memref<144x324xbf16, #tpu.memory_space<vmem>>, vector<16x324xbf16>,
    %35 = vector.extract_strided_slice %13 {offsets = [0, 17], sizes = [16, 307], strides = [1, 1]} : vector<16x324xbf16> to vector<16x307xbf16>
    %36 = vector.extract_strided_slice %13 {offsets = [0, 0], sizes = [16, 17], strides = [1, 1]} : vector<16x324xbf16> to vector<16x17xbf16>
    %37 = tpu.concatenate %35, %36 in 1 : vector<16x307xbf16>, vector<16x17xbf16> -> vector<16x324xbf16>
    %c96 = arith.constant 96 : index
    %c0_26 = arith.constant 0 : index
    %38 = vector.load %arg11[%c96, %c0_26] : memref<144x324xbf16, #tpu.memory_space<vmem>>, vector<16x324xbf16>
    tpu.vector_store %arg11[%c96, %c0_26], %37 {strides = array<i32>} : memref<144x324xbf16, #tpu.memory_space<vmem>>, vector<16x324xbf16>,
    %39 = vector.extract_strided_slice %13 {offsets = [0, 18], sizes = [16, 306], strides = [1, 1]} : vector<16x324xbf16> to vector<16x306xbf16>
    %40 = vector.extract_strided_slice %13 {offsets = [0, 0], sizes = [16, 18], strides = [1, 1]} : vector<16x324xbf16> to vector<16x18xbf16>
    %41 = tpu.concatenate %39, %40 in 1 : vector<16x306xbf16>, vector<16x18xbf16> -> vector<16x324xbf16>
    %c112 = arith.constant 112 : index
    %c0_27 = arith.constant 0 : index
    %42 = vector.load %arg11[%c112, %c0_27] : memref<144x324xbf16, #tpu.memory_space<vmem>>, vector<16x324xbf16>
    tpu.vector_store %arg11[%c112, %c0_27], %41 {strides = array<i32>} : memref<144x324xbf16, #tpu.memory_space<vmem>>, vector<16x324xbf16>,
    %43 = vector.extract_strided_slice %13 {offsets = [0, 19], sizes = [16, 305], strides = [1, 1]} : vector<16x324xbf16> to vector<16x305xbf16>
    %44 = vector.extract_strided_slice %13 {offsets = [0, 0], sizes = [16, 19], strides = [1, 1]} : vector<16x324xbf16> to vector<16x19xbf16>
    %45 = tpu.concatenate %43, %44 in 1 : vector<16x305xbf16>, vector<16x19xbf16> -> vector<16x324xbf16>
    %c128 = arith.constant 128 : index
    %c0_28 = arith.constant 0 : index
    %46 = vector.load %arg11[%c128, %c0_28] : memref<144x324xbf16, #tpu.memory_space<vmem>>, vector<16x324xbf16>
    tpu.vector_store %arg11[%c128, %c0_28], %45 {strides = array<i32>} : memref<144x324xbf16, #tpu.memory_space<vmem>>, vector<16x324xbf16>,
    %c0_29 = arith.constant 0 : index
    %c0_30 = arith.constant 0 : index
    %47 = vector.load %arg11[%c0_29, %c0_30] : memref<144x324xbf16, #tpu.memory_space<vmem>>, vector<144x324xbf16>
    %cst = arith.constant dense<0.000000e+00> : vector<16x324xf32>
    %48 = tpu.matmul %8, %47, %cst {dimension_numbers = #tpu.dot_dimension_numbers<[1], [0], [0], [1], [0, 0, 1, 1], [], []>} : vector<16x144xbf16>, vector<144x324xbf16>, vector<16x324xf32> -> vector<16x324xf32>
    %49 = vector.broadcast %9 : vector<16x1xf32> to vector<16x324xf32>
    %50 = arith.mulf %48, %49 : vector<16x324xf32>
    %51 = vector.broadcast %10 : vector<16x1xf32> to vector<16x324xf32>
    %52 = arith.addf %50, %51 : vector<16x324xf32>
    %cst_31 = arith.constant 0.000000e+00 : f32
    %53 = vector.broadcast %cst_31 : f32 to vector<16x324xf32>
    %54 = arith.maximumf %52, %53 : vector<16x324xf32>
    %55 = vector.broadcast %11 : vector<1x324xf32> to vector<16x324xf32>
    %56 = arith.mulf %54, %55 : vector<16x324xf32>
    %c0_32 = arith.constant 0 : index
    %c0_33 = arith.constant 0 : index
    %57 = vector.load %arg10[%c0_32, %c0_33] : memref<16x324xf32, #tpu.memory_space<vmem>>, vector<16x324xf32>
    tpu.vector_store %arg10[%c0_32, %c0_33], %56 {strides = array<i32>} : memref<16x324xf32, #tpu.memory_space<vmem>>, vector<16x324xf32>,
    %c0_34 = arith.constant 0 : index
    %c0_35 = arith.constant 0 : index
    %58 = vector.load %arg6[%c0_34, %c0_35] : memref<32x144xbf16, #tpu.memory_space<vmem>>, vector<32x144xbf16>
    %c0_36 = arith.constant 0 : index
    %c0_37 = arith.constant 0 : index
    %59 = vector.load %arg7[%c0_36, %c0_37] : memref<32x1xf32, #tpu.memory_space<vmem>>, vector<32x1xf32>
    %c0_38 = arith.constant 0 : index
    %c0_39 = arith.constant 0 : index
    %60 = vector.load %arg10[%c0_38, %c0_39] : memref<16x324xf32, #tpu.memory_space<vmem>>, vector<16x324xf32>
    %61 = arith.truncf %60 : vector<16x324xf32> to vector<16x324xbf16>
    %62 = vector.extract_strided_slice %61 {offsets = [0, 305], sizes = [16, 19], strides = [1, 1]} : vector<16x324xbf16> to vector<16x19xbf16>
    %63 = vector.extract_strided_slice %61 {offsets = [0, 0], sizes = [16, 305], strides = [1, 1]} : vector<16x324xbf16> to vector<16x305xbf16>
    %64 = tpu.concatenate %62, %63 in 1 : vector<16x19xbf16>, vector<16x305xbf16> -> vector<16x324xbf16>
    %c0_40 = arith.constant 0 : index
    %c0_41 = arith.constant 0 : index
    %65 = vector.load %arg11[%c0_40, %c0_41] : memref<144x324xbf16, #tpu.memory_space<vmem>>, vector<16x324xbf16>
    tpu.vector_store %arg11[%c0_40, %c0_41], %64 {strides = array<i32>} : memref<144x324xbf16, #tpu.memory_space<vmem>>, vector<16x324xbf16>,
    %66 = vector.extract_strided_slice %61 {offsets = [0, 306], sizes = [16, 18], strides = [1, 1]} : vector<16x324xbf16> to vector<16x18xbf16>
    %67 = vector.extract_strided_slice %61 {offsets = [0, 0], sizes = [16, 306], strides = [1, 1]} : vector<16x324xbf16> to vector<16x306xbf16>
    %68 = tpu.concatenate %66, %67 in 1 : vector<16x18xbf16>, vector<16x306xbf16> -> vector<16x324xbf16>
    %c16_42 = arith.constant 16 : index
    %c0_43 = arith.constant 0 : index
    %69 = vector.load %arg11[%c16_42, %c0_43] : memref<144x324xbf16, #tpu.memory_space<vmem>>, vector<16x324xbf16>
    tpu.vector_store %arg11[%c16_42, %c0_43], %68 {strides = array<i32>} : memref<144x324xbf16, #tpu.memory_space<vmem>>, vector<16x324xbf16>,
    %70 = vector.extract_strided_slice %61 {offsets = [0, 307], sizes = [16, 17], strides = [1, 1]} : vector<16x324xbf16> to vector<16x17xbf16>
    %71 = vector.extract_strided_slice %61 {offsets = [0, 0], sizes = [16, 307], strides = [1, 1]} : vector<16x324xbf16> to vector<16x307xbf16>
    %72 = tpu.concatenate %70, %71 in 1 : vector<16x17xbf16>, vector<16x307xbf16> -> vector<16x324xbf16>
    %c32_44 = arith.constant 32 : index
    %c0_45 = arith.constant 0 : index
    %73 = vector.load %arg11[%c32_44, %c0_45] : memref<144x324xbf16, #tpu.memory_space<vmem>>, vector<16x324xbf16>
    tpu.vector_store %arg11[%c32_44, %c0_45], %72 {strides = array<i32>} : memref<144x324xbf16, #tpu.memory_space<vmem>>, vector<16x324xbf16>,
    %74 = vector.extract_strided_slice %61 {offsets = [0, 323], sizes = [16, 1], strides = [1, 1]} : vector<16x324xbf16> to vector<16x1xbf16>
    %75 = vector.extract_strided_slice %61 {offsets = [0, 0], sizes = [16, 323], strides = [1, 1]} : vector<16x324xbf16> to vector<16x323xbf16>
    %76 = tpu.concatenate %74, %75 in 1 : vector<16x1xbf16>, vector<16x323xbf16> -> vector<16x324xbf16>
    %c48_46 = arith.constant 48 : index
    %c0_47 = arith.constant 0 : index
    %77 = vector.load %arg11[%c48_46, %c0_47] : memref<144x324xbf16, #tpu.memory_space<vmem>>, vector<16x324xbf16>
    tpu.vector_store %arg11[%c48_46, %c0_47], %76 {strides = array<i32>} : memref<144x324xbf16, #tpu.memory_space<vmem>>, vector<16x324xbf16>,
    %c64_48 = arith.constant 64 : index
    %c0_49 = arith.constant 0 : index
    %78 = vector.load %arg11[%c64_48, %c0_49] : memref<144x324xbf16, #tpu.memory_space<vmem>>, vector<16x324xbf16>
    tpu.vector_store %arg11[%c64_48, %c0_49], %61 {strides = array<i32>} : memref<144x324xbf16, #tpu.memory_space<vmem>>, vector<16x324xbf16>,
    %79 = vector.extract_strided_slice %61 {offsets = [0, 1], sizes = [16, 323], strides = [1, 1]} : vector<16x324xbf16> to vector<16x323xbf16>
    %80 = vector.extract_strided_slice %61 {offsets = [0, 0], sizes = [16, 1], strides = [1, 1]} : vector<16x324xbf16> to vector<16x1xbf16>
    %81 = tpu.concatenate %79, %80 in 1 : vector<16x323xbf16>, vector<16x1xbf16> -> vector<16x324xbf16>
    %c80_50 = arith.constant 80 : index
    %c0_51 = arith.constant 0 : index
    %82 = vector.load %arg11[%c80_50, %c0_51] : memref<144x324xbf16, #tpu.memory_space<vmem>>, vector<16x324xbf16>
    tpu.vector_store %arg11[%c80_50, %c0_51], %81 {strides = array<i32>} : memref<144x324xbf16, #tpu.memory_space<vmem>>, vector<16x324xbf16>,
    %83 = vector.extract_strided_slice %61 {offsets = [0, 17], sizes = [16, 307], strides = [1, 1]} : vector<16x324xbf16> to vector<16x307xbf16>
    %84 = vector.extract_strided_slice %61 {offsets = [0, 0], sizes = [16, 17], strides = [1, 1]} : vector<16x324xbf16> to vector<16x17xbf16>
    %85 = tpu.concatenate %83, %84 in 1 : vector<16x307xbf16>, vector<16x17xbf16> -> vector<16x324xbf16>
    %c96_52 = arith.constant 96 : index
    %c0_53 = arith.constant 0 : index
    %86 = vector.load %arg11[%c96_52, %c0_53] : memref<144x324xbf16, #tpu.memory_space<vmem>>, vector<16x324xbf16>
    tpu.vector_store %arg11[%c96_52, %c0_53], %85 {strides = array<i32>} : memref<144x324xbf16, #tpu.memory_space<vmem>>, vector<16x324xbf16>,
    %87 = vector.extract_strided_slice %61 {offsets = [0, 18], sizes = [16, 306], strides = [1, 1]} : vector<16x324xbf16> to vector<16x306xbf16>
    %88 = vector.extract_strided_slice %61 {offsets = [0, 0], sizes = [16, 18], strides = [1, 1]} : vector<16x324xbf16> to vector<16x18xbf16>
    %89 = tpu.concatenate %87, %88 in 1 : vector<16x306xbf16>, vector<16x18xbf16> -> vector<16x324xbf16>
    %c112_54 = arith.constant 112 : index
    %c0_55 = arith.constant 0 : index
    %90 = vector.load %arg11[%c112_54, %c0_55] : memref<144x324xbf16, #tpu.memory_space<vmem>>, vector<16x324xbf16>
    tpu.vector_store %arg11[%c112_54, %c0_55], %89 {strides = array<i32>} : memref<144x324xbf16, #tpu.memory_space<vmem>>, vector<16x324xbf16>,
    %91 = vector.extract_strided_slice %61 {offsets = [0, 19], sizes = [16, 305], strides = [1, 1]} : vector<16x324xbf16> to vector<16x305xbf16>
    %92 = vector.extract_strided_slice %61 {offsets = [0, 0], sizes = [16, 19], strides = [1, 1]} : vector<16x324xbf16> to vector<16x19xbf16>
    %93 = tpu.concatenate %91, %92 in 1 : vector<16x305xbf16>, vector<16x19xbf16> -> vector<16x324xbf16>
    %c128_56 = arith.constant 128 : index
    %c0_57 = arith.constant 0 : index
    %94 = vector.load %arg11[%c128_56, %c0_57] : memref<144x324xbf16, #tpu.memory_space<vmem>>, vector<16x324xbf16>
    tpu.vector_store %arg11[%c128_56, %c0_57], %93 {strides = array<i32>} : memref<144x324xbf16, #tpu.memory_space<vmem>>, vector<16x324xbf16>,
    %c0_58 = arith.constant 0 : index
    %c0_59 = arith.constant 0 : index
    %95 = vector.load %arg11[%c0_58, %c0_59] : memref<144x324xbf16, #tpu.memory_space<vmem>>, vector<144x324xbf16>
    %cst_60 = arith.constant dense<0.000000e+00> : vector<32x324xf32>
    %96 = tpu.matmul %58, %95, %cst_60 {dimension_numbers = #tpu.dot_dimension_numbers<[1], [0], [0], [1], [0, 0, 1, 1], [], []>} : vector<32x144xbf16>, vector<144x324xbf16>, vector<32x324xf32> -> vector<32x324xf32>
    %97 = vector.broadcast %59 : vector<32x1xf32> to vector<32x324xf32>
    %98 = arith.addf %96, %97 : vector<32x324xf32>
    %c0_61 = arith.constant 0 : index
    %c0_62 = arith.constant 0 : index
    %c0_63 = arith.constant 0 : index
    %99 = vector.load %arg9[%c0_61, %c0_62, %c0_63] : memref<1x32x324xf32, #tpu.memory_space<vmem>>, vector<1x32x324xf32>
    %100 = vector.shape_cast %99 : vector<1x32x324xf32> to vector<32x324xf32>
    %101 = vector.shape_cast %98 : vector<32x324xf32> to vector<1x32x324xf32>
    tpu.vector_store %arg9[%c0_61, %c0_62, %c0_63], %101 {strides = array<i32>} : memref<1x32x324xf32, #tpu.memory_space<vmem>>, vector<1x32x324xf32>,
    return
  }
  func.func @transform_0(%arg0: i32) -> (i32, i32, i32) {
    %c0_i32 = arith.constant 0 : i32
    %c0_i32_0 = arith.constant 0 : i32
    %c0_i32_1 = arith.constant 0 : i32
    return %arg0, %c0_i32, %c0_i32_0 : i32, i32, i32
  }
  func.func @transform_1(%arg0: i32) -> (i32, i32, i32) {
    %c0_i32 = arith.constant 0 : i32
    %c0_i32_0 = arith.constant 0 : i32
    %c0_i32_1 = arith.constant 0 : i32
    return %arg0, %c0_i32, %c0_i32_0 : i32, i32, i32
  }
  func.func @transform_2(%arg0: i32) -> (i32, i32) {
    %c0_i32 = arith.constant 0 : i32
    %c0_i32_0 = arith.constant 0 : i32
    %c0_i32_1 = arith.constant 0 : i32
    return %c0_i32, %c0_i32_0 : i32, i32
  }
  func.func @transform_3(%arg0: i32) -> (i32, i32) {
    %c0_i32 = arith.constant 0 : i32
    %c0_i32_0 = arith.constant 0 : i32
    %c0_i32_1 = arith.constant 0 : i32
    return %c0_i32, %c0_i32_0 : i32, i32
  }
  func.func @transform_4(%arg0: i32) -> (i32, i32) {
    %c0_i32 = arith.constant 0 : i32
    %c0_i32_0 = arith.constant 0 : i32
    %c0_i32_1 = arith.constant 0 : i32
    return %c0_i32, %c0_i32_0 : i32, i32
  }
  func.func @transform_5(%arg0: i32) -> (i32, i32) {
    %c0_i32 = arith.constant 0 : i32
    %c0_i32_0 = arith.constant 0 : i32
    %c0_i32_1 = arith.constant 0 : i32
    return %c0_i32, %c0_i32_0 : i32, i32
  }
  func.func @transform_6(%arg0: i32) -> (i32, i32) {
    %c0_i32 = arith.constant 0 : i32
    %c0_i32_0 = arith.constant 0 : i32
    %c0_i32_1 = arith.constant 0 : i32
    return %c0_i32, %c0_i32_0 : i32, i32
  }
  func.func @transform_7(%arg0: i32) -> (i32, i32) {
    %c0_i32 = arith.constant 0 : i32
    %c0_i32_0 = arith.constant 0 : i32
    %c0_i32_1 = arith.constant 0 : i32
    return %c0_i32, %c0_i32_0 : i32, i32
  }
  func.func @transform_8(%arg0: i32) -> (i32, i32, i32) {
    %c0_i32 = arith.constant 0 : i32
    %c0_i32_0 = arith.constant 0 : i32
    %c0_i32_1 = arith.constant 0 : i32
    return %arg0, %c0_i32, %c0_i32_0 : i32, i32, i32
  }
}

</mosaic_0001>

<llo_original>
// kernel: upblock_forward_clip.2
$region0: #{upblock_forward_clip.2}
  #allocation0 [shape = 'u32[]', space=smem, size = 0x4, offset = 0x4, fixed_abs, tag = 'smem constant byte address 0x4 - core index']
  #allocation1 [shape = 'u32[72,128]{1,0:T(1,128)}', space=vmem, size = 0x9000, scoped, tag = 'internal scratch']
  #allocation2 [shape = 'f32[16,324]{1,0:T(8,128)}', space=vmem, size = 0x6000, scoped, tag = 'scratch operand']
  #allocation3 [shape = 'bf16[144,324]{1,0:T(8,128)(2,1)}', space=vmem, size = 0x1b000, scoped, tag = 'scratch operand']
  %s0 = inlined_call_operand.vmem [shape: f32[6,4,324], index: 0, kind: input, shape index: {}]
  %s1 = inlined_call_operand.vmem [shape: f32[6,16,324], index: 1, kind: input, shape index: {}]
  %s2 = inlined_call_operand.vmem [shape: bf16[16,144], index: 2, kind: input, shape index: {}]
  %s3 = inlined_call_operand.vmem [shape: f32[16,1], index: 3, kind: input, shape index: {}]
  %s4 = inlined_call_operand.vmem [shape: f32[16,1], index: 4, kind: input, shape index: {}]
  %s5 = inlined_call_operand.vmem [shape: f32[1,324], index: 5, kind: input, shape index: {}]
  %s6 = inlined_call_operand.vmem [shape: bf16[6,16,324], index: 6, kind: output, shape index: {}]
  %s7 = sld [smem:[#allocation0]]
  $region57: #{upblock_forward_clip.2} parent=0
    _
  %s9 = ssub.s32 1, %s7
  %s10 = scalar_select 0, %s9, %s7
  loop: start=0, step=1, limit=8
  $region2: #{upblock_forward_clip.2} parent=0 // loop_pre_header
    _
  $region3: #{upblock_forward_clip.2} parent=0 // loop_header
    %s12 = sphi 0, %s16
    %p13 = scmp.ge.s32.totalorder %s12, 8
    %s22 = sphi 0, %s24
    %s25 = sphi 0, %s22
    %s26 = sphi 0, %s25
    %s42 = sphi 0, %s26
    %s48 = sphi 0, %s50
    %s51 = sphi 0, %s48
    %s52 = sphi 0, %s51
    %s68 = sphi 0, %s52
    %s72 = sphi 0, %s72
    %s74 = sphi 0, %s72
    %s75 = sphi 0, %s74
    %s89 = sphi 0, %s75
    %s93 = sphi 0, %s93
    %s95 = sphi 0, %s93
    %s96 = sphi 0, %s95
    %s110 = sphi 0, %s96
    %s114 = sphi 0, %s114
    %s116 = sphi 0, %s114
    %s117 = sphi 0, %s116
    %s131 = sphi 0, %s117
    %s135 = sphi 0, %s135
    %s137 = sphi 0, %s135
    %s138 = sphi 0, %s137
    %s152 = sphi 0, %s138
    %s158 = sphi 0, %s160
    %s161 = sphi 0, %s158
    %s162 = sphi 0, %s161
    %s178 = sphi 0, %s162
  $region4: #{upblock_forward_clip.2} parent=0 // loop_header_branch
    %15 = sbr.rel (%p13) target = $region8
  $region5: #{upblock_forward_clip.2} parent=0 // loop_body
    %s17 = ssub.s32 %s12, 1
    %s18 = ssub.s32 %s12, 2
    %s19 = sadd.s32 %s12, 1
    %s20 = ssub.s32 %s12, %s19
    %p21 = scmp.eq.s32.totalorder %s20, 0
    %s23 = sadd.s32 %s22, 1
    %s24 = scalar_select %p21, %s22, %s23
    %p27 = pneg %p21
    %p28 = scmp.eq.s32.totalorder %s12, 5
    %p29 = por %p27, %p28
    %p30 = scmp.ne.s32.totalorder %s22, %s25
    %p31 = scmp.eq.s32.totalorder %s12, 0
    %p32 = por %p30, %p31
    %p33 = scmp.ne.s32.totalorder %s22, %s25
    %p34 = scmp.eq.s32.totalorder %s17, 5
    %p35 = por %p33, %p34
    %p36 = scmp.ne.s32.totalorder %s25, %s26
    %p37 = scmp.eq.s32.totalorder %s17, 0
    %p38 = por %p36, %p37
    %p39 = scmp.ne.s32.totalorder %s25, %s26
    %p40 = scmp.eq.s32.totalorder %s18, 5
    %p41 = por %p39, %p40
    %p43 = scmp.ne.s32.totalorder %s26, %s42
    %p44 = scmp.eq.s32.totalorder %s18, 0
    %p45 = por %p43, %p44
    %s46 = ssub.s32 %s12, %s19
    %p47 = scmp.eq.s32.totalorder %s46, 0
    %s49 = sadd.s32 %s48, 1
    %s50 = scalar_select %p47, %s48, %s49
    %p53 = pneg %p47
    %p54 = scmp.eq.s32.totalorder %s12, 5
    %p55 = por %p53, %p54
    %p56 = scmp.ne.s32.totalorder %s48, %s51
    %p57 = scmp.eq.s32.totalorder %s12, 0
    %p58 = por %p56, %p57
    %p59 = scmp.ne.s32.totalorder %s48, %s51
    %p60 = scmp.eq.s32.totalorder %s17, 5
    %p61 = por %p59, %p60
    %p62 = scmp.ne.s32.totalorder %s51, %s52
    %p63 = scmp.eq.s32.totalorder %s17, 0
    %p64 = por %p62, %p63
    %p65 = scmp.ne.s32.totalorder %s51, %s52
    %p66 = scmp.eq.s32.totalorder %s18, 5
    %p67 = por %p65, %p66
    %p69 = scmp.ne.s32.totalorder %s52, %s68
    %p70 = scmp.eq.s32.totalorder %s18, 0
    %p71 = por %p69, %p70
    %s73 = sadd.s32 %s72, 1
    %p76 = scmp.eq.s32.totalorder %s12, 5
    %p77 = scmp.ne.s32.totalorder %s72, %s74
    %p78 = scmp.eq.s32.totalorder %s12, 0
    %p79 = por %p77, %p78
    %p80 = scmp.ne.s32.totalorder %s72, %s74
    %p81 = scmp.eq.s32.totalorder %s17, 5
    %p82 = por %p80, %p81
    %p83 = scmp.ne.s32.totalorder %s74, %s75
    %p84 = scmp.eq.s32.totalorder %s17, 0
    %p85 = por %p83, %p84
    %p86 = scmp.ne.s32.totalorder %s74, %s75
    %p87 = scmp.eq.s32.totalorder %s18, 5
    %p88 = por %p86, %p87
    %p90 = scmp.ne.s32.totalorder %s75, %s89
    %p91 = scmp.eq.s32.totalorder %s18, 0
    %p92 = por %p90, %p91
    %s94 = sadd.s32 %s93, 1
    %p97 = scmp.eq.s32.totalorder %s12, 5
    %p98 = scmp.ne.s32.totalorder %s93, %s95
    %p99 = scmp.eq.s32.totalorder %s12, 0
    %p100 = por %p98, %p99
    %p101 = scmp.ne.s32.totalorder %s93, %s95
    %p102 = scmp.eq.s32.totalorder %s17, 5
    %p103 = por %p101, %p102
    %p104 = scmp.ne.s32.totalorder %s95, %s96
    %p105 = scmp.eq.s32.totalorder %s17, 0
    %p106 = por %p104, %p105
    %p107 = scmp.ne.s32.totalorder %s95, %s96
    %p108 = scmp.eq.s32.totalorder %s18, 5
    %p109 = por %p107, %p108
    %p111 = scmp.ne.s32.totalorder %s96, %s110
    %p112 = scmp.eq.s32.totalorder %s18, 0
    %p113 = por %p111, %p112
    %s115 = sadd.s32 %s114, 1
    %p118 = scmp.eq.s32.totalorder %s12, 5
    %p119 = scmp.ne.s32.totalorder %s114, %s116
    %p120 = scmp.eq.s32.totalorder %s12, 0
    %p121 = por %p119, %p120
    %p122 = scmp.ne.s32.totalorder %s114, %s116
    %p123 = scmp.eq.s32.totalorder %s17, 5
    %p124 = por %p122, %p123
    %p125 = scmp.ne.s32.totalorder %s116, %s117
    %p126 = scmp.eq.s32.totalorder %s17, 0
    %p127 = por %p125, %p126
    %p128 = scmp.ne.s32.totalorder %s116, %s117
    %p129 = scmp.eq.s32.totalorder %s18, 5
    %p130 = por %p128, %p129
    %p132 = scmp.ne.s32.totalorder %s117, %s131
    %p133 = scmp.eq.s32.totalorder %s18, 0
    %p134 = por %p132, %p133
    %s136 = sadd.s32 %s135, 1
    %p139 = scmp.eq.s32.totalorder %s12, 5
    %p140 = scmp.ne.s32.totalorder %s135, %s137
    %p141 = scmp.eq.s32.totalorder %s12, 0
    %p142 = por %p140, %p141
    %p143 = scmp.ne.s32.totalorder %s135, %s137
    %p144 = scmp.eq.s32.totalorder %s17, 5
    %p145 = por %p143, %p144
    %p146 = scmp.ne.s32.totalorder %s137, %s138
    %p147 = scmp.eq.s32.totalorder %s17, 0
    %p148 = por %p146, %p147
    %p149 = scmp.ne.s32.totalorder %s137, %s138
    %p150 = scmp.eq.s32.totalorder %s18, 5
    %p151 = por %p149, %p150
    %p153 = scmp.ne.s32.totalorder %s138, %s152
    %p154 = scmp.eq.s32.totalorder %s18, 0
    %p155 = por %p153, %p154
    %s156 = ssub.s32 %s12, %s19
    %p157 = scmp.eq.s32.totalorder %s156, 0
    %s159 = sadd.s32 %s158, 1
    %s160 = scalar_select %p157, %s158, %s159
    %p163 = pneg %p157
    %p164 = scmp.eq.s32.totalorder %s12, 5
    %p165 = por %p163, %p164
    %p166 = scmp.ne.s32.totalorder %s158, %s161
    %p167 = scmp.eq.s32.totalorder %s12, 0
    %p168 = por %p166, %p167
    %p169 = scmp.ne.s32.totalorder %s158, %s161
    %p170 = scmp.eq.s32.totalorder %s17, 5
    %p171 = por %p169, %p170
    %p172 = scmp.ne.s32.totalorder %s161, %s162
    %p173 = scmp.eq.s32.totalorder %s17, 0
    %p174 = por %p172, %p173
    %p175 = scmp.ne.s32.totalorder %s161, %s162
    %p176 = scmp.eq.s32.totalorder %s18, 5
    %p177 = por %p175, %p176
    %p179 = scmp.ne.s32.totalorder %s162, %s178
    %p180 = scmp.eq.s32.totalorder %s18, 0
    %p181 = por %p179, %p180
    %p182 = scmp.le.s32.totalorder 1, %s12
    %p183 = scmp.lt.s32.totalorder %s12, 7
    %p184 = pnand %p182, %p183
    %p185 = pneg %p184
    // Predicated region
    $region9: #{upblock_forward_clip.2} parent=5 // pred_check
      _
    $region10: #{upblock_forward_clip.2} parent=5 // pred_check_branch
      %187 = sbr.rel (%p184) target = $region12
    $region11: #{upblock_forward_clip.2} parent=5 // pred_region
      %s188 = ssub.s32 %s12, 1
      // Predicated region
      $region13: #{upblock_forward_clip.2} parent=11 // pred_check
        %p189 = pneg %p85
      $region14: #{upblock_forward_clip.2} parent=11 // pred_check_branch
        %191 = sbr.rel (%p189) target = $region16
      $region15: #{upblock_forward_clip.2} parent=11 // pred_region
        _
      $region16: #{upblock_forward_clip.2} parent=11 // pred_fallthru
        _
      // Predicated region
      $region17: #{upblock_forward_clip.2} parent=11 // pred_check
        %p192 = pneg %p106
      $region18: #{upblock_forward_clip.2} parent=11 // pred_check_branch
        %194 = sbr.rel (%p192) target = $region20
      $region19: #{upblock_forward_clip.2} parent=11 // pred_region
        _
      $region20: #{upblock_forward_clip.2} parent=11 // pred_fallthru
        _
      // Predicated region
      $region21: #{upblock_forward_clip.2} parent=11 // pred_check
        %p195 = pneg %p127
      $region22: #{upblock_forward_clip.2} parent=11 // pred_check_branch
        %197 = sbr.rel (%p195) target = $region24
      $region23: #{upblock_forward_clip.2} parent=11 // pred_region
        _
      $region24: #{upblock_forward_clip.2} parent=11 // pred_fallthru
        _
      // Predicated region
      $region25: #{upblock_forward_clip.2} parent=11 // pred_check
        %p198 = pneg %p148
      $region26: #{upblock_forward_clip.2} parent=11 // pred_check_branch
        %200 = sbr.rel (%p198) target = $region28
      $region27: #{upblock_forward_clip.2} parent=11 // pred_region
        _
      $region28: #{upblock_forward_clip.2} parent=11 // pred_fallthru
        _
    $region12: #{upblock_forward_clip.2} parent=5 // pred_fallthru
      _
    %p201 = scmp.lt.s32.totalorder %s12, 6
    // Predicated region
    $region29: #{upblock_forward_clip.2} parent=5 // pred_check
      %p202 = pneg %p201
    $region30: #{upblock_forward_clip.2} parent=5 // pred_check_branch
      %204 = sbr.rel (%p202) target = $region32
    $region31: #{upblock_forward_clip.2} parent=5 // pred_region
      // Predicated region
      $region33: #{upblock_forward_clip.2} parent=31 // pred_check
        %p205 = pneg %p32
      $region34: #{upblock_forward_clip.2} parent=31 // pred_check_branch
        %207 = sbr.rel (%p205) target = $region36
      $region35: #{upblock_forward_clip.2} parent=31 // pred_region
        %p208 = scmp.lt.s32.totalorder %s12, 5
        %s209 = scalar_select %p208, %s12, 5
        %s210 = smul.addr %s209, 3
        %s211 = smul.addr %s210, 4
        %s212 = scalar_lea.vmem %s0, %s211
      $region36: #{upblock_forward_clip.2} parent=31 // pred_fallthru
        _
      // Predicated region
      $region37: #{upblock_forward_clip.2} parent=31 // pred_check
        %p213 = pneg %p58
      $region38: #{upblock_forward_clip.2} parent=31 // pred_check_branch
        %215 = sbr.rel (%p213) target = $region40
      $region39: #{upblock_forward_clip.2} parent=31 // pred_region
        %p216 = scmp.lt.s32.totalorder %s12, 5
        %s217 = scalar_select %p216, %s12, 5
        %s218 = smul.addr %s217, 6
        %s219 = smul.addr %s218, 8
        %s220 = scalar_lea.vmem %s1, %s219
      $region40: #{upblock_forward_clip.2} parent=31 // pred_fallthru
        _
    $region32: #{upblock_forward_clip.2} parent=5 // pred_fallthru
      _
    %p221 = scmp.le.s32.totalorder 1, %s12
    %p222 = scmp.lt.s32.totalorder %s12, 7
    %p223 = pnand %p221, %p222
    %p224 = pneg %p223
    // Predicated region
    $region41: #{upblock_forward_clip.2} parent=5 // pred_check
      _
    $region42: #{upblock_forward_clip.2} parent=5 // pred_check_branch
      %226 = sbr.rel (%p223) target = $region44
    $region43: #{upblock_forward_clip.2} parent=5 // pred_region
      %s227 = ssub.s32 %s12, 1
      %p228 = scmp.lt.s32.totalorder %s17, 5
      %s229 = scalar_select %p228, %s17, 5
      %s230 = smul.addr %s229, 3
      %s231 = smul.addr %s230, 4
      %s232 = scalar_lea.vmem %s0, %s231
      %p233 = pneg %p38
      %p234 = pneg %p35
      %p235 = scmp.lt.s32.totalorder %s17, 5
      %s236 = scalar_select %p235, %s17, 5
      %s237 = smul.addr %s236, 6
      %s238 = smul.addr %s237, 8
      %s239 = scalar_lea.vmem %s1, %s238
      %p240 = pneg %p64
      %p241 = pneg %p61
      %p242 = pneg %p85
      %p243 = pneg %p82
      %p244 = pneg %p106
      %p245 = pneg %p103
      %p246 = pneg %p127
      %p247 = pneg %p124
      %p248 = pneg %p148
      %p249 = pneg %p145
      %p250 = pneg %p174
      %p251 = pneg %p171
      %p252 = scmp.lt.s32.totalorder %s17, 5
      %s253 = scalar_select %p252, %s17, 5
      %s254 = smul.addr %s253, 6
      %s255 = smul.addr %s254, 4
      %s256 = scalar_lea.vmem %s6, %s255
      %p257 = scmp.lt.s32.totalorder %s17, 5
      %s258 = scalar_select %p257, %s17, 5
      %s259 = smul.addr %s258, 3
      %s260 = smul.addr %s259, 4
      %s261 = scalar_lea.vmem %s0, %s260
      %p262 = scmp.lt.s32.totalorder %s17, 5
      %s263 = scalar_select %p262, %s17, 5
      %s264 = smul.addr %s263, 6
      %s265 = smul.addr %s264, 8
      %s266 = scalar_lea.vmem %s1, %s265
      %p267 = scmp.lt.s32.totalorder %s17, 5
      %s268 = scalar_select %p267, %s17, 5
      %s269 = smul.addr %s268, 6
      %s270 = smul.addr %s269, 4
      %s271 = scalar_lea.vmem %s6, %s270
      %v273 = vld [vmem:[%s266] sm:$0xff]
      %v274 = vld [vmem:[%s266 + $0x8] sm:$0xff]
      %v275 = vld [vmem:[%s266 + $0x10] sm:$0xff]
      %v276 = vld [vmem:[%s266 + $0x18] sm:$0xff]
      %v277 = vld [vmem:[%s266 + $0x20] sm:$0xff]
      %v278 = vld [vmem:[%s266 + $0x28] sm:$0xff]
      %279 = vst [vmem:[#allocation2] sm:$0xff] %v273
      %280 = vst [vmem:[#allocation2 + $0x8] sm:$0xff] %v274
      %vm281 = vcmask 556032
      %282 = vst.msk [vmem:[#allocation2 + $0x10] sm:$0xff] %vm281, %v275
      %283 = vst [vmem:[#allocation2 + $0x18] sm:$0xff] %v276
      %284 = vst [vmem:[#allocation2 + $0x20] sm:$0xff] %v277
      %285 = vst.msk [vmem:[#allocation2 + $0x28] sm:$0xff] %vm281, %v278
      %v286 = vld [vmem:[%s261] sm:$0xff]
      %v287 = vld [vmem:[%s261 + $0x8] sm:$0xf]
      %290 = vst [vmem:[#allocation1] ss:$2 sm:$0xff] %v286
      %s291 = scalar_lea.vmem [#allocation1], 16
      %292 = vst [vmem:[%s291] ss:$2 sm:$0xff] %v287
      %v293 = vld.sshfl [vmem:[#allocation1] sm:$0xff pattern:$0x75316420]
      %v294 = vld.sshfl [vmem:[#allocation1 + $0x8] sm:$0xff pattern:$0x75316420]
      %v295 = vld.sshfl [vmem:[#allocation1 + $0x10] sm:$0xff pattern:$0x75316420]
      %299 = vst [vmem:[#allocation2] sm:$0xf] %v293
      %300 = vst [vmem:[#allocation2 + $0x8] sm:$0xf] %v294
      %vm301 = vcmask 551936
      %302 = vst.msk [vmem:[#allocation2 + $0x10] sm:$0xf] %vm301, %v295
      %v303 = vld [vmem:[%s2] sm:$0xff]
      %v304 = vld [vmem:[%s2 + $0x8] sm:$0xff]
      %v305 = vld [vmem:[%s3] sm:$0xff]
      %v306 = vld [vmem:[%s3 + $0x8] sm:$0xff]
      %v307 = vld [vmem:[%s4] sm:$0xff]
      %v308 = vld [vmem:[%s4 + $0x8] sm:$0xff]
      %v309 = vld [vmem:[%s5] sm:$0x7]
      %v310 = vld [vmem:[#allocation2] sm:$0xff]
      %v311 = vld [vmem:[#allocation2 + $0x8] sm:$0xff]
      %v312 = vld [vmem:[#allocation2 + $0x10] sm:$0xff]
      %v313 = vld [vmem:[#allocation2 + $0x18] sm:$0xff]
      %v314 = vld [vmem:[#allocation2 + $0x20] sm:$0xff]
      %v315 = vld [vmem:[#allocation2 + $0x28] sm:$0xff]
      %v316 = vpack.c.bf16 %v311, %v310
      %v317 = vpack.c.bf16 %v312, %v312
      %v318 = vpack.c.bf16 %v314, %v313
      %v319 = vpack.c.bf16 %v315, %v315
      %v322 = vunpack.c.l.b16 %v317
      %v323 = vunpack.c.l.b16 %v319
      %v324 = vpack.c.b16 %v323, %v322
      %325 = vrot.lane.b32.xlu0 %v324, 79
      %v326 = vpop.permute.xlu0 %325
      %v329 = vunpack.c.l.b16 %v316
      %v330 = vunpack.c.h.b16 %v316
      %v331 = vunpack.c.l.b16 %v318
      %v332 = vunpack.c.h.b16 %v318
      %v333 = vpack.c.b16 %v331, %v329
      %v334 = vpack.c.b16 %v332, %v330
      %335 = vrot.lane.b32.xlu0 %v333, 19
      %v336 = vpop.permute.xlu0 %335
      %337 = vrot.lane.b32.xlu0 %v334, 19
      %v338 = vpop.permute.xlu0 %337
      %339 = vrot.lane.b32.xlu0 %v324, 19
      %v340 = vpop.permute.xlu0 %339
      %vm341 = vcmask 154624
      %v342 = vsel %vm341, %v336, %v338
      %v343 = vsel %vm341, %v338, %v340
      %vm344 = vcmask 154624
      %v347 = vsel %vm344, %v326, %v336
      %v349 = vunpack.c.l.b16 %v347
      %v350 = vunpack.c.l.b16 %v342
      %v351 = vunpack.c.l.b16 %v343
      %v352 = vunpack.c.h.b16 %v347
      %v353 = vunpack.c.h.b16 %v342
      %v354 = vunpack.c.h.b16 %v343
      %v355 = vpack.c.b16 %v350, %v349
      %v356 = vpack.c.b16 %v351, %v351
      %v357 = vpack.c.b16 %v353, %v352
      %v358 = vpack.c.b16 %v354, %v354
      %363 = vst [vmem:[#allocation3] sm:$0xff] %v355
      %364 = vst.msk [vmem:[#allocation3 + $0x8] sm:$0xf] %vm301, %v356
      %365 = vst [vmem:[#allocation3 + $0xc] sm:$0xff] %v357
      %366 = vst.msk [vmem:[#allocation3 + $0x14] sm:$0xf] %vm301, %v358
      %367 = vrot.lane.b32.xlu0 %v324, 78
      %v368 = vpop.permute.xlu0 %367
      %369 = vrot.lane.b32.xlu0 %v333, 18
      %v370 = vpop.permute.xlu0 %369
      %371 = vrot.lane.b32.xlu0 %v334, 18
      %v372 = vpop.permute.xlu0 %371
      %373 = vrot.lane.b32.xlu0 %v324, 18
      %v374 = vpop.permute.xlu0 %373
      %vm375 = vcmask 146432
      %v376 = vsel %vm375, %v370, %v372
      %v377 = vsel %vm375, %v372, %v374
      %vm378 = vcmask 146432
      %v381 = vsel %vm378, %v368, %v370
      %v383 = vunpack.c.l.b16 %v381
      %v384 = vunpack.c.l.b16 %v376
      %v385 = vunpack.c.l.b16 %v377
      %v386 = vunpack.c.h.b16 %v381
      %v387 = vunpack.c.h.b16 %v376
      %v388 = vunpack.c.h.b16 %v377
      %v389 = vpack.c.b16 %v384, %v383
      %v390 = vpack.c.b16 %v385, %v385
      %v391 = vpack.c.b16 %v387, %v386
      %v392 = vpack.c.b16 %v388, %v388
      %397 = vst [vmem:[#allocation3 + $0x18] sm:$0xff] %v389
      %398 = vst.msk [vmem:[#allocation3 + $0x20] sm:$0xf] %vm301, %v390
      %399 = vst [vmem:[#allocation3 + $0x24] sm:$0xff] %v391
      %400 = vst.msk [vmem:[#allocation3 + $0x2c] sm:$0xf] %vm301, %v392
      %401 = vrot.lane.b32.xlu0 %v324, 77
      %v402 = vpop.permute.xlu0 %401
      %403 = vrot.lane.b32.xlu0 %v333, 17
      %v404 = vpop.permute.xlu0 %403
      %405 = vrot.lane.b32.xlu0 %v334, 17
      %v406 = vpop.permute.xlu0 %405
      %407 = vrot.lane.b32.xlu0 %v324, 17
      %v408 = vpop.permute.xlu0 %407
      %vm409 = vcmask 138240
      %v410 = vsel %vm409, %v404, %v406
      %v411 = vsel %vm409, %v406, %v408
      %vm412 = vcmask 138240
      %v415 = vsel %vm412, %v402, %v404
      %v417 = vunpack.c.l.b16 %v415
      %v418 = vunpack.c.l.b16 %v410
      %v419 = vunpack.c.l.b16 %v411
      %v420 = vunpack.c.h.b16 %v415
      %v421 = vunpack.c.h.b16 %v410
      %v422 = vunpack.c.h.b16 %v411
      %v423 = vpack.c.b16 %v418, %v417
      %v424 = vpack.c.b16 %v419, %v419
      %v425 = vpack.c.b16 %v421, %v420
      %v426 = vpack.c.b16 %v422, %v422
      %431 = vst [vmem:[#allocation3 + $0x30] sm:$0xff] %v423
      %432 = vst.msk [vmem:[#allocation3 + $0x38] sm:$0xf] %vm301, %v424
      %433 = vst [vmem:[#allocation3 + $0x3c] sm:$0xff] %v425
      %434 = vst.msk [vmem:[#allocation3 + $0x44] sm:$0xf] %vm301, %v426
      %435 = vrot.lane.b32.xlu0 %v324, 61
      %v436 = vpop.permute.xlu0 %435
      %437 = vrot.lane.b32.xlu0 %v333, 1
      %v438 = vpop.permute.xlu0 %437
      %439 = vrot.lane.b32.xlu0 %v334, 1
      %v440 = vpop.permute.xlu0 %439
      %441 = vrot.lane.b32.xlu0 %v324, 1
      %v442 = vpop.permute.xlu0 %441
      %vm443 = vcmask 7168
      %v444 = vsel %vm443, %v438, %v440
      %v445 = vsel %vm443, %v440, %v442
      %vm446 = vcmask 7168
      %v449 = vsel %vm446, %v436, %v438
      %v451 = vunpack.c.l.b16 %v449
      %v452 = vunpack.c.l.b16 %v444
      %v453 = vunpack.c.l.b16 %v445
      %v454 = vunpack.c.h.b16 %v449
      %v455 = vunpack.c.h.b16 %v444
      %v456 = vunpack.c.h.b16 %v445
      %v457 = vpack.c.b16 %v452, %v451
      %v458 = vpack.c.b16 %v453, %v453
      %v459 = vpack.c.b16 %v455, %v454
      %v460 = vpack.c.b16 %v456, %v456
      %465 = vst [vmem:[#allocation3 + $0x48] sm:$0xff] %v457
      %466 = vst.msk [vmem:[#allocation3 + $0x50] sm:$0xf] %vm301, %v458
      %467 = vst [vmem:[#allocation3 + $0x54] sm:$0xff] %v459
      %468 = vst.msk [vmem:[#allocation3 + $0x5c] sm:$0xf] %vm301, %v460
      %469 = vst [vmem:[#allocation3 + $0x60] sm:$0xff] %v316
      %470 = vst.msk [vmem:[#allocation3 + $0x68] sm:$0xf] %vm301, %v317
      %471 = vst [vmem:[#allocation3 + $0x6c] sm:$0xff] %v318
      %472 = vst.msk [vmem:[#allocation3 + $0x74] sm:$0xf] %vm301, %v319
      %473 = vrot.lane.b32.xlu0 %v333, 127
      %v474 = vpop.permute.xlu0 %473
      %475 = vrot.lane.b32.xlu0 %v334, 127
      %v476 = vpop.permute.xlu0 %475
      %477 = vrot.lane.b32.xlu0 %v324, 127
      %v478 = vpop.permute.xlu0 %477
      %vm479 = vcmask 1039360
      %v480 = vsel %vm479, %v474, %v476
      %v481 = vsel %vm479, %v476, %v478
      %482 = vrot.lane.b32.xlu0 %v333, 67
      %v483 = vpop.permute.xlu0 %482
      %vm484 = vcmask 547840
      %v487 = vsel %vm484, %v478, %v483
      %v489 = vunpack.c.l.b16 %v480
      %v490 = vunpack.c.l.b16 %v481
      %v491 = vunpack.c.l.b16 %v487
      %v492 = vunpack.c.h.b16 %v480
      %v493 = vunpack.c.h.b16 %v481
      %v494 = vunpack.c.h.b16 %v487
      %v495 = vpack.c.b16 %v490, %v489
      %v496 = vpack.c.b16 %v491, %v491
      %v497 = vpack.c.b16 %v493, %v492
      %v498 = vpack.c.b16 %v494, %v494
      %503 = vst [vmem:[#allocation3 + $0x78] sm:$0xff] %v495
      %504 = vst.msk [vmem:[#allocation3 + $0x80] sm:$0xf] %vm301, %v496
      %505 = vst [vmem:[#allocation3 + $0x84] sm:$0xff] %v497
      %506 = vst.msk [vmem:[#allocation3 + $0x8c] sm:$0xf] %vm301, %v498
      %507 = vrot.lane.b32.xlu0 %v333, 111
      %v508 = vpop.permute.xlu0 %507
      %509 = vrot.lane.b32.xlu0 %v334, 111
      %v510 = vpop.permute.xlu0 %509
      %511 = vrot.lane.b32.xlu0 %v324, 111
      %v512 = vpop.permute.xlu0 %511
      %vm513 = vcmask 908288
      %v514 = vsel %vm513, %v508, %v510
      %v515 = vsel %vm513, %v510, %v512
      %516 = vrot.lane.b32.xlu0 %v333, 51
      %v517 = vpop.permute.xlu0 %516
      %vm518 = vcmask 416768
      %v521 = vsel %vm518, %v512, %v517
      %v523 = vunpack.c.l.b16 %v514
      %v524 = vunpack.c.l.b16 %v515
      %v525 = vunpack.c.l.b16 %v521
      %v526 = vunpack.c.h.b16 %v514
      %v527 = vunpack.c.h.b16 %v515
      %v528 = vunpack.c.h.b16 %v521
      %v529 = vpack.c.b16 %v524, %v523
      %v530 = vpack.c.b16 %v525, %v525
      %v531 = vpack.c.b16 %v527, %v526
      %v532 = vpack.c.b16 %v528, %v528
      %537 = vst [vmem:[#allocation3 + $0x90] sm:$0xff] %v529
      %538 = vst.msk [vmem:[#allocation3 + $0x98] sm:$0xf] %vm301, %v530
      %539 = vst [vmem:[#allocation3 + $0x9c] sm:$0xff] %v531
      %540 = vst.msk [vmem:[#allocation3 + $0xa4] sm:$0xf] %vm301, %v532
      %541 = vrot.lane.b32.xlu0 %v333, 110
      %v542 = vpop.permute.xlu0 %541
      %543 = vrot.lane.b32.xlu0 %v334, 110
      %v544 = vpop.permute.xlu0 %543
      %545 = vrot.lane.b32.xlu0 %v324, 110
      %v546 = vpop.permute.xlu0 %545
      %vm547 = vcmask 900096
      %v548 = vsel %vm547, %v542, %v544
      %v549 = vsel %vm547, %v544, %v546
      %550 = vrot.lane.b32.xlu0 %v333, 50
      %v551 = vpop.permute.xlu0 %550
      %vm552 = vcmask 408576
      %v555 = vsel %vm552, %v546, %v551
      %v557 = vunpack.c.l.b16 %v548
      %v558 = vunpack.c.l.b16 %v549
      %v559 = vunpack.c.l.b16 %v555
      %v560 = vunpack.c.h.b16 %v548
      %v561 = vunpack.c.h.b16 %v549
      %v562 = vunpack.c.h.b16 %v555
      %v563 = vpack.c.b16 %v558, %v557
      %v564 = vpack.c.b16 %v559, %v559
      %v565 = vpack.c.b16 %v561, %v560
      %v566 = vpack.c.b16 %v562, %v562
      %571 = vst [vmem:[#allocation3 + $0xa8] sm:$0xff] %v563
      %572 = vst.msk [vmem:[#allocation3 + $0xb0] sm:$0xf] %vm301, %v564
      %573 = vst [vmem:[#allocation3 + $0xb4] sm:$0xff] %v565
      %574 = vst.msk [vmem:[#allocation3 + $0xbc] sm:$0xf] %vm301, %v566
      %575 = vrot.lane.b32.xlu0 %v333, 109
      %v576 = vpop.permute.xlu0 %575
      %577 = vrot.lane.b32.xlu0 %v334, 109
      %v578 = vpop.permute.xlu0 %577
      %579 = vrot.lane.b32.xlu0 %v324, 109
      %v580 = vpop.permute.xlu0 %579
      %vm581 = vcmask 891904
      %v582 = vsel %vm581, %v576, %v578
      %v583 = vsel %vm581, %v578, %v580
      %584 = vrot.lane.b32.xlu0 %v333, 49
      %v585 = vpop.permute.xlu0 %584
      %vm586 = vcmask 400384
      %v589 = vsel %vm586, %v580, %v585
      %v591 = vunpack.c.l.b16 %v582
      %v592 = vunpack.c.l.b16 %v583
      %v593 = vunpack.c.l.b16 %v589
      %v594 = vunpack.c.h.b16 %v582
      %v595 = vunpack.c.h.b16 %v583
      %v596 = vunpack.c.h.b16 %v589
      %v597 = vpack.c.b16 %v592, %v591
      %v598 = vpack.c.b16 %v593, %v593
      %v599 = vpack.c.b16 %v595, %v594
      %v600 = vpack.c.b16 %v596, %v596
      %605 = vst [vmem:[#allocation3 + $0xc0] sm:$0xff] %v597
      %606 = vst.msk [vmem:[#allocation3 + $0xc8] sm:$0xf] %vm301, %v598
      %607 = vst [vmem:[#allocation3 + $0xcc] sm:$0xff] %v599
      %608 = vst.msk [vmem:[#allocation3 + $0xd4] sm:$0xf] %vm301, %v600
      %v609 = vld [vmem:[#allocation3] sm:$0xff]
      %v610 = vld [vmem:[#allocation3 + $0x8] sm:$0xf]
      %v611 = vld [vmem:[#allocation3 + $0xc] sm:$0xff]
      %v612 = vld [vmem:[#allocation3 + $0x14] sm:$0xf]
      %v613 = vld [vmem:[#allocation3 + $0x18] sm:$0xff]
      %v614 = vld [vmem:[#allocation3 + $0x20] sm:$0xf]
      %v615 = vld [vmem:[#allocation3 + $0x24] sm:$0xff]
      %v616 = vld [vmem:[#allocation3 + $0x2c] sm:$0xf]
      %v617 = vld [vmem:[#allocation3 + $0x30] sm:$0xff]
      %v618 = vld [vmem:[#allocation3 + $0x38] sm:$0xf]
      %v619 = vld [vmem:[#allocation3 + $0x3c] sm:$0xff]
      %v620 = vld [vmem:[#allocation3 + $0x44] sm:$0xf]
      %v621 = vld [vmem:[#allocation3 + $0x48] sm:$0xff]
      %v622 = vld [vmem:[#allocation3 + $0x50] sm:$0xf]
      %v623 = vld [vmem:[#allocation3 + $0x54] sm:$0xff]
      %v624 = vld [vmem:[#allocation3 + $0x5c] sm:$0xf]
      %v625 = vld [vmem:[#allocation3 + $0x60] sm:$0xff]
      %v626 = vld [vmem:[#allocation3 + $0x68] sm:$0xf]
      %v627 = vld [vmem:[#allocation3 + $0x6c] sm:$0xff]
      %v628 = vld [vmem:[#allocation3 + $0x74] sm:$0xf]
      %v629 = vld [vmem:[#allocation3 + $0x78] sm:$0xff]
      %v630 = vld [vmem:[#allocation3 + $0x80] sm:$0xf]
      %v631 = vld [vmem:[#allocation3 + $0x84] sm:$0xff]
      %v632 = vld [vmem:[#allocation3 + $0x8c] sm:$0xf]
      %v633 = vld [vmem:[#allocation3 + $0x90] sm:$0xff]
      %v634 = vld [vmem:[#allocation3 + $0x98] sm:$0xf]
      %v635 = vld [vmem:[#allocation3 + $0x9c] sm:$0xff]
      %v636 = vld [vmem:[#allocation3 + $0xa4] sm:$0xf]
      %v637 = vld [vmem:[#allocation3 + $0xa8] sm:$0xff]
      %v638 = vld [vmem:[#allocation3 + $0xb0] sm:$0xf]
      %v639 = vld [vmem:[#allocation3 + $0xb4] sm:$0xff]
      %v640 = vld [vmem:[#allocation3 + $0xbc] sm:$0xf]
      %v641 = vld [vmem:[#allocation3 + $0xc0] sm:$0xff]
      %v642 = vld [vmem:[#allocation3 + $0xc8] sm:$0xf]
      %v643 = vld [vmem:[#allocation3 + $0xcc] sm:$0xff]
      %v644 = vld [vmem:[#allocation3 + $0xd4] sm:$0xf]
      %v647 = vunpack.c.l.b16 %v303
      %v648 = vunpack.c.h.b16 %v303
      %v649 = vunpack.c.l.b16 %v304
      %v650 = vunpack.c.h.b16 %v304
      %v651 = vpack.c.b16 %v649, %v647
      %v652 = vpack.c.b16 %v650, %v648
      %v690 = vunpack.c.l.b16 %v609
      %v691 = vunpack.c.h.b16 %v609
      %v692 = vunpack.c.l.b16 %v610
      %v693 = vunpack.c.l.b16 %v611
      %v694 = vunpack.c.h.b16 %v611
      %v695 = vunpack.c.l.b16 %v612
      %v696 = vunpack.c.l.b16 %v613
      %v697 = vunpack.c.h.b16 %v613
      %v698 = vunpack.c.l.b16 %v614
      %v699 = vunpack.c.l.b16 %v615
      %v700 = vunpack.c.h.b16 %v615
      %v701 = vunpack.c.l.b16 %v616
      %v702 = vunpack.c.l.b16 %v617
      %v703 = vunpack.c.h.b16 %v617
      %v704 = vunpack.c.l.b16 %v618
      %v705 = vunpack.c.l.b16 %v619
      %v706 = vunpack.c.h.b16 %v619
      %v707 = vunpack.c.l.b16 %v620
      %v708 = vunpack.c.l.b16 %v621
      %v709 = vunpack.c.h.b16 %v621
      %v710 = vunpack.c.l.b16 %v622
      %v711 = vunpack.c.l.b16 %v623
      %v712 = vunpack.c.h.b16 %v623
      %v713 = vunpack.c.l.b16 %v624
      %v714 = vunpack.c.l.b16 %v625
      %v715 = vunpack.c.h.b16 %v625
      %v716 = vunpack.c.l.b16 %v626
      %v717 = vunpack.c.l.b16 %v627
      %v718 = vunpack.c.h.b16 %v627
      %v719 = vunpack.c.l.b16 %v628
      %v720 = vunpack.c.l.b16 %v629
      %v721 = vunpack.c.h.b16 %v629
      %v722 = vunpack.c.l.b16 %v630
      %v723 = vunpack.c.l.b16 %v631
      %v724 = vunpack.c.h.b16 %v631
      %v725 = vunpack.c.l.b16 %v632
      %v726 = vunpack.c.l.b16 %v633
      %v727 = vunpack.c.h.b16 %v633
      %v728 = vunpack.c.l.b16 %v634
      %v729 = vunpack.c.l.b16 %v635
      %v730 = vunpack.c.h.b16 %v635
      %v731 = vunpack.c.l.b16 %v636
      %v732 = vunpack.c.l.b16 %v637
      %v733 = vunpack.c.h.b16 %v637
      %v734 = vunpack.c.l.b16 %v638
      %v735 = vunpack.c.l.b16 %v639
      %v736 = vunpack.c.h.b16 %v639
      %v737 = vunpack.c.l.b16 %v640
      %v738 = vunpack.c.l.b16 %v641
      %v739 = vunpack.c.h.b16 %v641
      %v740 = vunpack.c.l.b16 %v642
      %v741 = vunpack.c.l.b16 %v643
      %v742 = vunpack.c.h.b16 %v643
      %v743 = vunpack.c.l.b16 %v644
      %v744 = vpack.c.b16 %v693, %v690
      %v745 = vpack.c.b16 %v694, %v691
      %v746 = vpack.c.b16 %v695, %v692
      %v747 = vpack.c.b16 %v699, %v696
      %v748 = vpack.c.b16 %v700, %v697
      %v749 = vpack.c.b16 %v701, %v698
      %v750 = vpack.c.b16 %v705, %v702
      %v751 = vpack.c.b16 %v706, %v703
      %v752 = vpack.c.b16 %v707, %v704
      %v753 = vpack.c.b16 %v711, %v708
      %v754 = vpack.c.b16 %v712, %v709
      %v755 = vpack.c.b16 %v713, %v710
      %v756 = vpack.c.b16 %v717, %v714
      %v757 = vpack.c.b16 %v718, %v715
      %v758 = vpack.c.b16 %v719, %v716
      %v759 = vpack.c.b16 %v723, %v720
      %v760 = vpack.c.b16 %v724, %v721
      %v761 = vpack.c.b16 %v725, %v722
      %v762 = vpack.c.b16 %v729, %v726
      %v763 = vpack.c.b16 %v730, %v727
      %v764 = vpack.c.b16 %v731, %v728
      %v765 = vpack.c.b16 %v735, %v732
      %v766 = vpack.c.b16 %v736, %v733
      %v767 = vpack.c.b16 %v737, %v734
      %v768 = vpack.c.b16 %v741, %v738
      %v769 = vpack.c.b16 %v742, %v739
      %v770 = vpack.c.b16 %v743, %v740
      %vm798 = vcmask 130048
      %v800 = vsel %vm798, %v652, 0
      %802 = vmatpush.bf16.msra.mxu0 %v765
      %803 = vmatpush.bf16.msra.mxu0 %v762
      %804 = vmatpush.bf16.msra.mxu0 %v759
      %805 = vmatpush.bf16.msra.mxu0 %v756
      %806 = vmatpush.bf16.msra.mxu0 %v753
      %807 = vmatpush.bf16.msra.mxu0 %v750
      %808 = vmatpush.bf16.msra.mxu0 %v747
      %809 = vmatpush.bf16.msra.mxu0 %v744
      %810 = vmatmul.bf16.gmra.mxu0 %v651
      %v811 = vpop.f32.mrf.mxu0
      %v812 = vadd.f32 0.0, %v811
      %v813 = vpop.f32.mrf.mxu0
      %v814 = vadd.f32 0.0, %v813
      %815 = vdwg.mxu0
      %816 = vmatpush.bf16.msra.mxu0 0
      %817 = vmatpush.bf16.msra.mxu0 0
      %818 = vmatpush.bf16.msra.mxu0 0
      %819 = vmatpush.bf16.msra.mxu0 0
      %820 = vmatpush.bf16.msra.mxu0 0
      %821 = vmatpush.bf16.msra.mxu0 0
      %822 = vmatpush.bf16.msra.mxu0 0
      %823 = vmatpush.bf16.msra.mxu0 %v768
      %824 = vmatmul.bf16.gmra.mxu0 %v800
      %v825 = vpop.f32.mrf.mxu0
      %v826 = vadd.f32 %v812, %v825
      %v827 = vpop.f32.mrf.mxu0
      %v828 = vadd.f32 %v814, %v827
      %829 = vdwg.mxu0
      %830 = vmatpush.bf16.msra.mxu0 %v766
      %831 = vmatpush.bf16.msra.mxu0 %v763
      %832 = vmatpush.bf16.msra.mxu0 %v760
      %833 = vmatpush.bf16.msra.mxu0 %v757
      %834 = vmatpush.bf16.msra.mxu0 %v754
      %835 = vmatpush.bf16.msra.mxu0 %v751
      %836 = vmatpush.bf16.msra.mxu0 %v748
      %837 = vmatpush.bf16.msra.mxu0 %v745
      %838 = vmatmul.bf16.gmra.mxu0 %v651
      %v839 = vpop.f32.mrf.mxu0
      %v840 = vadd.f32 0.0, %v839
      %v841 = vpop.f32.mrf.mxu0
      %v842 = vadd.f32 0.0, %v841
      %843 = vdwg.mxu0
      %844 = vmatpush.bf16.msra.mxu0 0
      %845 = vmatpush.bf16.msra.mxu0 0
      %846 = vmatpush.bf16.msra.mxu0 0
      %847 = vmatpush.bf16.msra.mxu0 0
      %848 = vmatpush.bf16.msra.mxu0 0
      %849 = vmatpush.bf16.msra.mxu0 0
      %850 = vmatpush.bf16.msra.mxu0 0
      %851 = vmatpush.bf16.msra.mxu0 %v769
      %852 = vmatmul.bf16.gmra.mxu0 %v800
      %v853 = vpop.f32.mrf.mxu0
      %v854 = vadd.f32 %v840, %v853
      %v855 = vpop.f32.mrf.mxu0
      %v856 = vadd.f32 %v842, %v855
      %857 = vdwg.mxu0
      %858 = vmatpush.bf16.msra.mxu0 %v767
      %859 = vmatpush.bf16.msra.mxu0 %v764
      %860 = vmatpush.bf16.msra.mxu0 %v761
      %861 = vmatpush.bf16.msra.mxu0 %v758
      %862 = vmatpush.bf16.msra.mxu0 %v755
      %863 = vmatpush.bf16.msra.mxu0 %v752
      %864 = vmatpush.bf16.msra.mxu0 %v749
      %865 = vmatpush.bf16.msra.mxu0 %v746
      %866 = vmatmul.bf16.gmra.mxu0 %v651
      %v867 = vpop.f32.mrf.mxu0
      %v868 = vadd.f32 0.0, %v867
      %v869 = vpop.f32.mrf.mxu0
      %v870 = vadd.f32 0.0, %v869
      %871 = vdwg.mxu0
      %872 = vmatpush.bf16.msra.mxu0 0
      %873 = vmatpush.bf16.msra.mxu0 0
      %874 = vmatpush.bf16.msra.mxu0 0
      %875 = vmatpush.bf16.msra.mxu0 0
      %876 = vmatpush.bf16.msra.mxu0 0
      %877 = vmatpush.bf16.msra.mxu0 0
      %878 = vmatpush.bf16.msra.mxu0 0
      %879 = vmatpush.bf16.msra.mxu0 %v770
      %880 = vmatmul.bf16.gmra.mxu0 %v800
      %v881 = vpop.f32.mrf.mxu0
      %v882 = vadd.f32 %v868, %v881
      %v883 = vpop.f32.mrf.mxu0
      %v884 = vadd.f32 %v870, %v883
      %885 = vdwg.mxu0
      %887 = vset.pattern.permute.xlu0 0
      %888 = vperm.xlu0 %887, %v305
      %v889 = vpop.permute.xlu0 %888
      %892 = vset.pattern.permute.xlu0 0
      %893 = vperm.xlu0 %892, %v306
      %v894 = vpop.permute.xlu0 %893
      %v896 = vmul.f32 %v826, %v889
      %v897 = vmul.f32 %v854, %v889
      %v898 = vmul.f32 %v882, %v889
      %v899 = vmul.f32 %v828, %v894
      %v900 = vmul.f32 %v856, %v894
      %v901 = vmul.f32 %v884, %v894
      %903 = vset.pattern.permute.xlu0 0
      %904 = vperm.xlu0 %903, %v307
      %v905 = vpop.permute.xlu0 %904
      %908 = vset.pattern.permute.xlu0 0
      %909 = vperm.xlu0 %908, %v308
      %v910 = vpop.permute.xlu0 %909
      %v912 = vadd.f32 %v896, %v905
      %v913 = vadd.f32 %v897, %v905
      %v914 = vadd.f32 %v898, %v905
      %v915 = vadd.f32 %v899, %v910
      %v916 = vadd.f32 %v900, %v910
      %v917 = vadd.f32 %v901, %v910
      %v918 = vmax.f32 %v912, 0.0
      %v919 = vmax.f32 %v913, 0.0
      %v920 = vmax.f32 %v914, 0.0
      %v921 = vmax.f32 %v915, 0.0
      %v922 = vmax.f32 %v916, 0.0
      %v923 = vmax.f32 %v917, 0.0
      %v925 = vperm.slane %v309, 0
      %v926 = vperm.slane %v309, 1
      %v927 = vperm.slane %v309, 2
      %v931 = vmul.f32 %v918, %v925
      %v932 = vmul.f32 %v919, %v926
      %v933 = vmul.f32 %v920, %v927
      %v934 = vmul.f32 %v921, %v925
      %v935 = vmul.f32 %v922, %v926
      %v936 = vmul.f32 %v923, %v927
      %v937 = vpack.c.bf16 %v932, %v931
      %v938 = vpack.c.bf16 %v933, %v933
      %v939 = vpack.c.bf16 %v935, %v934
      %v940 = vpack.c.bf16 %v936, %v936
      %941 = vst [vmem:[%s271] sm:$0xff] %v937
      %942 = vst.msk [vmem:[%s271 + $0x8] sm:$0xf] %vm301, %v938
      %943 = vst [vmem:[%s271 + $0xc] sm:$0xff] %v939
      %944 = vst.msk [vmem:[%s271 + $0x14] sm:$0xf] %vm301, %v940
      %p945 = scmp.lt.s32.totalorder %s17, 5
      %s946 = scalar_select %p945, %s17, 5
      %s947 = smul.addr %s946, 6
      %s948 = smul.addr %s947, 4
      %s949 = scalar_lea.vmem %s6, %s948
      // Predicated region
      $region45: #{upblock_forward_clip.2} parent=43 // pred_check
        %p950 = pneg %p171
      $region46: #{upblock_forward_clip.2} parent=43 // pred_check_branch
        %952 = sbr.rel (%p950) target = $region48
      $region47: #{upblock_forward_clip.2} parent=43 // pred_region
        _
      $region48: #{upblock_forward_clip.2} parent=43 // pred_fallthru
        _
    $region44: #{upblock_forward_clip.2} parent=5 // pred_fallthru
      _
    %p953 = scmp.le.s32.totalorder 2, %s12
    // Predicated region
    $region49: #{upblock_forward_clip.2} parent=5 // pred_check
      %p954 = pneg %p953
    $region50: #{upblock_forward_clip.2} parent=5 // pred_check_branch
      %956 = sbr.rel (%p954) target = $region52
    $region51: #{upblock_forward_clip.2} parent=5 // pred_region
      %s957 = ssub.s32 %s12, 2
      // Predicated region
      $region53: #{upblock_forward_clip.2} parent=51 // pred_check
        %p958 = pneg %p177
      $region54: #{upblock_forward_clip.2} parent=51 // pred_check_branch
        %960 = sbr.rel (%p958) target = $region56
      $region55: #{upblock_forward_clip.2} parent=51 // pred_region
        %p961 = scmp.lt.s32.totalorder %s18, 5
        %s962 = scalar_select %p961, %s18, 5
        %s963 = smul.addr %s962, 6
        %s964 = smul.addr %s963, 4
        %s965 = scalar_lea.vmem %s6, %s964
      $region56: #{upblock_forward_clip.2} parent=51 // pred_fallthru
        _
    $region52: #{upblock_forward_clip.2} parent=5 // pred_fallthru
      _
  $region6: #{upblock_forward_clip.2} parent=0 // loop_footer
    %s16 = sadd.s32 1, %s12
  $region7: #{upblock_forward_clip.2} parent=0 // loop_footer_branch
    %11 = sbr.rel target = $region3
  $region8: #{upblock_forward_clip.2} parent=0 // loop_exit
    _

// kernel: upblock_forward_clip.3
$region0: #{upblock_forward_clip.3}
  #allocation0 [shape = 'u32[]', space=smem, size = 0x4, offset = 0x4, fixed_abs, tag = 'smem constant byte address 0x4 - core index']
  #allocation1 [shape = 'u32[72,128]{1,0:T(1,128)}', space=vmem, size = 0x9000, scoped, tag = 'internal scratch']
  #allocation2 [shape = 'f32[16,324]{1,0:T(8,128)}', space=vmem, size = 0x6000, scoped, tag = 'scratch operand']
  #allocation3 [shape = 'bf16[144,324]{1,0:T(8,128)(2,1)}', space=vmem, size = 0x1b000, scoped, tag = 'scratch operand']
  %s0 = inlined_call_operand.vmem [shape: bf16[6,4,324], index: 0, kind: input, shape index: {}]
  %s1 = inlined_call_operand.vmem [shape: bf16[6,16,324], index: 1, kind: input, shape index: {}]
  %s2 = inlined_call_operand.vmem [shape: bf16[16,144], index: 2, kind: input, shape index: {}]
  %s3 = inlined_call_operand.vmem [shape: f32[16,1], index: 3, kind: input, shape index: {}]
  %s4 = inlined_call_operand.vmem [shape: f32[16,1], index: 4, kind: input, shape index: {}]
  %s5 = inlined_call_operand.vmem [shape: bf16[32,144], index: 5, kind: input, shape index: {}]
  %s6 = inlined_call_operand.vmem [shape: f32[32,1], index: 6, kind: input, shape index: {}]
  %s7 = inlined_call_operand.vmem [shape: f32[1,324], index: 7, kind: input, shape index: {}]
  %s8 = inlined_call_operand.vmem [shape: f32[6,32,324], index: 8, kind: output, shape index: {}]
  %s9 = sld [smem:[#allocation0]]
  $region65: #{upblock_forward_clip.3} parent=0
    _
  %s11 = ssub.s32 1, %s9
  %s12 = scalar_select 0, %s11, %s9
  loop: start=0, step=1, limit=8
  $region2: #{upblock_forward_clip.3} parent=0 // loop_pre_header
    _
  $region3: #{upblock_forward_clip.3} parent=0 // loop_header
    %s14 = sphi 0, %s18
    %p15 = scmp.ge.s32.totalorder %s14, 8
    %s24 = sphi 0, %s26
    %s27 = sphi 0, %s24
    %s28 = sphi 0, %s27
    %s44 = sphi 0, %s28
    %s50 = sphi 0, %s52
    %s53 = sphi 0, %s50
    %s54 = sphi 0, %s53
    %s70 = sphi 0, %s54
    %s74 = sphi 0, %s74
    %s76 = sphi 0, %s74
    %s77 = sphi 0, %s76
    %s91 = sphi 0, %s77
    %s95 = sphi 0, %s95
    %s97 = sphi 0, %s95
    %s98 = sphi 0, %s97
    %s112 = sphi 0, %s98
    %s116 = sphi 0, %s116
    %s118 = sphi 0, %s116
    %s119 = sphi 0, %s118
    %s133 = sphi 0, %s119
    %s137 = sphi 0, %s137
    %s139 = sphi 0, %s137
    %s140 = sphi 0, %s139
    %s154 = sphi 0, %s140
    %s158 = sphi 0, %s158
    %s160 = sphi 0, %s158
    %s161 = sphi 0, %s160
    %s175 = sphi 0, %s161
    %s179 = sphi 0, %s179
    %s181 = sphi 0, %s179
    %s182 = sphi 0, %s181
    %s196 = sphi 0, %s182
    %s202 = sphi 0, %s204
    %s205 = sphi 0, %s202
    %s206 = sphi 0, %s205
    %s222 = sphi 0, %s206
  $region4: #{upblock_forward_clip.3} parent=0 // loop_header_branch
    %17 = sbr.rel (%p15) target = $region8
  $region5: #{upblock_forward_clip.3} parent=0 // loop_body
    %s19 = ssub.s32 %s14, 1
    %s20 = ssub.s32 %s14, 2
    %s21 = sadd.s32 %s14, 1
    %s22 = ssub.s32 %s14, %s21
    %p23 = scmp.eq.s32.totalorder %s22, 0
    %s25 = sadd.s32 %s24, 1
    %s26 = scalar_select %p23, %s24, %s25
    %p29 = pneg %p23
    %p30 = scmp.eq.s32.totalorder %s14, 5
    %p31 = por %p29, %p30
    %p32 = scmp.ne.s32.totalorder %s24, %s27
    %p33 = scmp.eq.s32.totalorder %s14, 0
    %p34 = por %p32, %p33
    %p35 = scmp.ne.s32.totalorder %s24, %s27
    %p36 = scmp.eq.s32.totalorder %s19, 5
    %p37 = por %p35, %p36
    %p38 = scmp.ne.s32.totalorder %s27, %s28
    %p39 = scmp.eq.s32.totalorder %s19, 0
    %p40 = por %p38, %p39
    %p41 = scmp.ne.s32.totalorder %s27, %s28
    %p42 = scmp.eq.s32.totalorder %s20, 5
    %p43 = por %p41, %p42
    %p45 = scmp.ne.s32.totalorder %s28, %s44
    %p46 = scmp.eq.s32.totalorder %s20, 0
    %p47 = por %p45, %p46
    %s48 = ssub.s32 %s14, %s21
    %p49 = scmp.eq.s32.totalorder %s48, 0
    %s51 = sadd.s32 %s50, 1
    %s52 = scalar_select %p49, %s50, %s51
    %p55 = pneg %p49
    %p56 = scmp.eq.s32.totalorder %s14, 5
    %p57 = por %p55, %p56
    %p58 = scmp.ne.s32.totalorder %s50, %s53
    %p59 = scmp.eq.s32.totalorder %s14, 0
    %p60 = por %p58, %p59
    %p61 = scmp.ne.s32.totalorder %s50, %s53
    %p62 = scmp.eq.s32.totalorder %s19, 5
    %p63 = por %p61, %p62
    %p64 = scmp.ne.s32.totalorder %s53, %s54
    %p65 = scmp.eq.s32.totalorder %s19, 0
    %p66 = por %p64, %p65
    %p67 = scmp.ne.s32.totalorder %s53, %s54
    %p68 = scmp.eq.s32.totalorder %s20, 5
    %p69 = por %p67, %p68
    %p71 = scmp.ne.s32.totalorder %s54, %s70
    %p72 = scmp.eq.s32.totalorder %s20, 0
    %p73 = por %p71, %p72
    %s75 = sadd.s32 %s74, 1
    %p78 = scmp.eq.s32.totalorder %s14, 5
    %p79 = scmp.ne.s32.totalorder %s74, %s76
    %p80 = scmp.eq.s32.totalorder %s14, 0
    %p81 = por %p79, %p80
    %p82 = scmp.ne.s32.totalorder %s74, %s76
    %p83 = scmp.eq.s32.totalorder %s19, 5
    %p84 = por %p82, %p83
    %p85 = scmp.ne.s32.totalorder %s76, %s77
    %p86 = scmp.eq.s32.totalorder %s19, 0
    %p87 = por %p85, %p86
    %p88 = scmp.ne.s32.totalorder %s76, %s77
    %p89 = scmp.eq.s32.totalorder %s20, 5
    %p90 = por %p88, %p89
    %p92 = scmp.ne.s32.totalorder %s77, %s91
    %p93 = scmp.eq.s32.totalorder %s20, 0
    %p94 = por %p92, %p93
    %s96 = sadd.s32 %s95, 1
    %p99 = scmp.eq.s32.totalorder %s14, 5
    %p100 = scmp.ne.s32.totalorder %s95, %s97
    %p101 = scmp.eq.s32.totalorder %s14, 0
    %p102 = por %p100, %p101
    %p103 = scmp.ne.s32.totalorder %s95, %s97
    %p104 = scmp.eq.s32.totalorder %s19, 5
    %p105 = por %p103, %p104
    %p106 = scmp.ne.s32.totalorder %s97, %s98
    %p107 = scmp.eq.s32.totalorder %s19, 0
    %p108 = por %p106, %p107
    %p109 = scmp.ne.s32.totalorder %s97, %s98
    %p110 = scmp.eq.s32.totalorder %s20, 5
    %p111 = por %p109, %p110
    %p113 = scmp.ne.s32.totalorder %s98, %s112
    %p114 = scmp.eq.s32.totalorder %s20, 0
    %p115 = por %p113, %p114
    %s117 = sadd.s32 %s116, 1
    %p120 = scmp.eq.s32.totalorder %s14, 5
    %p121 = scmp.ne.s32.totalorder %s116, %s118
    %p122 = scmp.eq.s32.totalorder %s14, 0
    %p123 = por %p121, %p122
    %p124 = scmp.ne.s32.totalorder %s116, %s118
    %p125 = scmp.eq.s32.totalorder %s19, 5
    %p126 = por %p124, %p125
    %p127 = scmp.ne.s32.totalorder %s118, %s119
    %p128 = scmp.eq.s32.totalorder %s19, 0
    %p129 = por %p127, %p128
    %p130 = scmp.ne.s32.totalorder %s118, %s119
    %p131 = scmp.eq.s32.totalorder %s20, 5
    %p132 = por %p130, %p131
    %p134 = scmp.ne.s32.totalorder %s119, %s133
    %p135 = scmp.eq.s32.totalorder %s20, 0
    %p136 = por %p134, %p135
    %s138 = sadd.s32 %s137, 1
    %p141 = scmp.eq.s32.totalorder %s14, 5
    %p142 = scmp.ne.s32.totalorder %s137, %s139
    %p143 = scmp.eq.s32.totalorder %s14, 0
    %p144 = por %p142, %p143
    %p145 = scmp.ne.s32.totalorder %s137, %s139
    %p146 = scmp.eq.s32.totalorder %s19, 5
    %p147 = por %p145, %p146
    %p148 = scmp.ne.s32.totalorder %s139, %s140
    %p149 = scmp.eq.s32.totalorder %s19, 0
    %p150 = por %p148, %p149
    %p151 = scmp.ne.s32.totalorder %s139, %s140
    %p152 = scmp.eq.s32.totalorder %s20, 5
    %p153 = por %p151, %p152
    %p155 = scmp.ne.s32.totalorder %s140, %s154
    %p156 = scmp.eq.s32.totalorder %s20, 0
    %p157 = por %p155, %p156
    %s159 = sadd.s32 %s158, 1
    %p162 = scmp.eq.s32.totalorder %s14, 5
    %p163 = scmp.ne.s32.totalorder %s158, %s160
    %p164 = scmp.eq.s32.totalorder %s14, 0
    %p165 = por %p163, %p164
    %p166 = scmp.ne.s32.totalorder %s158, %s160
    %p167 = scmp.eq.s32.totalorder %s19, 5
    %p168 = por %p166, %p167
    %p169 = scmp.ne.s32.totalorder %s160, %s161
    %p170 = scmp.eq.s32.totalorder %s19, 0
    %p171 = por %p169, %p170
    %p172 = scmp.ne.s32.totalorder %s160, %s161
    %p173 = scmp.eq.s32.totalorder %s20, 5
    %p174 = por %p172, %p173
    %p176 = scmp.ne.s32.totalorder %s161, %s175
    %p177 = scmp.eq.s32.totalorder %s20, 0
    %p178 = por %p176, %p177
    %s180 = sadd.s32 %s179, 1
    %p183 = scmp.eq.s32.totalorder %s14, 5
    %p184 = scmp.ne.s32.totalorder %s179, %s181
    %p185 = scmp.eq.s32.totalorder %s14, 0
    %p186 = por %p184, %p185
    %p187 = scmp.ne.s32.totalorder %s179, %s181
    %p188 = scmp.eq.s32.totalorder %s19, 5
    %p189 = por %p187, %p188
    %p190 = scmp.ne.s32.totalorder %s181, %s182
    %p191 = scmp.eq.s32.totalorder %s19, 0
    %p192 = por %p190, %p191
    %p193 = scmp.ne.s32.totalorder %s181, %s182
    %p194 = scmp.eq.s32.totalorder %s20, 5
    %p195 = por %p193, %p194
    %p197 = scmp.ne.s32.totalorder %s182, %s196
    %p198 = scmp.eq.s32.totalorder %s20, 0
    %p199 = por %p197, %p198
    %s200 = ssub.s32 %s14, %s21
    %p201 = scmp.eq.s32.totalorder %s200, 0
    %s203 = sadd.s32 %s202, 1
    %s204 = scalar_select %p201, %s202, %s203
    %p207 = pneg %p201
    %p208 = scmp.eq.s32.totalorder %s14, 5
    %p209 = por %p207, %p208
    %p210 = scmp.ne.s32.totalorder %s202, %s205
    %p211 = scmp.eq.s32.totalorder %s14, 0
    %p212 = por %p210, %p211
    %p213 = scmp.ne.s32.totalorder %s202, %s205
    %p214 = scmp.eq.s32.totalorder %s19, 5
    %p215 = por %p213, %p214
    %p216 = scmp.ne.s32.totalorder %s205, %s206
    %p217 = scmp.eq.s32.totalorder %s19, 0
    %p218 = por %p216, %p217
    %p219 = scmp.ne.s32.totalorder %s205, %s206
    %p220 = scmp.eq.s32.totalorder %s20, 5
    %p221 = por %p219, %p220
    %p223 = scmp.ne.s32.totalorder %s206, %s222
    %p224 = scmp.eq.s32.totalorder %s20, 0
    %p225 = por %p223, %p224
    %p226 = scmp.le.s32.totalorder 1, %s14
    %p227 = scmp.lt.s32.totalorder %s14, 7
    %p228 = pnand %p226, %p227
    %p229 = pneg %p228
    // Predicated region
    $region9: #{upblock_forward_clip.3} parent=5 // pred_check
      _
    $region10: #{upblock_forward_clip.3} parent=5 // pred_check_branch
      %231 = sbr.rel (%p228) target = $region12
    $region11: #{upblock_forward_clip.3} parent=5 // pred_region
      %s232 = ssub.s32 %s14, 1
      // Predicated region
      $region13: #{upblock_forward_clip.3} parent=11 // pred_check
        %p233 = pneg %p87
      $region14: #{upblock_forward_clip.3} parent=11 // pred_check_branch
        %235 = sbr.rel (%p233) target = $region16
      $region15: #{upblock_forward_clip.3} parent=11 // pred_region
        _
      $region16: #{upblock_forward_clip.3} parent=11 // pred_fallthru
        _
      // Predicated region
      $region17: #{upblock_forward_clip.3} parent=11 // pred_check
        %p236 = pneg %p108
      $region18: #{upblock_forward_clip.3} parent=11 // pred_check_branch
        %238 = sbr.rel (%p236) target = $region20
      $region19: #{upblock_forward_clip.3} parent=11 // pred_region
        _
      $region20: #{upblock_forward_clip.3} parent=11 // pred_fallthru
        _
      // Predicated region
      $region21: #{upblock_forward_clip.3} parent=11 // pred_check
        %p239 = pneg %p129
      $region22: #{upblock_forward_clip.3} parent=11 // pred_check_branch
        %241 = sbr.rel (%p239) target = $region24
      $region23: #{upblock_forward_clip.3} parent=11 // pred_region
        _
      $region24: #{upblock_forward_clip.3} parent=11 // pred_fallthru
        _
      // Predicated region
      $region25: #{upblock_forward_clip.3} parent=11 // pred_check
        %p242 = pneg %p150
      $region26: #{upblock_forward_clip.3} parent=11 // pred_check_branch
        %244 = sbr.rel (%p242) target = $region28
      $region27: #{upblock_forward_clip.3} parent=11 // pred_region
        _
      $region28: #{upblock_forward_clip.3} parent=11 // pred_fallthru
        _
      // Predicated region
      $region29: #{upblock_forward_clip.3} parent=11 // pred_check
        %p245 = pneg %p171
      $region30: #{upblock_forward_clip.3} parent=11 // pred_check_branch
        %247 = sbr.rel (%p245) target = $region32
      $region31: #{upblock_forward_clip.3} parent=11 // pred_region
        _
      $region32: #{upblock_forward_clip.3} parent=11 // pred_fallthru
        _
      // Predicated region
      $region33: #{upblock_forward_clip.3} parent=11 // pred_check
        %p248 = pneg %p192
      $region34: #{upblock_forward_clip.3} parent=11 // pred_check_branch
        %250 = sbr.rel (%p248) target = $region36
      $region35: #{upblock_forward_clip.3} parent=11 // pred_region
        _
      $region36: #{upblock_forward_clip.3} parent=11 // pred_fallthru
        _
    $region12: #{upblock_forward_clip.3} parent=5 // pred_fallthru
      _
    %p251 = scmp.lt.s32.totalorder %s14, 6
    // Predicated region
    $region37: #{upblock_forward_clip.3} parent=5 // pred_check
      %p252 = pneg %p251
    $region38: #{upblock_forward_clip.3} parent=5 // pred_check_branch
      %254 = sbr.rel (%p252) target = $region40
    $region39: #{upblock_forward_clip.3} parent=5 // pred_region
      // Predicated region
      $region41: #{upblock_forward_clip.3} parent=39 // pred_check
        %p255 = pneg %p34
      $region42: #{upblock_forward_clip.3} parent=39 // pred_check_branch
        %257 = sbr.rel (%p255) target = $region44
      $region43: #{upblock_forward_clip.3} parent=39 // pred_region
        %p258 = scmp.lt.s32.totalorder %s14, 5
        %s259 = scalar_select %p258, %s14, 5
        %s260 = smul.addr %s259, 3
        %s261 = smul.addr %s260, 2
        %s262 = scalar_lea.vmem %s0, %s261
      $region44: #{upblock_forward_clip.3} parent=39 // pred_fallthru
        _
      // Predicated region
      $region45: #{upblock_forward_clip.3} parent=39 // pred_check
        %p263 = pneg %p60
      $region46: #{upblock_forward_clip.3} parent=39 // pred_check_branch
        %265 = sbr.rel (%p263) target = $region48
      $region47: #{upblock_forward_clip.3} parent=39 // pred_region
        %p266 = scmp.lt.s32.totalorder %s14, 5
        %s267 = scalar_select %p266, %s14, 5
        %s268 = smul.addr %s267, 6
        %s269 = smul.addr %s268, 4
        %s270 = scalar_lea.vmem %s1, %s269
      $region48: #{upblock_forward_clip.3} parent=39 // pred_fallthru
        _
    $region40: #{upblock_forward_clip.3} parent=5 // pred_fallthru
      _
    %p271 = scmp.le.s32.totalorder 1, %s14
    %p272 = scmp.lt.s32.totalorder %s14, 7
    %p273 = pnand %p271, %p272
    %p274 = pneg %p273
    // Predicated region
    $region49: #{upblock_forward_clip.3} parent=5 // pred_check
      _
    $region50: #{upblock_forward_clip.3} parent=5 // pred_check_branch
      %276 = sbr.rel (%p273) target = $region52
    $region51: #{upblock_forward_clip.3} parent=5 // pred_region
      %s277 = ssub.s32 %s14, 1
      %p278 = scmp.lt.s32.totalorder %s19, 5
      %s279 = scalar_select %p278, %s19, 5
      %s280 = smul.addr %s279, 3
      %s281 = smul.addr %s280, 2
      %s282 = scalar_lea.vmem %s0, %s281
      %p283 = pneg %p40
      %p284 = pneg %p37
      %p285 = scmp.lt.s32.totalorder %s19, 5
      %s286 = scalar_select %p285, %s19, 5
      %s287 = smul.addr %s286, 6
      %s288 = smul.addr %s287, 4
      %s289 = scalar_lea.vmem %s1, %s288
      %p290 = pneg %p66
      %p291 = pneg %p63
      %p292 = pneg %p87
      %p293 = pneg %p84
      %p294 = pneg %p108
      %p295 = pneg %p105
      %p296 = pneg %p129
      %p297 = pneg %p126
      %p298 = pneg %p150
      %p299 = pneg %p147
      %p300 = pneg %p171
      %p301 = pneg %p168
      %p302 = pneg %p192
      %p303 = pneg %p189
      %p304 = pneg %p218
      %p305 = pneg %p215
      %p306 = scmp.lt.s32.totalorder %s19, 5
      %s307 = scalar_select %p306, %s19, 5
      %s308 = smul.addr %s307, 12
      %s309 = smul.addr %s308, 8
      %s310 = scalar_lea.vmem %s8, %s309
      %p311 = scmp.lt.s32.totalorder %s19, 5
      %s312 = scalar_select %p311, %s19, 5
      %s313 = smul.addr %s312, 3
      %s314 = smul.addr %s313, 2
      %s315 = scalar_lea.vmem %s0, %s314
      %p316 = scmp.lt.s32.totalorder %s19, 5
      %s317 = scalar_select %p316, %s19, 5
      %s318 = smul.addr %s317, 6
      %s319 = smul.addr %s318, 4
      %s320 = scalar_lea.vmem %s1, %s319
      %p321 = scmp.lt.s32.totalorder %s19, 5
      %s322 = scalar_select %p321, %s19, 5
      %s323 = smul.addr %s322, 12
      %s324 = smul.addr %s323, 8
      %s325 = scalar_lea.vmem %s8, %s324
      %v327 = vld [vmem:[%s320] sm:$0xff]
      %v328 = vld [vmem:[%s320 + $0x8] sm:$0xf]
      %v329 = vld [vmem:[%s320 + $0xc] sm:$0xff]
      %v330 = vld [vmem:[%s320 + $0x14] sm:$0xf]
      %v331 = vunpack.c.l.bf16 %v327
      %v332 = vunpack.c.h.bf16 %v327
      %v333 = vunpack.c.l.bf16 %v328
      %v334 = vunpack.c.l.bf16 %v329
      %v335 = vunpack.c.h.bf16 %v329
      %v336 = vunpack.c.l.bf16 %v330
      %337 = vst [vmem:[#allocation2] sm:$0xff] %v331
      %338 = vst [vmem:[#allocation2 + $0x8] sm:$0xff] %v332
      %vm339 = vcmask 556032
      %340 = vst.msk [vmem:[#allocation2 + $0x10] sm:$0xff] %vm339, %v333
      %341 = vst [vmem:[#allocation2 + $0x18] sm:$0xff] %v334
      %342 = vst [vmem:[#allocation2 + $0x20] sm:$0xff] %v335
      %343 = vst.msk [vmem:[#allocation2 + $0x28] sm:$0xff] %vm339, %v336
      %v344 = vld [vmem:[%s315] sm:$0x3f]
      %v345 = vunpack.c.l.bf16 %v344
      %v346 = vunpack.c.h.bf16 %v344
      %349 = vst [vmem:[#allocation1] ss:$2 sm:$0xff] %v345
      %s350 = scalar_lea.vmem [#allocation1], 16
      %351 = vst [vmem:[%s350] ss:$2 sm:$0xff] %v346
      %v352 = vld.sshfl [vmem:[#allocation1] sm:$0xff pattern:$0x75316420]
      %v353 = vld.sshfl [vmem:[#allocation1 + $0x8] sm:$0xff pattern:$0x75316420]
      %v354 = vld.sshfl [vmem:[#allocation1 + $0x10] sm:$0xff pattern:$0x75316420]
      %358 = vst [vmem:[#allocation2] sm:$0xf] %v352
      %359 = vst [vmem:[#allocation2 + $0x8] sm:$0xf] %v353
      %vm360 = vcmask 551936
      %361 = vst.msk [vmem:[#allocation2 + $0x10] sm:$0xf] %vm360, %v354
      %v362 = vld [vmem:[%s2] sm:$0xff]
      %v363 = vld [vmem:[%s2 + $0x8] sm:$0xff]
      %v364 = vld [vmem:[%s3] sm:$0xff]
      %v365 = vld [vmem:[%s3 + $0x8] sm:$0xff]
      %v366 = vld [vmem:[%s4] sm:$0xff]
      %v367 = vld [vmem:[%s4 + $0x8] sm:$0xff]
      %v368 = vld [vmem:[%s7] sm:$0x7]
      %v369 = vld [vmem:[#allocation2] sm:$0xff]
      %v370 = vld [vmem:[#allocation2 + $0x8] sm:$0xff]
      %v371 = vld [vmem:[#allocation2 + $0x10] sm:$0xff]
      %v372 = vld [vmem:[#allocation2 + $0x18] sm:$0xff]
      %v373 = vld [vmem:[#allocation2 + $0x20] sm:$0xff]
      %v374 = vld [vmem:[#allocation2 + $0x28] sm:$0xff]
      %v375 = vpack.c.bf16 %v370, %v369
      %v376 = vpack.c.bf16 %v371, %v371
      %v377 = vpack.c.bf16 %v373, %v372
      %v378 = vpack.c.bf16 %v374, %v374
      %v381 = vunpack.c.l.b16 %v376
      %v382 = vunpack.c.l.b16 %v378
      %v383 = vpack.c.b16 %v382, %v381
      %384 = vrot.lane.b32.xlu0 %v383, 79
      %v385 = vpop.permute.xlu0 %384
      %v388 = vunpack.c.l.b16 %v375
      %v389 = vunpack.c.h.b16 %v375
      %v390 = vunpack.c.l.b16 %v377
      %v391 = vunpack.c.h.b16 %v377
      %v392 = vpack.c.b16 %v390, %v388
      %v393 = vpack.c.b16 %v391, %v389
      %394 = vrot.lane.b32.xlu0 %v392, 19
      %v395 = vpop.permute.xlu0 %394
      %396 = vrot.lane.b32.xlu0 %v393, 19
      %v397 = vpop.permute.xlu0 %396
      %398 = vrot.lane.b32.xlu0 %v383, 19
      %v399 = vpop.permute.xlu0 %398
      %vm400 = vcmask 154624
      %v401 = vsel %vm400, %v395, %v397
      %v402 = vsel %vm400, %v397, %v399
      %vm403 = vcmask 154624
      %v406 = vsel %vm403, %v385, %v395
      %v408 = vunpack.c.l.b16 %v406
      %v409 = vunpack.c.l.b16 %v401
      %v410 = vunpack.c.l.b16 %v402
      %v411 = vunpack.c.h.b16 %v406
      %v412 = vunpack.c.h.b16 %v401
      %v413 = vunpack.c.h.b16 %v402
      %v414 = vpack.c.b16 %v409, %v408
      %v415 = vpack.c.b16 %v410, %v410
      %v416 = vpack.c.b16 %v412, %v411
      %v417 = vpack.c.b16 %v413, %v413
      %422 = vst [vmem:[#allocation3] sm:$0xff] %v414
      %423 = vst.msk [vmem:[#allocation3 + $0x8] sm:$0xf] %vm360, %v415
      %424 = vst [vmem:[#allocation3 + $0xc] sm:$0xff] %v416
      %425 = vst.msk [vmem:[#allocation3 + $0x14] sm:$0xf] %vm360, %v417
      %426 = vrot.lane.b32.xlu0 %v383, 78
      %v427 = vpop.permute.xlu0 %426
      %428 = vrot.lane.b32.xlu0 %v392, 18
      %v429 = vpop.permute.xlu0 %428
      %430 = vrot.lane.b32.xlu0 %v393, 18
      %v431 = vpop.permute.xlu0 %430
      %432 = vrot.lane.b32.xlu0 %v383, 18
      %v433 = vpop.permute.xlu0 %432
      %vm434 = vcmask 146432
      %v435 = vsel %vm434, %v429, %v431
      %v436 = vsel %vm434, %v431, %v433
      %vm437 = vcmask 146432
      %v440 = vsel %vm437, %v427, %v429
      %v442 = vunpack.c.l.b16 %v440
      %v443 = vunpack.c.l.b16 %v435
      %v444 = vunpack.c.l.b16 %v436
      %v445 = vunpack.c.h.b16 %v440
      %v446 = vunpack.c.h.b16 %v435
      %v447 = vunpack.c.h.b16 %v436
      %v448 = vpack.c.b16 %v443, %v442
      %v449 = vpack.c.b16 %v444, %v444
      %v450 = vpack.c.b16 %v446, %v445
      %v451 = vpack.c.b16 %v447, %v447
      %456 = vst [vmem:[#allocation3 + $0x18] sm:$0xff] %v448
      %457 = vst.msk [vmem:[#allocation3 + $0x20] sm:$0xf] %vm360, %v449
      %458 = vst [vmem:[#allocation3 + $0x24] sm:$0xff] %v450
      %459 = vst.msk [vmem:[#allocation3 + $0x2c] sm:$0xf] %vm360, %v451
      %460 = vrot.lane.b32.xlu0 %v383, 77
      %v461 = vpop.permute.xlu0 %460
      %462 = vrot.lane.b32.xlu0 %v392, 17
      %v463 = vpop.permute.xlu0 %462
      %464 = vrot.lane.b32.xlu0 %v393, 17
      %v465 = vpop.permute.xlu0 %464
      %466 = vrot.lane.b32.xlu0 %v383, 17
      %v467 = vpop.permute.xlu0 %466
      %vm468 = vcmask 138240
      %v469 = vsel %vm468, %v463, %v465
      %v470 = vsel %vm468, %v465, %v467
      %vm471 = vcmask 138240
      %v474 = vsel %vm471, %v461, %v463
      %v476 = vunpack.c.l.b16 %v474
      %v477 = vunpack.c.l.b16 %v469
      %v478 = vunpack.c.l.b16 %v470
      %v479 = vunpack.c.h.b16 %v474
      %v480 = vunpack.c.h.b16 %v469
      %v481 = vunpack.c.h.b16 %v470
      %v482 = vpack.c.b16 %v477, %v476
      %v483 = vpack.c.b16 %v478, %v478
      %v484 = vpack.c.b16 %v480, %v479
      %v485 = vpack.c.b16 %v481, %v481
      %490 = vst [vmem:[#allocation3 + $0x30] sm:$0xff] %v482
      %491 = vst.msk [vmem:[#allocation3 + $0x38] sm:$0xf] %vm360, %v483
      %492 = vst [vmem:[#allocation3 + $0x3c] sm:$0xff] %v484
      %493 = vst.msk [vmem:[#allocation3 + $0x44] sm:$0xf] %vm360, %v485
      %494 = vrot.lane.b32.xlu0 %v383, 61
      %v495 = vpop.permute.xlu0 %494
      %496 = vrot.lane.b32.xlu0 %v392, 1
      %v497 = vpop.permute.xlu0 %496
      %498 = vrot.lane.b32.xlu0 %v393, 1
      %v499 = vpop.permute.xlu0 %498
      %500 = vrot.lane.b32.xlu0 %v383, 1
      %v501 = vpop.permute.xlu0 %500
      %vm502 = vcmask 7168
      %v503 = vsel %vm502, %v497, %v499
      %v504 = vsel %vm502, %v499, %v501
      %vm505 = vcmask 7168
      %v508 = vsel %vm505, %v495, %v497
      %v510 = vunpack.c.l.b16 %v508
      %v511 = vunpack.c.l.b16 %v503
      %v512 = vunpack.c.l.b16 %v504
      %v513 = vunpack.c.h.b16 %v508
      %v514 = vunpack.c.h.b16 %v503
      %v515 = vunpack.c.h.b16 %v504
      %v516 = vpack.c.b16 %v511, %v510
      %v517 = vpack.c.b16 %v512, %v512
      %v518 = vpack.c.b16 %v514, %v513
      %v519 = vpack.c.b16 %v515, %v515
      %524 = vst [vmem:[#allocation3 + $0x48] sm:$0xff] %v516
      %525 = vst.msk [vmem:[#allocation3 + $0x50] sm:$0xf] %vm360, %v517
      %526 = vst [vmem:[#allocation3 + $0x54] sm:$0xff] %v518
      %527 = vst.msk [vmem:[#allocation3 + $0x5c] sm:$0xf] %vm360, %v519
      %528 = vst [vmem:[#allocation3 + $0x60] sm:$0xff] %v375
      %529 = vst.msk [vmem:[#allocation3 + $0x68] sm:$0xf] %vm360, %v376
      %530 = vst [vmem:[#allocation3 + $0x6c] sm:$0xff] %v377
      %531 = vst.msk [vmem:[#allocation3 + $0x74] sm:$0xf] %vm360, %v378
      %532 = vrot.lane.b32.xlu0 %v392, 127
      %v533 = vpop.permute.xlu0 %532
      %534 = vrot.lane.b32.xlu0 %v393, 127
      %v535 = vpop.permute.xlu0 %534
      %536 = vrot.lane.b32.xlu0 %v383, 127
      %v537 = vpop.permute.xlu0 %536
      %vm538 = vcmask 1039360
      %v539 = vsel %vm538, %v533, %v535
      %v540 = vsel %vm538, %v535, %v537
      %541 = vrot.lane.b32.xlu0 %v392, 67
      %v542 = vpop.permute.xlu0 %541
      %vm543 = vcmask 547840
      %v546 = vsel %vm543, %v537, %v542
      %v548 = vunpack.c.l.b16 %v539
      %v549 = vunpack.c.l.b16 %v540
      %v550 = vunpack.c.l.b16 %v546
      %v551 = vunpack.c.h.b16 %v539
      %v552 = vunpack.c.h.b16 %v540
      %v553 = vunpack.c.h.b16 %v546
      %v554 = vpack.c.b16 %v549, %v548
      %v555 = vpack.c.b16 %v550, %v550
      %v556 = vpack.c.b16 %v552, %v551
      %v557 = vpack.c.b16 %v553, %v553
      %562 = vst [vmem:[#allocation3 + $0x78] sm:$0xff] %v554
      %563 = vst.msk [vmem:[#allocation3 + $0x80] sm:$0xf] %vm360, %v555
      %564 = vst [vmem:[#allocation3 + $0x84] sm:$0xff] %v556
      %565 = vst.msk [vmem:[#allocation3 + $0x8c] sm:$0xf] %vm360, %v557
      %566 = vrot.lane.b32.xlu0 %v392, 111
      %v567 = vpop.permute.xlu0 %566
      %568 = vrot.lane.b32.xlu0 %v393, 111
      %v569 = vpop.permute.xlu0 %568
      %570 = vrot.lane.b32.xlu0 %v383, 111
      %v571 = vpop.permute.xlu0 %570
      %vm572 = vcmask 908288
      %v573 = vsel %vm572, %v567, %v569
      %v574 = vsel %vm572, %v569, %v571
      %575 = vrot.lane.b32.xlu0 %v392, 51
      %v576 = vpop.permute.xlu0 %575
      %vm577 = vcmask 416768
      %v580 = vsel %vm577, %v571, %v576
      %v582 = vunpack.c.l.b16 %v573
      %v583 = vunpack.c.l.b16 %v574
      %v584 = vunpack.c.l.b16 %v580
      %v585 = vunpack.c.h.b16 %v573
      %v586 = vunpack.c.h.b16 %v574
      %v587 = vunpack.c.h.b16 %v580
      %v588 = vpack.c.b16 %v583, %v582
      %v589 = vpack.c.b16 %v584, %v584
      %v590 = vpack.c.b16 %v586, %v585
      %v591 = vpack.c.b16 %v587, %v587
      %596 = vst [vmem:[#allocation3 + $0x90] sm:$0xff] %v588
      %597 = vst.msk [vmem:[#allocation3 + $0x98] sm:$0xf] %vm360, %v589
      %598 = vst [vmem:[#allocation3 + $0x9c] sm:$0xff] %v590
      %599 = vst.msk [vmem:[#allocation3 + $0xa4] sm:$0xf] %vm360, %v591
      %600 = vrot.lane.b32.xlu0 %v392, 110
      %v601 = vpop.permute.xlu0 %600
      %602 = vrot.lane.b32.xlu0 %v393, 110
      %v603 = vpop.permute.xlu0 %602
      %604 = vrot.lane.b32.xlu0 %v383, 110
      %v605 = vpop.permute.xlu0 %604
      %vm606 = vcmask 900096
      %v607 = vsel %vm606, %v601, %v603
      %v608 = vsel %vm606, %v603, %v605
      %609 = vrot.lane.b32.xlu0 %v392, 50
      %v610 = vpop.permute.xlu0 %609
      %vm611 = vcmask 408576
      %v614 = vsel %vm611, %v605, %v610
      %v616 = vunpack.c.l.b16 %v607
      %v617 = vunpack.c.l.b16 %v608
      %v618 = vunpack.c.l.b16 %v614
      %v619 = vunpack.c.h.b16 %v607
      %v620 = vunpack.c.h.b16 %v608
      %v621 = vunpack.c.h.b16 %v614
      %v622 = vpack.c.b16 %v617, %v616
      %v623 = vpack.c.b16 %v618, %v618
      %v624 = vpack.c.b16 %v620, %v619
      %v625 = vpack.c.b16 %v621, %v621
      %630 = vst [vmem:[#allocation3 + $0xa8] sm:$0xff] %v622
      %631 = vst.msk [vmem:[#allocation3 + $0xb0] sm:$0xf] %vm360, %v623
      %632 = vst [vmem:[#allocation3 + $0xb4] sm:$0xff] %v624
      %633 = vst.msk [vmem:[#allocation3 + $0xbc] sm:$0xf] %vm360, %v625
      %634 = vrot.lane.b32.xlu0 %v392, 109
      %v635 = vpop.permute.xlu0 %634
      %636 = vrot.lane.b32.xlu0 %v393, 109
      %v637 = vpop.permute.xlu0 %636
      %638 = vrot.lane.b32.xlu0 %v383, 109
      %v639 = vpop.permute.xlu0 %638
      %vm640 = vcmask 891904
      %v641 = vsel %vm640, %v635, %v637
      %v642 = vsel %vm640, %v637, %v639
      %643 = vrot.lane.b32.xlu0 %v392, 49
      %v644 = vpop.permute.xlu0 %643
      %vm645 = vcmask 400384
      %v648 = vsel %vm645, %v639, %v644
      %v650 = vunpack.c.l.b16 %v641
      %v651 = vunpack.c.l.b16 %v642
      %v652 = vunpack.c.l.b16 %v648
      %v653 = vunpack.c.h.b16 %v641
      %v654 = vunpack.c.h.b16 %v642
      %v655 = vunpack.c.h.b16 %v648
      %v656 = vpack.c.b16 %v651, %v650
      %v657 = vpack.c.b16 %v652, %v652
      %v658 = vpack.c.b16 %v654, %v653
      %v659 = vpack.c.b16 %v655, %v655
      %664 = vst [vmem:[#allocation3 + $0xc0] sm:$0xff] %v656
      %665 = vst.msk [vmem:[#allocation3 + $0xc8] sm:$0xf] %vm360, %v657
      %666 = vst [vmem:[#allocation3 + $0xcc] sm:$0xff] %v658
      %667 = vst.msk [vmem:[#allocation3 + $0xd4] sm:$0xf] %vm360, %v659
      %v668 = vld [vmem:[#allocation3] sm:$0xff]
      %v669 = vld [vmem:[#allocation3 + $0x8] sm:$0xf]
      %v670 = vld [vmem:[#allocation3 + $0xc] sm:$0xff]
      %v671 = vld [vmem:[#allocation3 + $0x14] sm:$0xf]
      %v672 = vld [vmem:[#allocation3 + $0x18] sm:$0xff]
      %v673 = vld [vmem:[#allocation3 + $0x20] sm:$0xf]
      %v674 = vld [vmem:[#allocation3 + $0x24] sm:$0xff]
      %v675 = vld [vmem:[#allocation3 + $0x2c] sm:$0xf]
      %v676 = vld [vmem:[#allocation3 + $0x30] sm:$0xff]
      %v677 = vld [vmem:[#allocation3 + $0x38] sm:$0xf]
      %v678 = vld [vmem:[#allocation3 + $0x3c] sm:$0xff]
      %v679 = vld [vmem:[#allocation3 + $0x44] sm:$0xf]
      %v680 = vld [vmem:[#allocation3 + $0x48] sm:$0xff]
      %v681 = vld [vmem:[#allocation3 + $0x50] sm:$0xf]
      %v682 = vld [vmem:[#allocation3 + $0x54] sm:$0xff]
      %v683 = vld [vmem:[#allocation3 + $0x5c] sm:$0xf]
      %v684 = vld [vmem:[#allocation3 + $0x60] sm:$0xff]
      %v685 = vld [vmem:[#allocation3 + $0x68] sm:$0xf]
      %v686 = vld [vmem:[#allocation3 + $0x6c] sm:$0xff]
      %v687 = vld [vmem:[#allocation3 + $0x74] sm:$0xf]
      %v688 = vld [vmem:[#allocation3 + $0x78] sm:$0xff]
      %v689 = vld [vmem:[#allocation3 + $0x80] sm:$0xf]
      %v690 = vld [vmem:[#allocation3 + $0x84] sm:$0xff]
      %v691 = vld [vmem:[#allocation3 + $0x8c] sm:$0xf]
      %v692 = vld [vmem:[#allocation3 + $0x90] sm:$0xff]
      %v693 = vld [vmem:[#allocation3 + $0x98] sm:$0xf]
      %v694 = vld [vmem:[#allocation3 + $0x9c] sm:$0xff]
      %v695 = vld [vmem:[#allocation3 + $0xa4] sm:$0xf]
      %v696 = vld [vmem:[#allocation3 + $0xa8] sm:$0xff]
      %v697 = vld [vmem:[#allocation3 + $0xb0] sm:$0xf]
      %v698 = vld [vmem:[#allocation3 + $0xb4] sm:$0xff]
      %v699 = vld [vmem:[#allocation3 + $0xbc] sm:$0xf]
      %v700 = vld [vmem:[#allocation3 + $0xc0] sm:$0xff]
      %v701 = vld [vmem:[#allocation3 + $0xc8] sm:$0xf]
      %v702 = vld [vmem:[#allocation3 + $0xcc] sm:$0xff]
      %v703 = vld [vmem:[#allocation3 + $0xd4] sm:$0xf]
      %v706 = vunpack.c.l.b16 %v362
      %v707 = vunpack.c.h.b16 %v362
      %v708 = vunpack.c.l.b16 %v363
      %v709 = vunpack.c.h.b16 %v363
      %v710 = vpack.c.b16 %v708, %v706
      %v711 = vpack.c.b16 %v709, %v707
      %v749 = vunpack.c.l.b16 %v668
      %v750 = vunpack.c.h.b16 %v668
      %v751 = vunpack.c.l.b16 %v669
      %v752 = vunpack.c.l.b16 %v670
      %v753 = vunpack.c.h.b16 %v670
      %v754 = vunpack.c.l.b16 %v671
      %v755 = vunpack.c.l.b16 %v672
      %v756 = vunpack.c.h.b16 %v672
      %v757 = vunpack.c.l.b16 %v673
      %v758 = vunpack.c.l.b16 %v674
      %v759 = vunpack.c.h.b16 %v674
      %v760 = vunpack.c.l.b16 %v675
      %v761 = vunpack.c.l.b16 %v676
      %v762 = vunpack.c.h.b16 %v676
      %v763 = vunpack.c.l.b16 %v677
      %v764 = vunpack.c.l.b16 %v678
      %v765 = vunpack.c.h.b16 %v678
      %v766 = vunpack.c.l.b16 %v679
      %v767 = vunpack.c.l.b16 %v680
      %v768 = vunpack.c.h.b16 %v680
      %v769 = vunpack.c.l.b16 %v681
      %v770 = vunpack.c.l.b16 %v682
      %v771 = vunpack.c.h.b16 %v682
      %v772 = vunpack.c.l.b16 %v683
      %v773 = vunpack.c.l.b16 %v684
      %v774 = vunpack.c.h.b16 %v684
      %v775 = vunpack.c.l.b16 %v685
      %v776 = vunpack.c.l.b16 %v686
      %v777 = vunpack.c.h.b16 %v686
      %v778 = vunpack.c.l.b16 %v687
      %v779 = vunpack.c.l.b16 %v688
      %v780 = vunpack.c.h.b16 %v688
      %v781 = vunpack.c.l.b16 %v689
      %v782 = vunpack.c.l.b16 %v690
      %v783 = vunpack.c.h.b16 %v690
      %v784 = vunpack.c.l.b16 %v691
      %v785 = vunpack.c.l.b16 %v692
      %v786 = vunpack.c.h.b16 %v692
      %v787 = vunpack.c.l.b16 %v693
      %v788 = vunpack.c.l.b16 %v694
      %v789 = vunpack.c.h.b16 %v694
      %v790 = vunpack.c.l.b16 %v695
      %v791 = vunpack.c.l.b16 %v696
      %v792 = vunpack.c.h.b16 %v696
      %v793 = vunpack.c.l.b16 %v697
      %v794 = vunpack.c.l.b16 %v698
      %v795 = vunpack.c.h.b16 %v698
      %v796 = vunpack.c.l.b16 %v699
      %v797 = vunpack.c.l.b16 %v700
      %v798 = vunpack.c.h.b16 %v700
      %v799 = vunpack.c.l.b16 %v701
      %v800 = vunpack.c.l.b16 %v702
      %v801 = vunpack.c.h.b16 %v702
      %v802 = vunpack.c.l.b16 %v703
      %v803 = vpack.c.b16 %v752, %v749
      %v804 = vpack.c.b16 %v753, %v750
      %v805 = vpack.c.b16 %v754, %v751
      %v806 = vpack.c.b16 %v758, %v755
      %v807 = vpack.c.b16 %v759, %v756
      %v808 = vpack.c.b16 %v760, %v757
      %v809 = vpack.c.b16 %v764, %v761
      %v810 = vpack.c.b16 %v765, %v762
      %v811 = vpack.c.b16 %v766, %v763
      %v812 = vpack.c.b16 %v770, %v767
      %v813 = vpack.c.b16 %v771, %v768
      %v814 = vpack.c.b16 %v772, %v769
      %v815 = vpack.c.b16 %v776, %v773
      %v816 = vpack.c.b16 %v777, %v774
      %v817 = vpack.c.b16 %v778, %v775
      %v818 = vpack.c.b16 %v782, %v779
      %v819 = vpack.c.b16 %v783, %v780
      %v820 = vpack.c.b16 %v784, %v781
      %v821 = vpack.c.b16 %v788, %v785
      %v822 = vpack.c.b16 %v789, %v786
      %v823 = vpack.c.b16 %v790, %v787
      %v824 = vpack.c.b16 %v794, %v791
      %v825 = vpack.c.b16 %v795, %v792
      %v826 = vpack.c.b16 %v796, %v793
      %v827 = vpack.c.b16 %v800, %v797
      %v828 = vpack.c.b16 %v801, %v798
      %v829 = vpack.c.b16 %v802, %v799
      %vm857 = vcmask 130048
      %v859 = vsel %vm857, %v711, 0
      %861 = vmatpush.bf16.msra.mxu0 %v824
      %862 = vmatpush.bf16.msra.mxu0 %v821
      %863 = vmatpush.bf16.msra.mxu0 %v818
      %864 = vmatpush.bf16.msra.mxu0 %v815
      %865 = vmatpush.bf16.msra.mxu0 %v812
      %866 = vmatpush.bf16.msra.mxu0 %v809
      %867 = vmatpush.bf16.msra.mxu0 %v806
      %868 = vmatpush.bf16.msra.mxu0 %v803
      %869 = vmatmul.bf16.gmra.mxu0 %v710
      %v870 = vpop.f32.mrf.mxu0
      %v871 = vadd.f32 0.0, %v870
      %v872 = vpop.f32.mrf.mxu0
      %v873 = vadd.f32 0.0, %v872
      %874 = vdwg.mxu0
      %875 = vmatpush.bf16.msra.mxu0 0
      %876 = vmatpush.bf16.msra.mxu0 0
      %877 = vmatpush.bf16.msra.mxu0 0
      %878 = vmatpush.bf16.msra.mxu0 0
      %879 = vmatpush.bf16.msra.mxu0 0
      %880 = vmatpush.bf16.msra.mxu0 0
      %881 = vmatpush.bf16.msra.mxu0 0
      %882 = vmatpush.bf16.msra.mxu0 %v827
      %883 = vmatmul.bf16.gmra.mxu0 %v859
      %v884 = vpop.f32.mrf.mxu0
      %v885 = vadd.f32 %v871, %v884
      %v886 = vpop.f32.mrf.mxu0
      %v887 = vadd.f32 %v873, %v886
      %888 = vdwg.mxu0
      %889 = vmatpush.bf16.msra.mxu0 %v825
      %890 = vmatpush.bf16.msra.mxu0 %v822
      %891 = vmatpush.bf16.msra.mxu0 %v819
      %892 = vmatpush.bf16.msra.mxu0 %v816
      %893 = vmatpush.bf16.msra.mxu0 %v813
      %894 = vmatpush.bf16.msra.mxu0 %v810
      %895 = vmatpush.bf16.msra.mxu0 %v807
      %896 = vmatpush.bf16.msra.mxu0 %v804
      %897 = vmatmul.bf16.gmra.mxu0 %v710
      %v898 = vpop.f32.mrf.mxu0
      %v899 = vadd.f32 0.0, %v898
      %v900 = vpop.f32.mrf.mxu0
      %v901 = vadd.f32 0.0, %v900
      %902 = vdwg.mxu0
      %903 = vmatpush.bf16.msra.mxu0 0
      %904 = vmatpush.bf16.msra.mxu0 0
      %905 = vmatpush.bf16.msra.mxu0 0
      %906 = vmatpush.bf16.msra.mxu0 0
      %907 = vmatpush.bf16.msra.mxu0 0
      %908 = vmatpush.bf16.msra.mxu0 0
      %909 = vmatpush.bf16.msra.mxu0 0
      %910 = vmatpush.bf16.msra.mxu0 %v828
      %911 = vmatmul.bf16.gmra.mxu0 %v859
      %v912 = vpop.f32.mrf.mxu0
      %v913 = vadd.f32 %v899, %v912
      %v914 = vpop.f32.mrf.mxu0
      %v915 = vadd.f32 %v901, %v914
      %916 = vdwg.mxu0
      %917 = vmatpush.bf16.msra.mxu0 %v826
      %918 = vmatpush.bf16.msra.mxu0 %v823
      %919 = vmatpush.bf16.msra.mxu0 %v820
      %920 = vmatpush.bf16.msra.mxu0 %v817
      %921 = vmatpush.bf16.msra.mxu0 %v814
      %922 = vmatpush.bf16.msra.mxu0 %v811
      %923 = vmatpush.bf16.msra.mxu0 %v808
      %924 = vmatpush.bf16.msra.mxu0 %v805
      %925 = vmatmul.bf16.gmra.mxu0 %v710
      %v926 = vpop.f32.mrf.mxu0
      %v927 = vadd.f32 0.0, %v926
      %v928 = vpop.f32.mrf.mxu0
      %v929 = vadd.f32 0.0, %v928
      %930 = vdwg.mxu0
      %931 = vmatpush.bf16.msra.mxu0 0
      %932 = vmatpush.bf16.msra.mxu0 0
      %933 = vmatpush.bf16.msra.mxu0 0
      %934 = vmatpush.bf16.msra.mxu0 0
      %935 = vmatpush.bf16.msra.mxu0 0
      %936 = vmatpush.bf16.msra.mxu0 0
      %937 = vmatpush.bf16.msra.mxu0 0
      %938 = vmatpush.bf16.msra.mxu0 %v829
      %939 = vmatmul.bf16.gmra.mxu0 %v859
      %v940 = vpop.f32.mrf.mxu0
      %v941 = vadd.f32 %v927, %v940
      %v942 = vpop.f32.mrf.mxu0
      %v943 = vadd.f32 %v929, %v942
      %944 = vdwg.mxu0
      %946 = vset.pattern.permute.xlu0 0
      %947 = vperm.xlu0 %946, %v364
      %v948 = vpop.permute.xlu0 %947
      %951 = vset.pattern.permute.xlu0 0
      %952 = vperm.xlu0 %951, %v365
      %v953 = vpop.permute.xlu0 %952
      %v955 = vmul.f32 %v885, %v948
      %v956 = vmul.f32 %v913, %v948
      %v957 = vmul.f32 %v941, %v948
      %v958 = vmul.f32 %v887, %v953
      %v959 = vmul.f32 %v915, %v953
      %v960 = vmul.f32 %v943, %v953
      %962 = vset.pattern.permute.xlu0 0
      %963 = vperm.xlu0 %962, %v366
      %v964 = vpop.permute.xlu0 %963
      %967 = vset.pattern.permute.xlu0 0
      %968 = vperm.xlu0 %967, %v367
      %v969 = vpop.permute.xlu0 %968
      %v971 = vadd.f32 %v955, %v964
      %v972 = vadd.f32 %v956, %v964
      %v973 = vadd.f32 %v957, %v964
      %v974 = vadd.f32 %v958, %v969
      %v975 = vadd.f32 %v959, %v969
      %v976 = vadd.f32 %v960, %v969
      %v977 = vmax.f32 %v971, 0.0
      %v978 = vmax.f32 %v972, 0.0
      %v979 = vmax.f32 %v973, 0.0
      %v980 = vmax.f32 %v974, 0.0
      %v981 = vmax.f32 %v975, 0.0
      %v982 = vmax.f32 %v976, 0.0
      %v984 = vperm.slane %v368, 0
      %v985 = vperm.slane %v368, 1
      %v986 = vperm.slane %v368, 2
      %v990 = vmul.f32 %v977, %v984
      %v991 = vmul.f32 %v978, %v985
      %v992 = vmul.f32 %v979, %v986
      %v993 = vmul.f32 %v980, %v984
      %v994 = vmul.f32 %v981, %v985
      %v995 = vmul.f32 %v982, %v986
      %996 = vst [vmem:[#allocation2] sm:$0xff] %v990
      %997 = vst [vmem:[#allocation2 + $0x8] sm:$0xff] %v991
      %998 = vst.msk [vmem:[#allocation2 + $0x10] sm:$0xff] %vm339, %v992
      %999 = vst [vmem:[#allocation2 + $0x18] sm:$0xff] %v993
      %1000 = vst [vmem:[#allocation2 + $0x20] sm:$0xff] %v994
      %1001 = vst.msk [vmem:[#allocation2 + $0x28] sm:$0xff] %vm339, %v995
      %v1002 = vld [vmem:[%s5] sm:$0xff]
      %v1003 = vld [vmem:[%s5 + $0x8] sm:$0xff]
      %v1004 = vld [vmem:[%s5 + $0x10] sm:$0xff]
      %v1005 = vld [vmem:[%s5 + $0x18] sm:$0xff]
      %v1006 = vld [vmem:[%s6] sm:$0xff]
      %v1007 = vld [vmem:[%s6 + $0x8] sm:$0xff]
      %v1008 = vld [vmem:[%s6 + $0x10] sm:$0xff]
      %v1009 = vld [vmem:[%s6 + $0x18] sm:$0xff]
      %v1010 = vld [vmem:[#allocation2] sm:$0xff]
      %v1011 = vld [vmem:[#allocation2 + $0x8] sm:$0xff]
      %v1012 = vld [vmem:[#allocation2 + $0x10] sm:$0xff]
      %v1013 = vld [vmem:[#allocation2 + $0x18] sm:$0xff]
      %v1014 = vld [vmem:[#allocation2 + $0x20] sm:$0xff]
      %v1015 = vld [vmem:[#allocation2 + $0x28] sm:$0xff]
      %v1016 = vpack.c.bf16 %v1011, %v1010
      %v1017 = vpack.c.bf16 %v1012, %v1012
      %v1018 = vpack.c.bf16 %v1014, %v1013
      %v1019 = vpack.c.bf16 %v1015, %v1015
      %v1022 = vunpack.c.l.b16 %v1017
      %v1023 = vunpack.c.l.b16 %v1019
      %v1024 = vpack.c.b16 %v1023, %v1022
      %1025 = vrot.lane.b32.xlu0 %v1024, 79
      %v1026 = vpop.permute.xlu0 %1025
      %v1029 = vunpack.c.l.b16 %v1016
      %v1030 = vunpack.c.h.b16 %v1016
      %v1031 = vunpack.c.l.b16 %v1018
      %v1032 = vunpack.c.h.b16 %v1018
      %v1033 = vpack.c.b16 %v1031, %v1029
      %v1034 = vpack.c.b16 %v1032, %v1030
      %1035 = vrot.lane.b32.xlu0 %v1033, 19
      %v1036 = vpop.permute.xlu0 %1035
      %1037 = vrot.lane.b32.xlu0 %v1034, 19
      %v1038 = vpop.permute.xlu0 %1037
      %1039 = vrot.lane.b32.xlu0 %v1024, 19
      %v1040 = vpop.permute.xlu0 %1039
      %v1041 = vsel %vm400, %v1036, %v1038
      %v1042 = vsel %vm400, %v1038, %v1040
      %v1045 = vsel %vm403, %v1026, %v1036
      %v1047 = vunpack.c.l.b16 %v1045
      %v1048 = vunpack.c.l.b16 %v1041
      %v1049 = vunpack.c.l.b16 %v1042
      %v1050 = vunpack.c.h.b16 %v1045
      %v1051 = vunpack.c.h.b16 %v1041
      %v1052 = vunpack.c.h.b16 %v1042
      %v1053 = vpack.c.b16 %v1048, %v1047
      %v1054 = vpack.c.b16 %v1049, %v1049
      %v1055 = vpack.c.b16 %v1051, %v1050
      %v1056 = vpack.c.b16 %v1052, %v1052
      %1061 = vst [vmem:[#allocation3] sm:$0xff] %v1053
      %1062 = vst.msk [vmem:[#allocation3 + $0x8] sm:$0xf] %vm360, %v1054
      %1063 = vst [vmem:[#allocation3 + $0xc] sm:$0xff] %v1055
      %1064 = vst.msk [vmem:[#allocation3 + $0x14] sm:$0xf] %vm360, %v1056
      %1065 = vrot.lane.b32.xlu0 %v1024, 78
      %v1066 = vpop.permute.xlu0 %1065
      %1067 = vrot.lane.b32.xlu0 %v1033, 18
      %v1068 = vpop.permute.xlu0 %1067
      %1069 = vrot.lane.b32.xlu0 %v1034, 18
      %v1070 = vpop.permute.xlu0 %1069
      %1071 = vrot.lane.b32.xlu0 %v1024, 18
      %v1072 = vpop.permute.xlu0 %1071
      %v1073 = vsel %vm434, %v1068, %v1070
      %v1074 = vsel %vm434, %v1070, %v1072
      %v1077 = vsel %vm437, %v1066, %v1068
      %v1079 = vunpack.c.l.b16 %v1077
      %v1080 = vunpack.c.l.b16 %v1073
      %v1081 = vunpack.c.l.b16 %v1074
      %v1082 = vunpack.c.h.b16 %v1077
      %v1083 = vunpack.c.h.b16 %v1073
      %v1084 = vunpack.c.h.b16 %v1074
      %v1085 = vpack.c.b16 %v1080, %v1079
      %v1086 = vpack.c.b16 %v1081, %v1081
      %v1087 = vpack.c.b16 %v1083, %v1082
      %v1088 = vpack.c.b16 %v1084, %v1084
      %1093 = vst [vmem:[#allocation3 + $0x18] sm:$0xff] %v1085
      %1094 = vst.msk [vmem:[#allocation3 + $0x20] sm:$0xf] %vm360, %v1086
      %1095 = vst [vmem:[#allocation3 + $0x24] sm:$0xff] %v1087
      %1096 = vst.msk [vmem:[#allocation3 + $0x2c] sm:$0xf] %vm360, %v1088
      %1097 = vrot.lane.b32.xlu0 %v1024, 77
      %v1098 = vpop.permute.xlu0 %1097
      %1099 = vrot.lane.b32.xlu0 %v1033, 17
      %v1100 = vpop.permute.xlu0 %1099
      %1101 = vrot.lane.b32.xlu0 %v1034, 17
      %v1102 = vpop.permute.xlu0 %1101
      %1103 = vrot.lane.b32.xlu0 %v1024, 17
      %v1104 = vpop.permute.xlu0 %1103
      %v1105 = vsel %vm468, %v1100, %v1102
      %v1106 = vsel %vm468, %v1102, %v1104
      %v1109 = vsel %vm471, %v1098, %v1100
      %v1111 = vunpack.c.l.b16 %v1109
      %v1112 = vunpack.c.l.b16 %v1105
      %v1113 = vunpack.c.l.b16 %v1106
      %v1114 = vunpack.c.h.b16 %v1109
      %v1115 = vunpack.c.h.b16 %v1105
      %v1116 = vunpack.c.h.b16 %v1106
      %v1117 = vpack.c.b16 %v1112, %v1111
      %v1118 = vpack.c.b16 %v1113, %v1113
      %v1119 = vpack.c.b16 %v1115, %v1114
      %v1120 = vpack.c.b16 %v1116, %v1116
      %1125 = vst [vmem:[#allocation3 + $0x30] sm:$0xff] %v1117
      %1126 = vst.msk [vmem:[#allocation3 + $0x38] sm:$0xf] %vm360, %v1118
      %1127 = vst [vmem:[#allocation3 + $0x3c] sm:$0xff] %v1119
      %1128 = vst.msk [vmem:[#allocation3 + $0x44] sm:$0xf] %vm360, %v1120
      %1129 = vrot.lane.b32.xlu0 %v1024, 61
      %v1130 = vpop.permute.xlu0 %1129
      %1131 = vrot.lane.b32.xlu0 %v1033, 1
      %v1132 = vpop.permute.xlu0 %1131
      %1133 = vrot.lane.b32.xlu0 %v1034, 1
      %v1134 = vpop.permute.xlu0 %1133
      %1135 = vrot.lane.b32.xlu0 %v1024, 1
      %v1136 = vpop.permute.xlu0 %1135
      %v1137 = vsel %vm502, %v1132, %v1134
      %v1138 = vsel %vm502, %v1134, %v1136
      %v1141 = vsel %vm505, %v1130, %v1132
      %v1143 = vunpack.c.l.b16 %v1141
      %v1144 = vunpack.c.l.b16 %v1137
      %v1145 = vunpack.c.l.b16 %v1138
      %v1146 = vunpack.c.h.b16 %v1141
      %v1147 = vunpack.c.h.b16 %v1137
      %v1148 = vunpack.c.h.b16 %v1138
      %v1149 = vpack.c.b16 %v1144, %v1143
      %v1150 = vpack.c.b16 %v1145, %v1145
      %v1151 = vpack.c.b16 %v1147, %v1146
      %v1152 = vpack.c.b16 %v1148, %v1148
      %1157 = vst [vmem:[#allocation3 + $0x48] sm:$0xff] %v1149
      %1158 = vst.msk [vmem:[#allocation3 + $0x50] sm:$0xf] %vm360, %v1150
      %1159 = vst [vmem:[#allocation3 + $0x54] sm:$0xff] %v1151
      %1160 = vst.msk [vmem:[#allocation3 + $0x5c] sm:$0xf] %vm360, %v1152
      %1161 = vst [vmem:[#allocation3 + $0x60] sm:$0xff] %v1016
      %1162 = vst.msk [vmem:[#allocation3 + $0x68] sm:$0xf] %vm360, %v1017
      %1163 = vst [vmem:[#allocation3 + $0x6c] sm:$0xff] %v1018
      %1164 = vst.msk [vmem:[#allocation3 + $0x74] sm:$0xf] %vm360, %v1019
      %1165 = vrot.lane.b32.xlu0 %v1033, 127
      %v1166 = vpop.permute.xlu0 %1165
      %1167 = vrot.lane.b32.xlu0 %v1034, 127
      %v1168 = vpop.permute.xlu0 %1167
      %1169 = vrot.lane.b32.xlu0 %v1024, 127
      %v1170 = vpop.permute.xlu0 %1169
      %v1171 = vsel %vm538, %v1166, %v1168
      %v1172 = vsel %vm538, %v1168, %v1170
      %1173 = vrot.lane.b32.xlu0 %v1033, 67
      %v1174 = vpop.permute.xlu0 %1173
      %v1177 = vsel %vm543, %v1170, %v1174
      %v1179 = vunpack.c.l.b16 %v1171
      %v1180 = vunpack.c.l.b16 %v1172
      %v1181 = vunpack.c.l.b16 %v1177
      %v1182 = vunpack.c.h.b16 %v1171
      %v1183 = vunpack.c.h.b16 %v1172
      %v1184 = vunpack.c.h.b16 %v1177
      %v1185 = vpack.c.b16 %v1180, %v1179
      %v1186 = vpack.c.b16 %v1181, %v1181
      %v1187 = vpack.c.b16 %v1183, %v1182
      %v1188 = vpack.c.b16 %v1184, %v1184
      %1193 = vst [vmem:[#allocation3 + $0x78] sm:$0xff] %v1185
      %1194 = vst.msk [vmem:[#allocation3 + $0x80] sm:$0xf] %vm360, %v1186
      %1195 = vst [vmem:[#allocation3 + $0x84] sm:$0xff] %v1187
      %1196 = vst.msk [vmem:[#allocation3 + $0x8c] sm:$0xf] %vm360, %v1188
      %1197 = vrot.lane.b32.xlu0 %v1033, 111
      %v1198 = vpop.permute.xlu0 %1197
      %1199 = vrot.lane.b32.xlu0 %v1034, 111
      %v1200 = vpop.permute.xlu0 %1199
      %1201 = vrot.lane.b32.xlu0 %v1024, 111
      %v1202 = vpop.permute.xlu0 %1201
      %v1203 = vsel %vm572, %v1198, %v1200
      %v1204 = vsel %vm572, %v1200, %v1202
      %1205 = vrot.lane.b32.xlu0 %v1033, 51
      %v1206 = vpop.permute.xlu0 %1205
      %v1209 = vsel %vm577, %v1202, %v1206
      %v1211 = vunpack.c.l.b16 %v1203
      %v1212 = vunpack.c.l.b16 %v1204
      %v1213 = vunpack.c.l.b16 %v1209
      %v1214 = vunpack.c.h.b16 %v1203
      %v1215 = vunpack.c.h.b16 %v1204
      %v1216 = vunpack.c.h.b16 %v1209
      %v1217 = vpack.c.b16 %v1212, %v1211
      %v1218 = vpack.c.b16 %v1213, %v1213
      %v1219 = vpack.c.b16 %v1215, %v1214
      %v1220 = vpack.c.b16 %v1216, %v1216
      %1225 = vst [vmem:[#allocation3 + $0x90] sm:$0xff] %v1217
      %1226 = vst.msk [vmem:[#allocation3 + $0x98] sm:$0xf] %vm360, %v1218
      %1227 = vst [vmem:[#allocation3 + $0x9c] sm:$0xff] %v1219
      %1228 = vst.msk [vmem:[#allocation3 + $0xa4] sm:$0xf] %vm360, %v1220
      %1229 = vrot.lane.b32.xlu0 %v1033, 110
      %v1230 = vpop.permute.xlu0 %1229
      %1231 = vrot.lane.b32.xlu0 %v1034, 110
      %v1232 = vpop.permute.xlu0 %1231
      %1233 = vrot.lane.b32.xlu0 %v1024, 110
      %v1234 = vpop.permute.xlu0 %1233
      %v1235 = vsel %vm606, %v1230, %v1232
      %v1236 = vsel %vm606, %v1232, %v1234
      %1237 = vrot.lane.b32.xlu0 %v1033, 50
      %v1238 = vpop.permute.xlu0 %1237
      %v1241 = vsel %vm611, %v1234, %v1238
      %v1243 = vunpack.c.l.b16 %v1235
      %v1244 = vunpack.c.l.b16 %v1236
      %v1245 = vunpack.c.l.b16 %v1241
      %v1246 = vunpack.c.h.b16 %v1235
      %v1247 = vunpack.c.h.b16 %v1236
      %v1248 = vunpack.c.h.b16 %v1241
      %v1249 = vpack.c.b16 %v1244, %v1243
      %v1250 = vpack.c.b16 %v1245, %v1245
      %v1251 = vpack.c.b16 %v1247, %v1246
      %v1252 = vpack.c.b16 %v1248, %v1248
      %1257 = vst [vmem:[#allocation3 + $0xa8] sm:$0xff] %v1249
      %1258 = vst.msk [vmem:[#allocation3 + $0xb0] sm:$0xf] %vm360, %v1250
      %1259 = vst [vmem:[#allocation3 + $0xb4] sm:$0xff] %v1251
      %1260 = vst.msk [vmem:[#allocation3 + $0xbc] sm:$0xf] %vm360, %v1252
      %1261 = vrot.lane.b32.xlu0 %v1033, 109
      %v1262 = vpop.permute.xlu0 %1261
      %1263 = vrot.lane.b32.xlu0 %v1034, 109
      %v1264 = vpop.permute.xlu0 %1263
      %1265 = vrot.lane.b32.xlu0 %v1024, 109
      %v1266 = vpop.permute.xlu0 %1265
      %v1267 = vsel %vm640, %v1262, %v1264
      %v1268 = vsel %vm640, %v1264, %v1266
      %1269 = vrot.lane.b32.xlu0 %v1033, 49
      %v1270 = vpop.permute.xlu0 %1269
      %v1273 = vsel %vm645, %v1266, %v1270
      %v1275 = vunpack.c.l.b16 %v1267
      %v1276 = vunpack.c.l.b16 %v1268
      %v1277 = vunpack.c.l.b16 %v1273
      %v1278 = vunpack.c.h.b16 %v1267
      %v1279 = vunpack.c.h.b16 %v1268
      %v1280 = vunpack.c.h.b16 %v1273
      %v1281 = vpack.c.b16 %v1276, %v1275
      %v1282 = vpack.c.b16 %v1277, %v1277
      %v1283 = vpack.c.b16 %v1279, %v1278
      %v1284 = vpack.c.b16 %v1280, %v1280
      %1289 = vst [vmem:[#allocation3 + $0xc0] sm:$0xff] %v1281
      %1290 = vst.msk [vmem:[#allocation3 + $0xc8] sm:$0xf] %vm360, %v1282
      %1291 = vst [vmem:[#allocation3 + $0xcc] sm:$0xff] %v1283
      %1292 = vst.msk [vmem:[#allocation3 + $0xd4] sm:$0xf] %vm360, %v1284
      %v1293 = vld [vmem:[#allocation3] sm:$0xff]
      %v1294 = vld [vmem:[#allocation3 + $0x8] sm:$0xf]
      %v1295 = vld [vmem:[#allocation3 + $0xc] sm:$0xff]
      %v1296 = vld [vmem:[#allocation3 + $0x14] sm:$0xf]
      %v1297 = vld [vmem:[#allocation3 + $0x18] sm:$0xff]
      %v1298 = vld [vmem:[#allocation3 + $0x20] sm:$0xf]
      %v1299 = vld [vmem:[#allocation3 + $0x24] sm:$0xff]
      %v1300 = vld [vmem:[#allocation3 + $0x2c] sm:$0xf]
      %v1301 = vld [vmem:[#allocation3 + $0x30] sm:$0xff]
      %v1302 = vld [vmem:[#allocation3 + $0x38] sm:$0xf]
      %v1303 = vld [vmem:[#allocation3 + $0x3c] sm:$0xff]
      %v1304 = vld [vmem:[#allocation3 + $0x44] sm:$0xf]
      %v1305 = vld [vmem:[#allocation3 + $0x48] sm:$0xff]
      %v1306 = vld [vmem:[#allocation3 + $0x50] sm:$0xf]
      %v1307 = vld [vmem:[#allocation3 + $0x54] sm:$0xff]
      %v1308 = vld [vmem:[#allocation3 + $0x5c] sm:$0xf]
      %v1309 = vld [vmem:[#allocation3 + $0x60] sm:$0xff]
      %v1310 = vld [vmem:[#allocation3 + $0x68] sm:$0xf]
      %v1311 = vld [vmem:[#allocation3 + $0x6c] sm:$0xff]
      %v1312 = vld [vmem:[#allocation3 + $0x74] sm:$0xf]
      %v1313 = vld [vmem:[#allocation3 + $0x78] sm:$0xff]
      %v1314 = vld [vmem:[#allocation3 + $0x80] sm:$0xf]
      %v1315 = vld [vmem:[#allocation3 + $0x84] sm:$0xff]
      %v1316 = vld [vmem:[#allocation3 + $0x8c] sm:$0xf]
      %v1317 = vld [vmem:[#allocation3 + $0x90] sm:$0xff]
      %v1318 = vld [vmem:[#allocation3 + $0x98] sm:$0xf]
      %v1319 = vld [vmem:[#allocation3 + $0x9c] sm:$0xff]
      %v1320 = vld [vmem:[#allocation3 + $0xa4] sm:$0xf]
      %v1321 = vld [vmem:[#allocation3 + $0xa8] sm:$0xff]
      %v1322 = vld [vmem:[#allocation3 + $0xb0] sm:$0xf]
      %v1323 = vld [vmem:[#allocation3 + $0xb4] sm:$0xff]
      %v1324 = vld [vmem:[#allocation3 + $0xbc] sm:$0xf]
      %v1325 = vld [vmem:[#allocation3 + $0xc0] sm:$0xff]
      %v1326 = vld [vmem:[#allocation3 + $0xc8] sm:$0xf]
      %v1327 = vld [vmem:[#allocation3 + $0xcc] sm:$0xff]
      %v1328 = vld [vmem:[#allocation3 + $0xd4] sm:$0xf]
      %1330 = vset.pattern.permute.xlu0 0
      %1331 = vperm.xlu0 %1330, %v1006
      %v1332 = vpop.permute.xlu0 %1331
      %1335 = vset.pattern.permute.xlu0 0
      %1336 = vperm.xlu0 %1335, %v1007
      %v1337 = vpop.permute.xlu0 %1336
      %1340 = vset.pattern.permute.xlu0 0
      %1341 = vperm.xlu0 %1340, %v1008
      %v1342 = vpop.permute.xlu0 %1341
      %1345 = vset.pattern.permute.xlu0 0
      %1346 = vperm.xlu0 %1345, %v1009
      %v1347 = vpop.permute.xlu0 %1346
      %v1353 = vunpack.c.l.b16 %v1002
      %v1354 = vunpack.c.h.b16 %v1002
      %v1355 = vunpack.c.l.b16 %v1003
      %v1356 = vunpack.c.h.b16 %v1003
      %v1357 = vunpack.c.l.b16 %v1004
      %v1358 = vunpack.c.h.b16 %v1004
      %v1359 = vunpack.c.l.b16 %v1005
      %v1360 = vunpack.c.h.b16 %v1005
      %v1361 = vpack.c.b16 %v1355, %v1353
      %v1362 = vpack.c.b16 %v1356, %v1354
      %v1363 = vpack.c.b16 %v1359, %v1357
      %v1364 = vpack.c.b16 %v1360, %v1358
      %v1403 = vunpack.c.l.b16 %v1293
      %v1404 = vunpack.c.h.b16 %v1293
      %v1405 = vunpack.c.l.b16 %v1294
      %v1406 = vunpack.c.l.b16 %v1295
      %v1407 = vunpack.c.h.b16 %v1295
      %v1408 = vunpack.c.l.b16 %v1296
      %v1409 = vunpack.c.l.b16 %v1297
      %v1410 = vunpack.c.h.b16 %v1297
      %v1411 = vunpack.c.l.b16 %v1298
      %v1412 = vunpack.c.l.b16 %v1299
      %v1413 = vunpack.c.h.b16 %v1299
      %v1414 = vunpack.c.l.b16 %v1300
      %v1415 = vunpack.c.l.b16 %v1301
      %v1416 = vunpack.c.h.b16 %v1301
      %v1417 = vunpack.c.l.b16 %v1302
      %v1418 = vunpack.c.l.b16 %v1303
      %v1419 = vunpack.c.h.b16 %v1303
      %v1420 = vunpack.c.l.b16 %v1304
      %v1421 = vunpack.c.l.b16 %v1305
      %v1422 = vunpack.c.h.b16 %v1305
      %v1423 = vunpack.c.l.b16 %v1306
      %v1424 = vunpack.c.l.b16 %v1307
      %v1425 = vunpack.c.h.b16 %v1307
      %v1426 = vunpack.c.l.b16 %v1308
      %v1427 = vunpack.c.l.b16 %v1309
      %v1428 = vunpack.c.h.b16 %v1309
      %v1429 = vunpack.c.l.b16 %v1310
      %v1430 = vunpack.c.l.b16 %v1311
      %v1431 = vunpack.c.h.b16 %v1311
      %v1432 = vunpack.c.l.b16 %v1312
      %v1433 = vunpack.c.l.b16 %v1313
      %v1434 = vunpack.c.h.b16 %v1313
      %v1435 = vunpack.c.l.b16 %v1314
      %v1436 = vunpack.c.l.b16 %v1315
      %v1437 = vunpack.c.h.b16 %v1315
      %v1438 = vunpack.c.l.b16 %v1316
      %v1439 = vunpack.c.l.b16 %v1317
      %v1440 = vunpack.c.h.b16 %v1317
      %v1441 = vunpack.c.l.b16 %v1318
      %v1442 = vunpack.c.l.b16 %v1319
      %v1443 = vunpack.c.h.b16 %v1319
      %v1444 = vunpack.c.l.b16 %v1320
      %v1445 = vunpack.c.l.b16 %v1321
      %v1446 = vunpack.c.h.b16 %v1321
      %v1447 = vunpack.c.l.b16 %v1322
      %v1448 = vunpack.c.l.b16 %v1323
      %v1449 = vunpack.c.h.b16 %v1323
      %v1450 = vunpack.c.l.b16 %v1324
      %v1451 = vunpack.c.l.b16 %v1325
      %v1452 = vunpack.c.h.b16 %v1325
      %v1453 = vunpack.c.l.b16 %v1326
      %v1454 = vunpack.c.l.b16 %v1327
      %v1455 = vunpack.c.h.b16 %v1327
      %v1456 = vunpack.c.l.b16 %v1328
      %v1457 = vpack.c.b16 %v1406, %v1403
      %v1458 = vpack.c.b16 %v1407, %v1404
      %v1459 = vpack.c.b16 %v1408, %v1405
      %v1460 = vpack.c.b16 %v1412, %v1409
      %v1461 = vpack.c.b16 %v1413, %v1410
      %v1462 = vpack.c.b16 %v1414, %v1411
      %v1463 = vpack.c.b16 %v1418, %v1415
      %v1464 = vpack.c.b16 %v1419, %v1416
      %v1465 = vpack.c.b16 %v1420, %v1417
      %v1466 = vpack.c.b16 %v1424, %v1421
      %v1467 = vpack.c.b16 %v1425, %v1422
      %v1468 = vpack.c.b16 %v1426, %v1423
      %v1469 = vpack.c.b16 %v1430, %v1427
      %v1470 = vpack.c.b16 %v1431, %v1428
      %v1471 = vpack.c.b16 %v1432, %v1429
      %v1472 = vpack.c.b16 %v1436, %v1433
      %v1473 = vpack.c.b16 %v1437, %v1434
      %v1474 = vpack.c.b16 %v1438, %v1435
      %v1475 = vpack.c.b16 %v1442, %v1439
      %v1476 = vpack.c.b16 %v1443, %v1440
      %v1477 = vpack.c.b16 %v1444, %v1441
      %v1478 = vpack.c.b16 %v1448, %v1445
      %v1479 = vpack.c.b16 %v1449, %v1446
      %v1480 = vpack.c.b16 %v1450, %v1447
      %v1481 = vpack.c.b16 %v1454, %v1451
      %v1482 = vpack.c.b16 %v1455, %v1452
      %v1483 = vpack.c.b16 %v1456, %v1453
      %v1512 = vsel %vm857, %v1362, 0
      %v1515 = vsel %vm857, %v1364, 0
      %1517 = vmatpush.bf16.msra.mxu0 %v1478
      %1518 = vmatpush.bf16.msra.mxu0 %v1475
      %1519 = vmatpush.bf16.msra.mxu0 %v1472
      %1520 = vmatpush.bf16.msra.mxu0 %v1469
      %1521 = vmatpush.bf16.msra.mxu0 %v1466
      %1522 = vmatpush.bf16.msra.mxu0 %v1463
      %1523 = vmatpush.bf16.msra.mxu0 %v1460
      %1524 = vmatpush.bf16.msra.mxu0 %v1457
      %1525 = vmatmul.bf16.gmra.mxu0 %v1361
      %v1526 = vpop.f32.mrf.mxu0
      %v1527 = vadd.f32 %v1332, %v1526
      %v1528 = vpop.f32.mrf.mxu0
      %v1529 = vadd.f32 %v1337, %v1528
      %1530 = vmatmul.bf16.gmra.mxu0 %v1363
      %v1531 = vpop.f32.mrf.mxu0
      %v1532 = vadd.f32 %v1342, %v1531
      %v1533 = vpop.f32.mrf.mxu0
      %v1534 = vadd.f32 %v1347, %v1533
      %1535 = vdwg.mxu0
      %1536 = vmatpush.bf16.msra.mxu0 0
      %1537 = vmatpush.bf16.msra.mxu0 0
      %1538 = vmatpush.bf16.msra.mxu0 0
      %1539 = vmatpush.bf16.msra.mxu0 0
      %1540 = vmatpush.bf16.msra.mxu0 0
      %1541 = vmatpush.bf16.msra.mxu0 0
      %1542 = vmatpush.bf16.msra.mxu0 0
      %1543 = vmatpush.bf16.msra.mxu0 %v1481
      %1544 = vmatmul.bf16.gmra.mxu0 %v1512
      %v1545 = vpop.f32.mrf.mxu0
      %v1546 = vadd.f32 %v1527, %v1545
      %v1547 = vpop.f32.mrf.mxu0
      %v1548 = vadd.f32 %v1529, %v1547
      %1549 = vmatmul.bf16.gmra.mxu0 %v1515
      %v1550 = vpop.f32.mrf.mxu0
      %v1551 = vadd.f32 %v1532, %v1550
      %v1552 = vpop.f32.mrf.mxu0
      %v1553 = vadd.f32 %v1534, %v1552
      %1554 = vdwg.mxu0
      %1555 = vmatpush.bf16.msra.mxu0 %v1479
      %1556 = vmatpush.bf16.msra.mxu0 %v1476
      %1557 = vmatpush.bf16.msra.mxu0 %v1473
      %1558 = vmatpush.bf16.msra.mxu0 %v1470
      %1559 = vmatpush.bf16.msra.mxu0 %v1467
      %1560 = vmatpush.bf16.msra.mxu0 %v1464
      %1561 = vmatpush.bf16.msra.mxu0 %v1461
      %1562 = vmatpush.bf16.msra.mxu0 %v1458
      %1563 = vmatmul.bf16.gmra.mxu0 %v1361
      %v1564 = vpop.f32.mrf.mxu0
      %v1565 = vadd.f32 %v1332, %v1564
      %v1566 = vpop.f32.mrf.mxu0
      %v1567 = vadd.f32 %v1337, %v1566
      %1568 = vmatmul.bf16.gmra.mxu0 %v1363
      %v1569 = vpop.f32.mrf.mxu0
      %v1570 = vadd.f32 %v1342, %v1569
      %v1571 = vpop.f32.mrf.mxu0
      %v1572 = vadd.f32 %v1347, %v1571
      %1573 = vdwg.mxu0
      %1574 = vmatpush.bf16.msra.mxu0 0
      %1575 = vmatpush.bf16.msra.mxu0 0
      %1576 = vmatpush.bf16.msra.mxu0 0
      %1577 = vmatpush.bf16.msra.mxu0 0
      %1578 = vmatpush.bf16.msra.mxu0 0
      %1579 = vmatpush.bf16.msra.mxu0 0
      %1580 = vmatpush.bf16.msra.mxu0 0
      %1581 = vmatpush.bf16.msra.mxu0 %v1482
      %1582 = vmatmul.bf16.gmra.mxu0 %v1512
      %v1583 = vpop.f32.mrf.mxu0
      %v1584 = vadd.f32 %v1565, %v1583
      %v1585 = vpop.f32.mrf.mxu0
      %v1586 = vadd.f32 %v1567, %v1585
      %1587 = vmatmul.bf16.gmra.mxu0 %v1515
      %v1588 = vpop.f32.mrf.mxu0
      %v1589 = vadd.f32 %v1570, %v1588
      %v1590 = vpop.f32.mrf.mxu0
      %v1591 = vadd.f32 %v1572, %v1590
      %1592 = vdwg.mxu0
      %1593 = vmatpush.bf16.msra.mxu0 %v1480
      %1594 = vmatpush.bf16.msra.mxu0 %v1477
      %1595 = vmatpush.bf16.msra.mxu0 %v1474
      %1596 = vmatpush.bf16.msra.mxu0 %v1471
      %1597 = vmatpush.bf16.msra.mxu0 %v1468
      %1598 = vmatpush.bf16.msra.mxu0 %v1465
      %1599 = vmatpush.bf16.msra.mxu0 %v1462
      %1600 = vmatpush.bf16.msra.mxu0 %v1459
      %1601 = vmatmul.bf16.gmra.mxu0 %v1361
      %v1602 = vpop.f32.mrf.mxu0
      %v1603 = vadd.f32 %v1332, %v1602
      %v1604 = vpop.f32.mrf.mxu0
      %v1605 = vadd.f32 %v1337, %v1604
      %1606 = vmatmul.bf16.gmra.mxu0 %v1363
      %v1607 = vpop.f32.mrf.mxu0
      %v1608 = vadd.f32 %v1342, %v1607
      %v1609 = vpop.f32.mrf.mxu0
      %v1610 = vadd.f32 %v1347, %v1609
      %1611 = vdwg.mxu0
      %1612 = vmatpush.bf16.msra.mxu0 0
      %1613 = vmatpush.bf16.msra.mxu0 0
      %1614 = vmatpush.bf16.msra.mxu0 0
      %1615 = vmatpush.bf16.msra.mxu0 0
      %1616 = vmatpush.bf16.msra.mxu0 0
      %1617 = vmatpush.bf16.msra.mxu0 0
      %1618 = vmatpush.bf16.msra.mxu0 0
      %1619 = vmatpush.bf16.msra.mxu0 %v1483
      %1620 = vmatmul.bf16.gmra.mxu0 %v1512
      %v1621 = vpop.f32.mrf.mxu0
      %v1622 = vadd.f32 %v1603, %v1621
      %v1623 = vpop.f32.mrf.mxu0
      %v1624 = vadd.f32 %v1605, %v1623
      %1625 = vmatmul.bf16.gmra.mxu0 %v1515
      %v1626 = vpop.f32.mrf.mxu0
      %v1627 = vadd.f32 %v1608, %v1626
      %v1628 = vpop.f32.mrf.mxu0
      %v1629 = vadd.f32 %v1610, %v1628
      %1630 = vdwg.mxu0
      %1631 = vst [vmem:[%s325] sm:$0xff] %v1546
      %1632 = vst [vmem:[%s325 + $0x8] sm:$0xff] %v1584
      %1633 = vst.msk [vmem:[%s325 + $0x10] sm:$0xff] %vm339, %v1622
      %1634 = vst [vmem:[%s325 + $0x18] sm:$0xff] %v1548
      %1635 = vst [vmem:[%s325 + $0x20] sm:$0xff] %v1586
      %1636 = vst.msk [vmem:[%s325 + $0x28] sm:$0xff] %vm339, %v1624
      %1637 = vst [vmem:[%s325 + $0x30] sm:$0xff] %v1551
      %1638 = vst [vmem:[%s325 + $0x38] sm:$0xff] %v1589
      %1639 = vst.msk [vmem:[%s325 + $0x40] sm:$0xff] %vm339, %v1627
      %1640 = vst [vmem:[%s325 + $0x48] sm:$0xff] %v1553
      %1641 = vst [vmem:[%s325 + $0x50] sm:$0xff] %v1591
      %1642 = vst.msk [vmem:[%s325 + $0x58] sm:$0xff] %vm339, %v1629
      %p1643 = scmp.lt.s32.totalorder %s19, 5
      %s1644 = scalar_select %p1643, %s19, 5
      %s1645 = smul.addr %s1644, 12
      %s1646 = smul.addr %s1645, 8
      %s1647 = scalar_lea.vmem %s8, %s1646
      // Predicated region
      $region53: #{upblock_forward_clip.3} parent=51 // pred_check
        %p1648 = pneg %p215
      $region54: #{upblock_forward_clip.3} parent=51 // pred_check_branch
        %1650 = sbr.rel (%p1648) target = $region56
      $region55: #{upblock_forward_clip.3} parent=51 // pred_region
        _
      $region56: #{upblock_forward_clip.3} parent=51 // pred_fallthru
        _
    $region52: #{upblock_forward_clip.3} parent=5 // pred_fallthru
      _
    %p1651 = scmp.le.s32.totalorder 2, %s14
    // Predicated region
    $region57: #{upblock_forward_clip.3} parent=5 // pred_check
      %p1652 = pneg %p1651
    $region58: #{upblock_forward_clip.3} parent=5 // pred_check_branch
      %1654 = sbr.rel (%p1652) target = $region60
    $region59: #{upblock_forward_clip.3} parent=5 // pred_region
      %s1655 = ssub.s32 %s14, 2
      // Predicated region
      $region61: #{upblock_forward_clip.3} parent=59 // pred_check
        %p1656 = pneg %p221
      $region62: #{upblock_forward_clip.3} parent=59 // pred_check_branch
        %1658 = sbr.rel (%p1656) target = $region64
      $region63: #{upblock_forward_clip.3} parent=59 // pred_region
        %p1659 = scmp.lt.s32.totalorder %s20, 5
        %s1660 = scalar_select %p1659, %s20, 5
        %s1661 = smul.addr %s1660, 12
        %s1662 = smul.addr %s1661, 8
        %s1663 = scalar_lea.vmem %s8, %s1662
      $region64: #{upblock_forward_clip.3} parent=59 // pred_fallthru
        _
    $region60: #{upblock_forward_clip.3} parent=5 // pred_fallthru
      _
  $region6: #{upblock_forward_clip.3} parent=0 // loop_footer
    %s18 = sadd.s32 1, %s14
  $region7: #{upblock_forward_clip.3} parent=0 // loop_footer_branch
    %13 = sbr.rel target = $region3
  $region8: #{upblock_forward_clip.3} parent=0 // loop_exit
    _

</llo_original>
